<compile_context>
chip_gen: v6e
topology: v6e:2x2x1
jax: 0.10.0
libtpu: 0.0.40
codegen_flags: <defaults>
</compile_context>

<pallas_src>
import functools
import math

import jax
import jax.numpy as jnp
from jax.experimental import pallas as pl
from jax.experimental.pallas import tpu as pltpu

_BF16 = jnp.bfloat16


def _round_up(x, m):
    return ((x + m - 1) // m) * m


# ----------------------------- in-kernel helpers -----------------------------

def _layernorm(x, gamma, beta, eps=1e-5):
    # torch.nn.LayerNorm over the last dim, biased variance, eps=1e-5.
    mean = jnp.mean(x, axis=-1, keepdims=True)
    var = jnp.mean((x - mean) ** 2, axis=-1, keepdims=True)
    return (x - mean) * jax.lax.rsqrt(var + eps) * gamma + beta


def _gelu(x):
    # TODO(synk): torch F.gelu defaults to exact erf-GELU; tanh approximation is
    # used because erf may not lower through Mosaic on all jax versions.
    c = jnp.float32(0.7978845608028654)  # sqrt(2/pi)
    return 0.5 * x * (1.0 + jnp.tanh(c * (x + 0.044715 * (x * x * x))))


# --------------------------------- kernels -----------------------------------

def _embed_kernel(x_ref, w_ref, b_ref, enc_ref, mean_ref, std_ref):
    """Series normalization + inverted embedding for a block of variables.

    x_ref:   [nt, B, L]   (variable-major; time on the lane dim)
    w_ref:   [nt, L, D]   per-variable Linear(seq_len -> d_model), bf16
    b_ref:   [nt, 1, D]
    enc_ref: [nt, B, D]
    mean_ref/std_ref: [nt, B, 1]
    """
    x = x_ref[...]
    mean = jnp.mean(x, axis=-1, keepdims=True)                 # [nt, B, 1]
    xc = x - mean
    var = jnp.mean(xc * xc, axis=-1, keepdims=True)            # unbiased=False
    std = jnp.sqrt(var + 1e-5)
    xn = xc * jax.lax.rsqrt(var + 1e-5)                        # == xc / std

    emb = jnp.einsum('nbl,nld->nbd', xn.astype(_BF16), w_ref[...],
                     preferred_element_type=jnp.float32)       # grouped over vars
    enc_ref[...] = emb + b_ref[...]
    mean_ref[...] = mean
    std_ref[...] = std


def _encoder_kernel(n_heads,
                    x_ref,
                    wqkv_ref, bqkv_ref, wo_ref, bo_ref,
                    w1_ref, b1_ref, w2_ref, b2_ref,
                    g1_ref, be1_ref, g2_ref, be2_ref,
                    ng_ref, nb_ref, pw_ref, pb_ref, mean_ref, std_ref,
                    head_ref,
                    act_sc, qkv_sc, ctx_sc):
    """All encoder layers + final LN + projector + de-norm, fused.

    Grid = (batch, layer).  The activation is resident in `act_sc` (VMEM scratch,
    persists across the layer axis); only the head result goes back to HBM.
    """
    layer = pl.program_id(1)

    @pl.when(layer == 0)
    def _():
        act_sc[...] = x_ref[...]                               # [N, D] f32

    x = act_sc[...]                                            # [N, D] f32
    N, D = x.shape
    H = n_heads
    E = D // H

    xb = x.astype(_BF16)

    # ---- fused QKV projection: one full-width [N, D] x [D, 3D] MXU matmul ---
    qkv_sc[...] = (jnp.dot(xb, wqkv_ref[...],
                           preferred_element_type=jnp.float32) + bqkv_ref[...])

    # ---- per-head attention (1/sqrt(E) folded into Q weights at init) -------
    for h in range(H):
        q = qkv_sc[:, h * E:(h + 1) * E].astype(_BF16)             # [N, E]
        k = qkv_sc[:, D + h * E:D + (h + 1) * E].astype(_BF16)     # [N, E]
        v = qkv_sc[:, 2 * D + h * E:2 * D + (h + 1) * E].astype(_BF16)
        s = jnp.einsum('ne,me->nm', q, k,
                       preferred_element_type=jnp.float32)         # [N, N]
        s = s - jnp.max(s, axis=-1, keepdims=True)
        p = jnp.exp(s)
        p = p * pl.reciprocal(jnp.sum(p, axis=-1, keepdims=True), approx=True)
        ctx_sc[:, h * E:(h + 1) * E] = jnp.dot(p.astype(_BF16), v,
                                               preferred_element_type=jnp.float32)

    # ---- fused output projection: single [N, D] x [D, D] matmul -------------
    attn = (jnp.dot(ctx_sc[...].astype(_BF16), wo_ref[...],
                    preferred_element_type=jnp.float32) + bo_ref[...])

    # ---- residual + norm1 + FFN (conv1d k=1) + residual + norm2 -------------
    y = _layernorm(x + attn, g1_ref[...], be1_ref[...])
    h1 = _gelu(jnp.dot(y.astype(_BF16), w1_ref[...],
                       preferred_element_type=jnp.float32) + b1_ref[...])
    h2 = (jnp.dot(h1.astype(_BF16), w2_ref[...],
                  preferred_element_type=jnp.float32) + b2_ref[...])
    out = _layernorm(y + h2, g2_ref[...], be2_ref[...])
    act_sc[...] = out

    # ---- fused head: final LN + projector + de-norm (last layer only) -------
    @pl.when(layer == pl.num_programs(1) - 1)
    def _():
        z = _layernorm(out, ng_ref[...], nb_ref[...])
        proj = (jnp.dot(z.astype(_BF16), pw_ref[...],
                        preferred_element_type=jnp.float32) + pb_ref[...])
        head_ref[...] = proj * std_ref[...] + mean_ref[...]    # [N, P_pad]


# ------------------------------ wrapper / glue --------------------------------

def _lspec(shape):
    """Stacked-per-layer parameter: stream layer `l`, squeeze the layer axis."""
    nd = len(shape)
    return pl.BlockSpec((None,) + tuple(shape), lambda b, l: (l,) + (0,) * nd)


def _cspec(shape):
    """Constant parameter: fetched once (block index never changes)."""
    nd = len(shape)
    return pl.BlockSpec(tuple(shape), lambda b, l: (0,) * nd)


def _bspec(shape):
    """Per-batch-block tensor: indexed by the batch grid axis, batch squeezed."""
    nd = len(shape)
    return pl.BlockSpec((None,) + tuple(shape), lambda b, l: (b,) + (0,) * nd)


def init_params(key, enc_in, seq_len, pred_len, d_model, e_layers, d_ff, n_heads):
    E = d_model // n_heads
    p_pad = _round_up(pred_len, 128)          # lane-dense projector output
    ks = iter(jax.random.split(key, 32))

    def w(shape, scale=0.05):
        return jax.random.normal(next(ks), shape, jnp.float32) * scale

    # 1/sqrt(E) attention scale folded into the Q weights / bias.
    q_scale = 1.0 / math.sqrt(E)
    wq = w((e_layers, d_model, d_model)) * q_scale
    wk = w((e_layers, d_model, d_model))
    wv = w((e_layers, d_model, d_model))
    bq = w((e_layers, 1, d_model)) * q_scale
    bk = w((e_layers, 1, d_model))
    bv = w((e_layers, 1, d_model))

    proj_w = w((d_model, pred_len))
    proj_b = w((1, pred_len))

    return {
        # per-variable embedding Linear(seq_len -> d_model), pre-transposed [L, D]
        'emb_w': w((enc_in, seq_len, d_model)).astype(_BF16),
        'emb_b': w((enc_in, 1, d_model)),
        # stacked per-layer encoder weights; Q|K|V fused along output columns
        'wqkv': jnp.concatenate([wq, wk, wv], axis=-1).astype(_BF16),
        'bqkv': jnp.concatenate([bq, bk, bv], axis=-1),
        'wo': w((e_layers, d_model, d_model)).astype(_BF16),
        'bo': w((e_layers, 1, d_model)),
        'w1': w((e_layers, d_model, d_ff)).astype(_BF16),
        'b1': w((e_layers, 1, d_ff)),
        'w2': w((e_layers, d_ff, d_model)).astype(_BF16),
        'b2': w((e_layers, 1, d_model)),
        'g1': jnp.ones((e_layers, 1, d_model), jnp.float32),
        'be1': jnp.zeros((e_layers, 1, d_model), jnp.float32),
        'g2': jnp.ones((e_layers, 1, d_model), jnp.float32),
        'be2': jnp.zeros((e_layers, 1, d_model), jnp.float32),
        # final encoder LayerNorm + projector (padded to lane-dense width)
        'norm_g': jnp.ones((1, d_model), jnp.float32),
        'norm_b': jnp.zeros((1, d_model), jnp.float32),
        'proj_w': jnp.pad(proj_w, ((0, 0), (0, p_pad - pred_len))).astype(_BF16),
        'proj_b': jnp.pad(proj_b, ((0, 0), (0, p_pad - pred_len))),
    }


def itransformer_forward(params, x_enc, x_mark_enc, x_dec, x_mark_dec, *,
                         c_out, n_heads, pred_len):
    # x_mark_enc is dropped by the model (timestamp_feature=True); x_dec /
    # x_mark_dec never feed this model's forward pass.
    del x_mark_enc, x_dec, x_mark_dec
    B, L, N = x_enc.shape
    e_layers, D, d_ff = params['w1'].shape
    p_pad = params['proj_w'].shape[-1]

    # ---------- 1) series normalization + inverted embedding -----------------
    # TODO(synk): the embedding's natural output layout is [N, B, D] (grouped
    # matmul is batch-leading); the [B, N, D] relayout is left to XLA rather
    # than risking an in-kernel cross-sublane transpose.
    x_nbl = jnp.transpose(x_enc, (2, 0, 1))                    # [N, B, L] (small)
    nt = N                                                     # variables / step
    enc_nbd, mean_nb1, std_nb1 = pl.pallas_call(
        _embed_kernel,
        out_shape=(jax.ShapeDtypeStruct((N, B, D), jnp.float32),
                   jax.ShapeDtypeStruct((N, B, 1), jnp.float32),
                   jax.ShapeDtypeStruct((N, B, 1), jnp.float32)),
        grid=(N // nt,),
        in_specs=[pl.BlockSpec((nt, B, L), lambda n: (n, 0, 0)),
                  pl.BlockSpec((nt, L, D), lambda n: (n, 0, 0)),
                  pl.BlockSpec((nt, 1, D), lambda n: (n, 0, 0))],
        out_specs=(pl.BlockSpec((nt, B, D), lambda n: (n, 0, 0)),
                   pl.BlockSpec((nt, B, 1), lambda n: (n, 0, 0)),
                   pl.BlockSpec((nt, B, 1), lambda n: (n, 0, 0))),
        compiler_params=pltpu.CompilerParams(
            dimension_semantics=("parallel",)),
    )(x_nbl, params['emb_w'], params['emb_b'])

    enc_out = jnp.transpose(enc_nbd, (1, 0, 2))                # [B, N, D]
    means = jnp.transpose(mean_nb1, (1, 0, 2))                 # [B, N, 1]
    stdev = jnp.transpose(std_nb1, (1, 0, 2))                  # [B, N, 1]

    # ---------- 2) fused encoder (all layers) + head --------------------------
    # grid=(B, e_layers): batch blocks of 1 keep >=2 parallel blocks for v7x
    # megacore; per-layer weights are streamed over the "arbitrary" layer axis.
    head = pl.pallas_call(
        functools.partial(_encoder_kernel, n_heads),
        out_shape=jax.ShapeDtypeStruct((B, N, p_pad), jnp.float32),
        grid=(B, e_layers),
        in_specs=[_bspec((N, D)),
                  _lspec((D, 3 * D)), _lspec((1, 3 * D)),      # wqkv, bqkv
                  _lspec((D, D)), _lspec((1, D)),              # wo, bo
                  _lspec((D, d_ff)), _lspec((1, d_ff)),        # w1, b1
                  _lspec((d_ff, D)), _lspec((1, D)),           # w2, b2
                  _lspec((1, D)), _lspec((1, D)),              # g1, be1
                  _lspec((1, D)), _lspec((1, D)),              # g2, be2
                  _cspec((1, D)), _cspec((1, D)),              # norm_g, norm_b
                  _cspec((D, p_pad)), _cspec((1, p_pad)),      # proj_w, proj_b
                  _bspec((N, 1)), _bspec((N, 1))],             # means, stdev
        out_specs=_bspec((N, p_pad)),
        scratch_shapes=[pltpu.VMEM((N, D), jnp.float32),       # resident act
                        pltpu.VMEM((N, 3 * D), jnp.float32),   # fused qkv
                        pltpu.VMEM((N, D), jnp.float32)],      # ctx (head-packed)
        compiler_params=pltpu.CompilerParams(
            dimension_semantics=("parallel", "arbitrary"),
            vmem_limit_bytes=48 * 1024 * 1024),
    )(enc_out,
      params['wqkv'], params['bqkv'], params['wo'], params['bo'],
      params['w1'], params['b1'], params['w2'], params['b2'],
      params['g1'], params['be1'], params['g2'], params['be2'],
      params['norm_g'], params['norm_b'], params['proj_w'], params['proj_b'],
      means, stdev)

    # ---------- 3) layout glue: [B, N, P_pad] -> [B, pred_len, c_out] --------
    return jnp.swapaxes(head[:, :, :pred_len], 1, 2)[:, :, :c_out]


# ----------------------------------- main -------------------------------------

if __name__ == "__main__":
    # small shapes consistent with the module
    B, seq_len, enc_in = 2, 8, 4
    label_len, pred_len = 4, 4
    d_model, n_heads, e_layers, d_ff = 32, 4, 2, 32
    c_out = 4

    key = jax.random.PRNGKey(0)
    k_x, k_m, k_p = jax.random.split(key, 3)
    x_enc = jax.random.normal(k_x, (B, seq_len, enc_in), jnp.float32)
    x_mark_enc = jax.random.normal(k_m, (B, seq_len, 4), jnp.float32)   # unused
    x_dec = jnp.zeros((B, label_len + pred_len, enc_in), jnp.float32)   # unused
    x_mark_dec = jnp.zeros((B, label_len + pred_len, 4), jnp.float32)   # unused

    params = init_params(k_p, enc_in, seq_len, pred_len, d_model, e_layers,
                         d_ff, n_heads)

    fwd = jax.jit(functools.partial(itransformer_forward, c_out=c_out,
                                    n_heads=n_heads, pred_len=pred_len))
    out = fwd(params, x_enc, x_mark_enc, x_dec, x_mark_dec)
    jax.block_until_ready(out)
    assert out.shape == (B, pred_len, c_out), out.shape
    assert bool(jnp.all(jnp.isfinite(out)))
    print("KERNEL_OK")
</pallas_src>

<mosaic_0001>
module attributes {stable_mosaic.version = 11 : i64} {
  func.func @_embed_kernel(%arg0: i32, %arg1: memref<4x2x8xf32, #tpu.memory_space<vmem>>, %arg2: memref<4x8x32xbf16, #tpu.memory_space<vmem>>, %arg3: memref<4x1x32xf32, #tpu.memory_space<vmem>>, %arg4: memref<4x2x32xf32, #tpu.memory_space<vmem>>, %arg5: memref<4x2x1xf32, #tpu.memory_space<vmem>>, %arg6: memref<4x2x1xf32, #tpu.memory_space<vmem>>) attributes {dimension_semantics = [#tpu.dimension_semantics<parallel>], iteration_bounds = array<i64: 1>, scalar_prefetch = 0 : i64, scratch_operands = 0 : i64, tpu.core_type = #tpu.core_type<tc>, window_params = [{transform_indices = @transform_0, window_bounds = array<i64: 4, 2, 8>}, {transform_indices = @transform_1, window_bounds = array<i64: 4, 8, 32>}, {transform_indices = @transform_2, window_bounds = array<i64: 4, 1, 32>}, {transform_indices = @transform_3, window_bounds = array<i64: 4, 2, 32>}, {transform_indices = @transform_4, window_bounds = array<i64: 4, 2, 1>}, {transform_indices = @transform_5, window_bounds = array<i64: 4, 2, 1>}]} {
    %c0 = arith.constant 0 : index
    %c0_0 = arith.constant 0 : index
    %c0_1 = arith.constant 0 : index
    %0 = vector.load %arg1[%c0, %c0_0, %c0_1] : memref<4x2x8xf32, #tpu.memory_space<vmem>>, vector<4x2x8xf32>
    %cst = arith.constant dense<0.000000e+00> : vector<4x2xf32>
    %1 = vector.multi_reduction <add>, %0, %cst [2] : vector<4x2x8xf32> to vector<4x2xf32>
    %2 = vector.shape_cast %1 : vector<4x2xf32> to vector<4x2x1xf32>
    %cst_2 = arith.constant 8.000000e+00 : f32
    %3 = vector.broadcast %cst_2 : f32 to vector<4x2x1xf32>
    %4 = arith.divf %2, %3 : vector<4x2x1xf32>
    %5 = vector.broadcast %4 : vector<4x2x1xf32> to vector<4x2x8xf32>
    %6 = arith.subf %0, %5 : vector<4x2x8xf32>
    %7 = arith.mulf %6, %6 : vector<4x2x8xf32>
    %cst_3 = arith.constant dense<0.000000e+00> : vector<4x2xf32>
    %8 = vector.multi_reduction <add>, %7, %cst_3 [2] : vector<4x2x8xf32> to vector<4x2xf32>
    %9 = vector.shape_cast %8 : vector<4x2xf32> to vector<4x2x1xf32>
    %cst_4 = arith.constant 8.000000e+00 : f32
    %10 = vector.broadcast %cst_4 : f32 to vector<4x2x1xf32>
    %11 = arith.divf %9, %10 : vector<4x2x1xf32>
    %cst_5 = arith.constant 9.99999974E-6 : f32
    %12 = vector.broadcast %cst_5 : f32 to vector<4x2x1xf32>
    %13 = arith.addf %11, %12 : vector<4x2x1xf32>
    %14 = math.sqrt %13 : vector<4x2x1xf32>
    %cst_6 = arith.constant 9.99999974E-6 : f32
    %15 = vector.broadcast %cst_6 : f32 to vector<4x2x1xf32>
    %16 = arith.addf %11, %15 : vector<4x2x1xf32>
    %17 = math.rsqrt %16 : vector<4x2x1xf32>
    %18 = vector.broadcast %17 : vector<4x2x1xf32> to vector<4x2x8xf32>
    %19 = arith.mulf %6, %18 : vector<4x2x8xf32>
    %20 = arith.truncf %19 : vector<4x2x8xf32> to vector<4x2x8xbf16>
    %c0_7 = arith.constant 0 : index
    %c0_8 = arith.constant 0 : index
    %c0_9 = arith.constant 0 : index
    %21 = vector.load %arg2[%c0_7, %c0_8, %c0_9] : memref<4x8x32xbf16, #tpu.memory_space<vmem>>, vector<4x8x32xbf16>
    "tpu.trace_start"() <{level = 10 : i32, message = "nbl,nld->nbd"}> : () -> ()
    %cst_10 = arith.constant dense<0.000000e+00> : vector<4x2x32xf32>
    %22 = tpu.matmul %20, %21, %cst_10 {dimension_numbers = #tpu.dot_dimension_numbers<[2], [1], [1], [2], [0, 0, 0, 1, 1, 2], [0], [0]>} : vector<4x2x8xbf16>, vector<4x8x32xbf16>, vector<4x2x32xf32> -> vector<4x2x32xf32>
    "tpu.trace_stop"() : () -> ()
    %c0_11 = arith.constant 0 : index
    %c0_12 = arith.constant 0 : index
    %c0_13 = arith.constant 0 : index
    %23 = vector.load %arg3[%c0_11, %c0_12, %c0_13] : memref<4x1x32xf32, #tpu.memory_space<vmem>>, vector<4x1x32xf32>
    %24 = vector.broadcast %23 : vector<4x1x32xf32> to vector<4x2x32xf32>
    %25 = arith.addf %22, %24 : vector<4x2x32xf32>
    %c0_14 = arith.constant 0 : index
    %c0_15 = arith.constant 0 : index
    %c0_16 = arith.constant 0 : index
    %26 = vector.load %arg4[%c0_14, %c0_15, %c0_16] : memref<4x2x32xf32, #tpu.memory_space<vmem>>, vector<4x2x32xf32>
    tpu.vector_store %arg4[%c0_14, %c0_15, %c0_16], %25 {strides = array<i32>} : memref<4x2x32xf32, #tpu.memory_space<vmem>>, vector<4x2x32xf32>,
    %c0_17 = arith.constant 0 : index
    %c0_18 = arith.constant 0 : index
    %c0_19 = arith.constant 0 : index
    %27 = vector.load %arg5[%c0_17, %c0_18, %c0_19] : memref<4x2x1xf32, #tpu.memory_space<vmem>>, vector<4x2x1xf32>
    tpu.vector_store %arg5[%c0_17, %c0_18, %c0_19], %4 {strides = array<i32>} : memref<4x2x1xf32, #tpu.memory_space<vmem>>, vector<4x2x1xf32>,
    %c0_20 = arith.constant 0 : index
    %c0_21 = arith.constant 0 : index
    %c0_22 = arith.constant 0 : index
    %28 = vector.load %arg6[%c0_20, %c0_21, %c0_22] : memref<4x2x1xf32, #tpu.memory_space<vmem>>, vector<4x2x1xf32>
    tpu.vector_store %arg6[%c0_20, %c0_21, %c0_22], %14 {strides = array<i32>} : memref<4x2x1xf32, #tpu.memory_space<vmem>>, vector<4x2x1xf32>,
    return
  }
  func.func @transform_0(%arg0: i32) -> (i32, i32, i32) {
    %c0_i32 = arith.constant 0 : i32
    %c0_i32_0 = arith.constant 0 : i32
    %c0_i32_1 = arith.constant 0 : i32
    return %arg0, %c0_i32, %c0_i32_0 : i32, i32, i32
  }
  func.func @transform_1(%arg0: i32) -> (i32, i32, i32) {
    %c0_i32 = arith.constant 0 : i32
    %c0_i32_0 = arith.constant 0 : i32
    %c0_i32_1 = arith.constant 0 : i32
    return %arg0, %c0_i32, %c0_i32_0 : i32, i32, i32
  }
  func.func @transform_2(%arg0: i32) -> (i32, i32, i32) {
    %c0_i32 = arith.constant 0 : i32
    %c0_i32_0 = arith.constant 0 : i32
    %c0_i32_1 = arith.constant 0 : i32
    return %arg0, %c0_i32, %c0_i32_0 : i32, i32, i32
  }
  func.func @transform_3(%arg0: i32) -> (i32, i32, i32) {
    %c0_i32 = arith.constant 0 : i32
    %c0_i32_0 = arith.constant 0 : i32
    %c0_i32_1 = arith.constant 0 : i32
    return %arg0, %c0_i32, %c0_i32_0 : i32, i32, i32
  }
  func.func @transform_4(%arg0: i32) -> (i32, i32, i32) {
    %c0_i32 = arith.constant 0 : i32
    %c0_i32_0 = arith.constant 0 : i32
    %c0_i32_1 = arith.constant 0 : i32
    return %arg0, %c0_i32, %c0_i32_0 : i32, i32, i32
  }
  func.func @transform_5(%arg0: i32) -> (i32, i32, i32) {
    %c0_i32 = arith.constant 0 : i32
    %c0_i32_0 = arith.constant 0 : i32
    %c0_i32_1 = arith.constant 0 : i32
    return %arg0, %c0_i32, %c0_i32_0 : i32, i32, i32
  }
}

module attributes {stable_mosaic.version = 11 : i64} {
  func.func @_encoder_kernel(%arg0: i32, %arg1: i32, %arg2: memref<1x4x32xf32, #tpu.memory_space<vmem>>, %arg3: memref<1x32x96xbf16, #tpu.memory_space<vmem>>, %arg4: memref<1x1x96xf32, #tpu.memory_space<vmem>>, %arg5: memref<1x32x32xbf16, #tpu.memory_space<vmem>>, %arg6: memref<1x1x32xf32, #tpu.memory_space<vmem>>, %arg7: memref<1x32x32xbf16, #tpu.memory_space<vmem>>, %arg8: memref<1x1x32xf32, #tpu.memory_space<vmem>>, %arg9: memref<1x32x32xbf16, #tpu.memory_space<vmem>>, %arg10: memref<1x1x32xf32, #tpu.memory_space<vmem>>, %arg11: memref<1x1x32xf32, #tpu.memory_space<vmem>>, %arg12: memref<1x1x32xf32, #tpu.memory_space<vmem>>, %arg13: memref<1x1x32xf32, #tpu.memory_space<vmem>>, %arg14: memref<1x1x32xf32, #tpu.memory_space<vmem>>, %arg15: memref<1x32xf32, #tpu.memory_space<vmem>>, %arg16: memref<1x32xf32, #tpu.memory_space<vmem>>, %arg17: memref<32x128xbf16, #tpu.memory_space<vmem>>, %arg18: memref<1x128xf32, #tpu.memory_space<vmem>>, %arg19: memref<1x4x1xf32, #tpu.memory_space<vmem>>, %arg20: memref<1x4x1xf32, #tpu.memory_space<vmem>>, %arg21: memref<1x4x128xf32, #tpu.memory_space<vmem>>, %arg22: memref<4x32xf32, #tpu.memory_space<vmem>>, %arg23: memref<4x96xf32, #tpu.memory_space<vmem>>, %arg24: memref<4x32xf32, #tpu.memory_space<vmem>>) attributes {dimension_semantics = [#tpu.dimension_semantics<parallel>, #tpu.dimension_semantics<arbitrary>], iteration_bounds = array<i64: 2, 2>, scalar_prefetch = 0 : i64, scratch_operands = 3 : i64, tpu.core_type = #tpu.core_type<tc>, window_params = [{transform_indices = @transform_0, window_bounds = array<i64: 1, 4, 32>}, {transform_indices = @transform_1, window_bounds = array<i64: 1, 32, 96>}, {transform_indices = @transform_2, window_bounds = array<i64: 1, 1, 96>}, {transform_indices = @transform_3, window_bounds = array<i64: 1, 32, 32>}, {transform_indices = @transform_4, window_bounds = array<i64: 1, 1, 32>}, {transform_indices = @transform_5, window_bounds = array<i64: 1, 32, 32>}, {transform_indices = @transform_6, window_bounds = array<i64: 1, 1, 32>}, {transform_indices = @transform_7, window_bounds = array<i64: 1, 32, 32>}, {transform_indices = @transform_8, window_bounds = array<i64: 1, 1, 32>}, {transform_indices = @transform_9, window_bounds = array<i64: 1, 1, 32>}, {transform_indices = @transform_10, window_bounds = array<i64: 1, 1, 32>}, {transform_indices = @transform_11, window_bounds = array<i64: 1, 1, 32>}, {transform_indices = @transform_12, window_bounds = array<i64: 1, 1, 32>}, {pipeline_mode = #tpu.pipeline_mode<synchronous>, transform_indices = @transform_13, window_bounds = array<i64: 1, 32>}, {pipeline_mode = #tpu.pipeline_mode<synchronous>, transform_indices = @transform_14, window_bounds = array<i64: 1, 32>}, {pipeline_mode = #tpu.pipeline_mode<synchronous>, transform_indices = @transform_15, window_bounds = array<i64: 32, 128>}, {pipeline_mode = #tpu.pipeline_mode<synchronous>, transform_indices = @transform_16, window_bounds = array<i64: 1, 128>}, {transform_indices = @transform_17, window_bounds = array<i64: 1, 4, 1>}, {transform_indices = @transform_18, window_bounds = array<i64: 1, 4, 1>}, {transform_indices = @transform_19, window_bounds = array<i64: 1, 4, 128>}]} {
    %c0_i32 = arith.constant 0 : i32
    %0 = arith.cmpi eq, %arg1, %c0_i32 : i32
    %1 = arith.extui %0 : i1 to i32
    %c0_i32_0 = arith.constant 0 : i32
    %2 = arith.cmpi ne, %1, %c0_i32_0 : i32
    scf.if %2 {
      %c0_99 = arith.constant 0 : index
      %c0_100 = arith.constant 0 : index
      %c0_101 = arith.constant 0 : index
      %189 = vector.load %arg2[%c0_99, %c0_100, %c0_101] : memref<1x4x32xf32, #tpu.memory_space<vmem>>, vector<1x4x32xf32>
      %190 = vector.shape_cast %189 : vector<1x4x32xf32> to vector<4x32xf32>
      %c0_102 = arith.constant 0 : index
      %c0_103 = arith.constant 0 : index
      %191 = vector.load %arg22[%c0_102, %c0_103] : memref<4x32xf32, #tpu.memory_space<vmem>>, vector<4x32xf32>
      tpu.vector_store %arg22[%c0_102, %c0_103], %190 {strides = array<i32>} : memref<4x32xf32, #tpu.memory_space<vmem>>, vector<4x32xf32>,
    } else {
    }
    %c0 = arith.constant 0 : index
    %c0_1 = arith.constant 0 : index
    %3 = vector.load %arg22[%c0, %c0_1] : memref<4x32xf32, #tpu.memory_space<vmem>>, vector<4x32xf32>
    %4 = arith.truncf %3 : vector<4x32xf32> to vector<4x32xbf16>
    %c0_2 = arith.constant 0 : index
    %c0_3 = arith.constant 0 : index
    %c0_4 = arith.constant 0 : index
    %5 = vector.load %arg3[%c0_2, %c0_3, %c0_4] : memref<1x32x96xbf16, #tpu.memory_space<vmem>>, vector<1x32x96xbf16>
    %6 = vector.shape_cast %5 : vector<1x32x96xbf16> to vector<32x96xbf16>
    %cst = arith.constant dense<0.000000e+00> : vector<4x96xf32>
    %7 = tpu.matmul %4, %6, %cst {dimension_numbers = #tpu.dot_dimension_numbers<[1], [0], [0], [1], [0, 0, 1, 1], [], []>} : vector<4x32xbf16>, vector<32x96xbf16>, vector<4x96xf32> -> vector<4x96xf32>
    %c0_5 = arith.constant 0 : index
    %c0_6 = arith.constant 0 : index
    %c0_7 = arith.constant 0 : index
    %8 = vector.load %arg4[%c0_5, %c0_6, %c0_7] : memref<1x1x96xf32, #tpu.memory_space<vmem>>, vector<1x1x96xf32>
    %9 = vector.shape_cast %8 : vector<1x1x96xf32> to vector<1x96xf32>
    %10 = vector.broadcast %9 : vector<1x96xf32> to vector<4x96xf32>
    %11 = arith.addf %7, %10 : vector<4x96xf32>
    %c0_8 = arith.constant 0 : index
    %c0_9 = arith.constant 0 : index
    %12 = vector.load %arg23[%c0_8, %c0_9] : memref<4x96xf32, #tpu.memory_space<vmem>>, vector<4x96xf32>
    tpu.vector_store %arg23[%c0_8, %c0_9], %11 {strides = array<i32>} : memref<4x96xf32, #tpu.memory_space<vmem>>, vector<4x96xf32>,
    %c0_10 = arith.constant 0 : index
    %c0_11 = arith.constant 0 : index
    %13 = vector.load %arg23[%c0_10, %c0_11] : memref<4x96xf32, #tpu.memory_space<vmem>>, vector<4x8xf32>
    %14 = arith.truncf %13 : vector<4x8xf32> to vector<4x8xbf16>
    %c0_12 = arith.constant 0 : index
    %c32 = arith.constant 32 : index
    %15 = vector.load %arg23[%c0_12, %c32] : memref<4x96xf32, #tpu.memory_space<vmem>>, vector<4x8xf32>
    %16 = arith.truncf %15 : vector<4x8xf32> to vector<4x8xbf16>
    %c0_13 = arith.constant 0 : index
    %c64 = arith.constant 64 : index
    %17 = vector.load %arg23[%c0_13, %c64] : memref<4x96xf32, #tpu.memory_space<vmem>>, vector<4x8xf32>
    %18 = arith.truncf %17 : vector<4x8xf32> to vector<4x8xbf16>
    "tpu.trace_start"() <{level = 10 : i32, message = "ne,me->nm"}> : () -> ()
    %cst_14 = arith.constant dense<0.000000e+00> : vector<4x4xf32>
    %19 = tpu.matmul %14, %16, %cst_14 {dimension_numbers = #tpu.dot_dimension_numbers<[1], [1], [0], [0], [0, 0, 1, 0], [], []>} : vector<4x8xbf16>, vector<4x8xbf16>, vector<4x4xf32> -> vector<4x4xf32>
    "tpu.trace_stop"() : () -> ()
    %cst_15 = arith.constant dense<0xFF800000> : vector<4xf32>
    %20 = vector.multi_reduction <maximumf>, %19, %cst_15 [1] : vector<4x4xf32> to vector<4xf32>
    %21 = vector.shape_cast %20 : vector<4xf32> to vector<4x1xf32>
    %22 = vector.broadcast %21 : vector<4x1xf32> to vector<4x4xf32>
    %23 = arith.subf %19, %22 : vector<4x4xf32>
    %24 = math.exp %23 : vector<4x4xf32>
    %cst_16 = arith.constant dense<0.000000e+00> : vector<4xf32>
    %25 = vector.multi_reduction <add>, %24, %cst_16 [1] : vector<4x4xf32> to vector<4xf32>
    %26 = vector.shape_cast %25 : vector<4xf32> to vector<4x1xf32>
    %27 = tpu.reciprocal %26 {approx = true} : vector<4x1xf32> -> vector<4x1xf32>
    %28 = vector.broadcast %27 : vector<4x1xf32> to vector<4x4xf32>
    %29 = arith.mulf %24, %28 : vector<4x4xf32>
    %30 = arith.truncf %29 : vector<4x4xf32> to vector<4x4xbf16>
    %cst_17 = arith.constant dense<0.000000e+00> : vector<4x8xf32>
    %31 = tpu.matmul %30, %18, %cst_17 {dimension_numbers = #tpu.dot_dimension_numbers<[1], [0], [0], [1], [0, 0, 1, 1], [], []>} : vector<4x4xbf16>, vector<4x8xbf16>, vector<4x8xf32> -> vector<4x8xf32>
    %c0_18 = arith.constant 0 : index
    %c0_19 = arith.constant 0 : index
    %32 = vector.load %arg24[%c0_18, %c0_19] : memref<4x32xf32, #tpu.memory_space<vmem>>, vector<4x8xf32>
    tpu.vector_store %arg24[%c0_18, %c0_19], %31 {strides = array<i32>} : memref<4x32xf32, #tpu.memory_space<vmem>>, vector<4x8xf32>,
    %c0_20 = arith.constant 0 : index
    %c8 = arith.constant 8 : index
    %33 = vector.load %arg23[%c0_20, %c8] : memref<4x96xf32, #tpu.memory_space<vmem>>, vector<4x8xf32>
    %34 = arith.truncf %33 : vector<4x8xf32> to vector<4x8xbf16>
    %c0_21 = arith.constant 0 : index
    %c40 = arith.constant 40 : index
    %35 = vector.load %arg23[%c0_21, %c40] : memref<4x96xf32, #tpu.memory_space<vmem>>, vector<4x8xf32>
    %36 = arith.truncf %35 : vector<4x8xf32> to vector<4x8xbf16>
    %c0_22 = arith.constant 0 : index
    %c72 = arith.constant 72 : index
    %37 = vector.load %arg23[%c0_22, %c72] : memref<4x96xf32, #tpu.memory_space<vmem>>, vector<4x8xf32>
    %38 = arith.truncf %37 : vector<4x8xf32> to vector<4x8xbf16>
    "tpu.trace_start"() <{level = 10 : i32, message = "ne,me->nm"}> : () -> ()
    %cst_23 = arith.constant dense<0.000000e+00> : vector<4x4xf32>
    %39 = tpu.matmul %34, %36, %cst_23 {dimension_numbers = #tpu.dot_dimension_numbers<[1], [1], [0], [0], [0, 0, 1, 0], [], []>} : vector<4x8xbf16>, vector<4x8xbf16>, vector<4x4xf32> -> vector<4x4xf32>
    "tpu.trace_stop"() : () -> ()
    %cst_24 = arith.constant dense<0xFF800000> : vector<4xf32>
    %40 = vector.multi_reduction <maximumf>, %39, %cst_24 [1] : vector<4x4xf32> to vector<4xf32>
    %41 = vector.shape_cast %40 : vector<4xf32> to vector<4x1xf32>
    %42 = vector.broadcast %41 : vector<4x1xf32> to vector<4x4xf32>
    %43 = arith.subf %39, %42 : vector<4x4xf32>
    %44 = math.exp %43 : vector<4x4xf32>
    %cst_25 = arith.constant dense<0.000000e+00> : vector<4xf32>
    %45 = vector.multi_reduction <add>, %44, %cst_25 [1] : vector<4x4xf32> to vector<4xf32>
    %46 = vector.shape_cast %45 : vector<4xf32> to vector<4x1xf32>
    %47 = tpu.reciprocal %46 {approx = true} : vector<4x1xf32> -> vector<4x1xf32>
    %48 = vector.broadcast %47 : vector<4x1xf32> to vector<4x4xf32>
    %49 = arith.mulf %44, %48 : vector<4x4xf32>
    %50 = arith.truncf %49 : vector<4x4xf32> to vector<4x4xbf16>
    %cst_26 = arith.constant dense<0.000000e+00> : vector<4x8xf32>
    %51 = tpu.matmul %50, %38, %cst_26 {dimension_numbers = #tpu.dot_dimension_numbers<[1], [0], [0], [1], [0, 0, 1, 1], [], []>} : vector<4x4xbf16>, vector<4x8xbf16>, vector<4x8xf32> -> vector<4x8xf32>
    %c0_27 = arith.constant 0 : index
    %c8_28 = arith.constant 8 : index
    %52 = vector.load %arg24[%c0_27, %c8_28] : memref<4x32xf32, #tpu.memory_space<vmem>>, vector<4x8xf32>
    tpu.vector_store %arg24[%c0_27, %c8_28], %51 {strides = array<i32>} : memref<4x32xf32, #tpu.memory_space<vmem>>, vector<4x8xf32>,
    %c0_29 = arith.constant 0 : index
    %c16 = arith.constant 16 : index
    %53 = vector.load %arg23[%c0_29, %c16] : memref<4x96xf32, #tpu.memory_space<vmem>>, vector<4x8xf32>
    %54 = arith.truncf %53 : vector<4x8xf32> to vector<4x8xbf16>
    %c0_30 = arith.constant 0 : index
    %c48 = arith.constant 48 : index
    %55 = vector.load %arg23[%c0_30, %c48] : memref<4x96xf32, #tpu.memory_space<vmem>>, vector<4x8xf32>
    %56 = arith.truncf %55 : vector<4x8xf32> to vector<4x8xbf16>
    %c0_31 = arith.constant 0 : index
    %c80 = arith.constant 80 : index
    %57 = vector.load %arg23[%c0_31, %c80] : memref<4x96xf32, #tpu.memory_space<vmem>>, vector<4x8xf32>
    %58 = arith.truncf %57 : vector<4x8xf32> to vector<4x8xbf16>
    "tpu.trace_start"() <{level = 10 : i32, message = "ne,me->nm"}> : () -> ()
    %cst_32 = arith.constant dense<0.000000e+00> : vector<4x4xf32>
    %59 = tpu.matmul %54, %56, %cst_32 {dimension_numbers = #tpu.dot_dimension_numbers<[1], [1], [0], [0], [0, 0, 1, 0], [], []>} : vector<4x8xbf16>, vector<4x8xbf16>, vector<4x4xf32> -> vector<4x4xf32>
    "tpu.trace_stop"() : () -> ()
    %cst_33 = arith.constant dense<0xFF800000> : vector<4xf32>
    %60 = vector.multi_reduction <maximumf>, %59, %cst_33 [1] : vector<4x4xf32> to vector<4xf32>
    %61 = vector.shape_cast %60 : vector<4xf32> to vector<4x1xf32>
    %62 = vector.broadcast %61 : vector<4x1xf32> to vector<4x4xf32>
    %63 = arith.subf %59, %62 : vector<4x4xf32>
    %64 = math.exp %63 : vector<4x4xf32>
    %cst_34 = arith.constant dense<0.000000e+00> : vector<4xf32>
    %65 = vector.multi_reduction <add>, %64, %cst_34 [1] : vector<4x4xf32> to vector<4xf32>
    %66 = vector.shape_cast %65 : vector<4xf32> to vector<4x1xf32>
    %67 = tpu.reciprocal %66 {approx = true} : vector<4x1xf32> -> vector<4x1xf32>
    %68 = vector.broadcast %67 : vector<4x1xf32> to vector<4x4xf32>
    %69 = arith.mulf %64, %68 : vector<4x4xf32>
    %70 = arith.truncf %69 : vector<4x4xf32> to vector<4x4xbf16>
    %cst_35 = arith.constant dense<0.000000e+00> : vector<4x8xf32>
    %71 = tpu.matmul %70, %58, %cst_35 {dimension_numbers = #tpu.dot_dimension_numbers<[1], [0], [0], [1], [0, 0, 1, 1], [], []>} : vector<4x4xbf16>, vector<4x8xbf16>, vector<4x8xf32> -> vector<4x8xf32>
    %c0_36 = arith.constant 0 : index
    %c16_37 = arith.constant 16 : index
    %72 = vector.load %arg24[%c0_36, %c16_37] : memref<4x32xf32, #tpu.memory_space<vmem>>, vector<4x8xf32>
    tpu.vector_store %arg24[%c0_36, %c16_37], %71 {strides = array<i32>} : memref<4x32xf32, #tpu.memory_space<vmem>>, vector<4x8xf32>,
    %c0_38 = arith.constant 0 : index
    %c24 = arith.constant 24 : index
    %73 = vector.load %arg23[%c0_38, %c24] : memref<4x96xf32, #tpu.memory_space<vmem>>, vector<4x8xf32>
    %74 = arith.truncf %73 : vector<4x8xf32> to vector<4x8xbf16>
    %c0_39 = arith.constant 0 : index
    %c56 = arith.constant 56 : index
    %75 = vector.load %arg23[%c0_39, %c56] : memref<4x96xf32, #tpu.memory_space<vmem>>, vector<4x8xf32>
    %76 = arith.truncf %75 : vector<4x8xf32> to vector<4x8xbf16>
    %c0_40 = arith.constant 0 : index
    %c88 = arith.constant 88 : index
    %77 = vector.load %arg23[%c0_40, %c88] : memref<4x96xf32, #tpu.memory_space<vmem>>, vector<4x8xf32>
    %78 = arith.truncf %77 : vector<4x8xf32> to vector<4x8xbf16>
    "tpu.trace_start"() <{level = 10 : i32, message = "ne,me->nm"}> : () -> ()
    %cst_41 = arith.constant dense<0.000000e+00> : vector<4x4xf32>
    %79 = tpu.matmul %74, %76, %cst_41 {dimension_numbers = #tpu.dot_dimension_numbers<[1], [1], [0], [0], [0, 0, 1, 0], [], []>} : vector<4x8xbf16>, vector<4x8xbf16>, vector<4x4xf32> -> vector<4x4xf32>
    "tpu.trace_stop"() : () -> ()
    %cst_42 = arith.constant dense<0xFF800000> : vector<4xf32>
    %80 = vector.multi_reduction <maximumf>, %79, %cst_42 [1] : vector<4x4xf32> to vector<4xf32>
    %81 = vector.shape_cast %80 : vector<4xf32> to vector<4x1xf32>
    %82 = vector.broadcast %81 : vector<4x1xf32> to vector<4x4xf32>
    %83 = arith.subf %79, %82 : vector<4x4xf32>
    %84 = math.exp %83 : vector<4x4xf32>
    %cst_43 = arith.constant dense<0.000000e+00> : vector<4xf32>
    %85 = vector.multi_reduction <add>, %84, %cst_43 [1] : vector<4x4xf32> to vector<4xf32>
    %86 = vector.shape_cast %85 : vector<4xf32> to vector<4x1xf32>
    %87 = tpu.reciprocal %86 {approx = true} : vector<4x1xf32> -> vector<4x1xf32>
    %88 = vector.broadcast %87 : vector<4x1xf32> to vector<4x4xf32>
    %89 = arith.mulf %84, %88 : vector<4x4xf32>
    %90 = arith.truncf %89 : vector<4x4xf32> to vector<4x4xbf16>
    %cst_44 = arith.constant dense<0.000000e+00> : vector<4x8xf32>
    %91 = tpu.matmul %90, %78, %cst_44 {dimension_numbers = #tpu.dot_dimension_numbers<[1], [0], [0], [1], [0, 0, 1, 1], [], []>} : vector<4x4xbf16>, vector<4x8xbf16>, vector<4x8xf32> -> vector<4x8xf32>
    %c0_45 = arith.constant 0 : index
    %c24_46 = arith.constant 24 : index
    %92 = vector.load %arg24[%c0_45, %c24_46] : memref<4x32xf32, #tpu.memory_space<vmem>>, vector<4x8xf32>
    tpu.vector_store %arg24[%c0_45, %c24_46], %91 {strides = array<i32>} : memref<4x32xf32, #tpu.memory_space<vmem>>, vector<4x8xf32>,
    %c0_47 = arith.constant 0 : index
    %c0_48 = arith.constant 0 : index
    %93 = vector.load %arg24[%c0_47, %c0_48] : memref<4x32xf32, #tpu.memory_space<vmem>>, vector<4x32xf32>
    %94 = arith.truncf %93 : vector<4x32xf32> to vector<4x32xbf16>
    %c0_49 = arith.constant 0 : index
    %c0_50 = arith.constant 0 : index
    %c0_51 = arith.constant 0 : index
    %95 = vector.load %arg5[%c0_49, %c0_50, %c0_51] : memref<1x32x32xbf16, #tpu.memory_space<vmem>>, vector<1x32x32xbf16>
    %96 = vector.shape_cast %95 : vector<1x32x32xbf16> to vector<32x32xbf16>
    %cst_52 = arith.constant dense<0.000000e+00> : vector<4x32xf32>
    %97 = tpu.matmul %94, %96, %cst_52 {dimension_numbers = #tpu.dot_dimension_numbers<[1], [0], [0], [1], [0, 0, 1, 1], [], []>} : vector<4x32xbf16>, vector<32x32xbf16>, vector<4x32xf32> -> vector<4x32xf32>
    %c0_53 = arith.constant 0 : index
    %c0_54 = arith.constant 0 : index
    %c0_55 = arith.constant 0 : index
    %98 = vector.load %arg6[%c0_53, %c0_54, %c0_55] : memref<1x1x32xf32, #tpu.memory_space<vmem>>, vector<1x1x32xf32>
    %99 = vector.shape_cast %98 : vector<1x1x32xf32> to vector<1x32xf32>
    %100 = vector.broadcast %99 : vector<1x32xf32> to vector<4x32xf32>
    %101 = arith.addf %97, %100 : vector<4x32xf32>
    %102 = arith.addf %3, %101 : vector<4x32xf32>
    %c0_56 = arith.constant 0 : index
    %c0_57 = arith.constant 0 : index
    %c0_58 = arith.constant 0 : index
    %103 = vector.load %arg11[%c0_56, %c0_57, %c0_58] : memref<1x1x32xf32, #tpu.memory_space<vmem>>, vector<1x1x32xf32>
    %104 = vector.shape_cast %103 : vector<1x1x32xf32> to vector<1x32xf32>
    %c0_59 = arith.constant 0 : index
    %c0_60 = arith.constant 0 : index
    %c0_61 = arith.constant 0 : index
    %105 = vector.load %arg12[%c0_59, %c0_60, %c0_61] : memref<1x1x32xf32, #tpu.memory_space<vmem>>, vector<1x1x32xf32>
    %106 = vector.shape_cast %105 : vector<1x1x32xf32> to vector<1x32xf32>
    %cst_62 = arith.constant dense<0.000000e+00> : vector<4xf32>
    %107 = vector.multi_reduction <add>, %102, %cst_62 [1] : vector<4x32xf32> to vector<4xf32>
    %108 = vector.shape_cast %107 : vector<4xf32> to vector<4x1xf32>
    %cst_63 = arith.constant 3.200000e+01 : f32
    %109 = vector.broadcast %cst_63 : f32 to vector<4x1xf32>
    %110 = arith.divf %108, %109 : vector<4x1xf32>
    %111 = vector.broadcast %110 : vector<4x1xf32> to vector<4x32xf32>
    %112 = arith.subf %102, %111 : vector<4x32xf32>
    %113 = arith.mulf %112, %112 : vector<4x32xf32>
    %cst_64 = arith.constant dense<0.000000e+00> : vector<4xf32>
    %114 = vector.multi_reduction <add>, %113, %cst_64 [1] : vector<4x32xf32> to vector<4xf32>
    %115 = vector.shape_cast %114 : vector<4xf32> to vector<4x1xf32>
    %cst_65 = arith.constant 3.200000e+01 : f32
    %116 = vector.broadcast %cst_65 : f32 to vector<4x1xf32>
    %117 = arith.divf %115, %116 : vector<4x1xf32>
    %118 = vector.broadcast %110 : vector<4x1xf32> to vector<4x32xf32>
    %119 = arith.subf %102, %118 : vector<4x32xf32>
    %cst_66 = arith.constant 9.99999974E-6 : f32
    %120 = vector.broadcast %cst_66 : f32 to vector<4x1xf32>
    %121 = arith.addf %117, %120 : vector<4x1xf32>
    %122 = math.rsqrt %121 : vector<4x1xf32>
    %123 = vector.broadcast %122 : vector<4x1xf32> to vector<4x32xf32>
    %124 = arith.mulf %119, %123 : vector<4x32xf32>
    %125 = vector.broadcast %104 : vector<1x32xf32> to vector<4x32xf32>
    %126 = arith.mulf %124, %125 : vector<4x32xf32>
    %127 = vector.broadcast %106 : vector<1x32xf32> to vector<4x32xf32>
    %128 = arith.addf %126, %127 : vector<4x32xf32>
    %129 = arith.truncf %128 : vector<4x32xf32> to vector<4x32xbf16>
    %c0_67 = arith.constant 0 : index
    %c0_68 = arith.constant 0 : index
    %c0_69 = arith.constant 0 : index
    %130 = vector.load %arg7[%c0_67, %c0_68, %c0_69] : memref<1x32x32xbf16, #tpu.memory_space<vmem>>, vector<1x32x32xbf16>
    %131 = vector.shape_cast %130 : vector<1x32x32xbf16> to vector<32x32xbf16>
    %cst_70 = arith.constant dense<0.000000e+00> : vector<4x32xf32>
    %132 = tpu.matmul %129, %131, %cst_70 {dimension_numbers = #tpu.dot_dimension_numbers<[1], [0], [0], [1], [0, 0, 1, 1], [], []>} : vector<4x32xbf16>, vector<32x32xbf16>, vector<4x32xf32> -> vector<4x32xf32>
    %c0_71 = arith.constant 0 : index
    %c0_72 = arith.constant 0 : index
    %c0_73 = arith.constant 0 : index
    %133 = vector.load %arg8[%c0_71, %c0_72, %c0_73] : memref<1x1x32xf32, #tpu.memory_space<vmem>>, vector<1x1x32xf32>
    %134 = vector.shape_cast %133 : vector<1x1x32xf32> to vector<1x32xf32>
    %135 = vector.broadcast %134 : vector<1x32xf32> to vector<4x32xf32>
    %136 = arith.addf %132, %135 : vector<4x32xf32>
    %cst_74 = arith.constant 5.000000e-01 : f32
    %137 = vector.broadcast %cst_74 : f32 to vector<4x32xf32>
    %138 = arith.mulf %137, %136 : vector<4x32xf32>
    %139 = arith.mulf %136, %136 : vector<4x32xf32>
    %140 = arith.mulf %139, %136 : vector<4x32xf32>
    %cst_75 = arith.constant 4.471500e-02 : f32
    %141 = vector.broadcast %cst_75 : f32 to vector<4x32xf32>
    %142 = arith.mulf %141, %140 : vector<4x32xf32>
    %143 = arith.addf %136, %142 : vector<4x32xf32>
    %cst_76 = arith.constant 0.797884583 : f32
    %144 = vector.broadcast %cst_76 : f32 to vector<4x32xf32>
    %145 = arith.mulf %144, %143 : vector<4x32xf32>
    %146 = math.tanh %145 : vector<4x32xf32>
    %cst_77 = arith.constant 1.000000e+00 : f32
    %147 = vector.broadcast %cst_77 : f32 to vector<4x32xf32>
    %148 = arith.addf %147, %146 : vector<4x32xf32>
    %149 = arith.mulf %138, %148 : vector<4x32xf32>
    %150 = arith.truncf %149 : vector<4x32xf32> to vector<4x32xbf16>
    %c0_78 = arith.constant 0 : index
    %c0_79 = arith.constant 0 : index
    %c0_80 = arith.constant 0 : index
    %151 = vector.load %arg9[%c0_78, %c0_79, %c0_80] : memref<1x32x32xbf16, #tpu.memory_space<vmem>>, vector<1x32x32xbf16>
    %152 = vector.shape_cast %151 : vector<1x32x32xbf16> to vector<32x32xbf16>
    %cst_81 = arith.constant dense<0.000000e+00> : vector<4x32xf32>
    %153 = tpu.matmul %150, %152, %cst_81 {dimension_numbers = #tpu.dot_dimension_numbers<[1], [0], [0], [1], [0, 0, 1, 1], [], []>} : vector<4x32xbf16>, vector<32x32xbf16>, vector<4x32xf32> -> vector<4x32xf32>
    %c0_82 = arith.constant 0 : index
    %c0_83 = arith.constant 0 : index
    %c0_84 = arith.constant 0 : index
    %154 = vector.load %arg10[%c0_82, %c0_83, %c0_84] : memref<1x1x32xf32, #tpu.memory_space<vmem>>, vector<1x1x32xf32>
    %155 = vector.shape_cast %154 : vector<1x1x32xf32> to vector<1x32xf32>
    %156 = vector.broadcast %155 : vector<1x32xf32> to vector<4x32xf32>
    %157 = arith.addf %153, %156 : vector<4x32xf32>
    %158 = arith.addf %128, %157 : vector<4x32xf32>
    %c0_85 = arith.constant 0 : index
    %c0_86 = arith.constant 0 : index
    %c0_87 = arith.constant 0 : index
    %159 = vector.load %arg13[%c0_85, %c0_86, %c0_87] : memref<1x1x32xf32, #tpu.memory_space<vmem>>, vector<1x1x32xf32>
    %160 = vector.shape_cast %159 : vector<1x1x32xf32> to vector<1x32xf32>
    %c0_88 = arith.constant 0 : index
    %c0_89 = arith.constant 0 : index
    %c0_90 = arith.constant 0 : index
    %161 = vector.load %arg14[%c0_88, %c0_89, %c0_90] : memref<1x1x32xf32, #tpu.memory_space<vmem>>, vector<1x1x32xf32>
    %162 = vector.shape_cast %161 : vector<1x1x32xf32> to vector<1x32xf32>
    %cst_91 = arith.constant dense<0.000000e+00> : vector<4xf32>
    %163 = vector.multi_reduction <add>, %158, %cst_91 [1] : vector<4x32xf32> to vector<4xf32>
    %164 = vector.shape_cast %163 : vector<4xf32> to vector<4x1xf32>
    %cst_92 = arith.constant 3.200000e+01 : f32
    %165 = vector.broadcast %cst_92 : f32 to vector<4x1xf32>
    %166 = arith.divf %164, %165 : vector<4x1xf32>
    %167 = vector.broadcast %166 : vector<4x1xf32> to vector<4x32xf32>
    %168 = arith.subf %158, %167 : vector<4x32xf32>
    %169 = arith.mulf %168, %168 : vector<4x32xf32>
    %cst_93 = arith.constant dense<0.000000e+00> : vector<4xf32>
    %170 = vector.multi_reduction <add>, %169, %cst_93 [1] : vector<4x32xf32> to vector<4xf32>
    %171 = vector.shape_cast %170 : vector<4xf32> to vector<4x1xf32>
    %cst_94 = arith.constant 3.200000e+01 : f32
    %172 = vector.broadcast %cst_94 : f32 to vector<4x1xf32>
    %173 = arith.divf %171, %172 : vector<4x1xf32>
    %174 = vector.broadcast %166 : vector<4x1xf32> to vector<4x32xf32>
    %175 = arith.subf %158, %174 : vector<4x32xf32>
    %cst_95 = arith.constant 9.99999974E-6 : f32
    %176 = vector.broadcast %cst_95 : f32 to vector<4x1xf32>
    %177 = arith.addf %173, %176 : vector<4x1xf32>
    %178 = math.rsqrt %177 : vector<4x1xf32>
    %179 = vector.broadcast %178 : vector<4x1xf32> to vector<4x32xf32>
    %180 = arith.mulf %175, %179 : vector<4x32xf32>
    %181 = vector.broadcast %160 : vector<1x32xf32> to vector<4x32xf32>
    %182 = arith.mulf %180, %181 : vector<4x32xf32>
    %183 = vector.broadcast %162 : vector<1x32xf32> to vector<4x32xf32>
    %184 = arith.addf %182, %183 : vector<4x32xf32>
    %c0_96 = arith.constant 0 : index
    %c0_97 = arith.constant 0 : index
    %185 = vector.load %arg22[%c0_96, %c0_97] : memref<4x32xf32, #tpu.memory_space<vmem>>, vector<4x32xf32>
    tpu.vector_store %arg22[%c0_96, %c0_97], %184 {strides = array<i32>} : memref<4x32xf32, #tpu.memory_space<vmem>>, vector<4x32xf32>,
    %c1_i32 = arith.constant 1 : i32
    %186 = arith.cmpi eq, %arg1, %c1_i32 : i32
    %187 = arith.extui %186 : i1 to i32
    %c0_i32_98 = arith.constant 0 : i32
    %188 = arith.cmpi ne, %187, %c0_i32_98 : i32
    scf.if %188 {
      %c0_99 = arith.constant 0 : index
      %c0_100 = arith.constant 0 : index
      %189 = vector.load %arg15[%c0_99, %c0_100] : memref<1x32xf32, #tpu.memory_space<vmem>>, vector<1x32xf32>
      %c0_101 = arith.constant 0 : index
      %c0_102 = arith.constant 0 : index
      %190 = vector.load %arg16[%c0_101, %c0_102] : memref<1x32xf32, #tpu.memory_space<vmem>>, vector<1x32xf32>
      %cst_103 = arith.constant dense<0.000000e+00> : vector<4xf32>
      %191 = vector.multi_reduction <add>, %184, %cst_103 [1] : vector<4x32xf32> to vector<4xf32>
      %192 = vector.shape_cast %191 : vector<4xf32> to vector<4x1xf32>
      %cst_104 = arith.constant 3.200000e+01 : f32
      %193 = vector.broadcast %cst_104 : f32 to vector<4x1xf32>
      %194 = arith.divf %192, %193 : vector<4x1xf32>
      %195 = vector.broadcast %194 : vector<4x1xf32> to vector<4x32xf32>
      %196 = arith.subf %184, %195 : vector<4x32xf32>
      %197 = arith.mulf %196, %196 : vector<4x32xf32>
      %cst_105 = arith.constant dense<0.000000e+00> : vector<4xf32>
      %198 = vector.multi_reduction <add>, %197, %cst_105 [1] : vector<4x32xf32> to vector<4xf32>
      %199 = vector.shape_cast %198 : vector<4xf32> to vector<4x1xf32>
      %cst_106 = arith.constant 3.200000e+01 : f32
      %200 = vector.broadcast %cst_106 : f32 to vector<4x1xf32>
      %201 = arith.divf %199, %200 : vector<4x1xf32>
      %202 = vector.broadcast %194 : vector<4x1xf32> to vector<4x32xf32>
      %203 = arith.subf %184, %202 : vector<4x32xf32>
      %cst_107 = arith.constant 9.99999974E-6 : f32
      %204 = vector.broadcast %cst_107 : f32 to vector<4x1xf32>
      %205 = arith.addf %201, %204 : vector<4x1xf32>
      %206 = math.rsqrt %205 : vector<4x1xf32>
      %207 = vector.broadcast %206 : vector<4x1xf32> to vector<4x32xf32>
      %208 = arith.mulf %203, %207 : vector<4x32xf32>
      %209 = vector.broadcast %189 : vector<1x32xf32> to vector<4x32xf32>
      %210 = arith.mulf %208, %209 : vector<4x32xf32>
      %211 = vector.broadcast %190 : vector<1x32xf32> to vector<4x32xf32>
      %212 = arith.addf %210, %211 : vector<4x32xf32>
      %213 = arith.truncf %212 : vector<4x32xf32> to vector<4x32xbf16>
      %c0_108 = arith.constant 0 : index
      %c0_109 = arith.constant 0 : index
      %214 = vector.load %arg17[%c0_108, %c0_109] : memref<32x128xbf16, #tpu.memory_space<vmem>>, vector<32x128xbf16>
      %cst_110 = arith.constant dense<0.000000e+00> : vector<4x128xf32>
      %215 = tpu.matmul %213, %214, %cst_110 {dimension_numbers = #tpu.dot_dimension_numbers<[1], [0], [0], [1], [0, 0, 1, 1], [], []>} : vector<4x32xbf16>, vector<32x128xbf16>, vector<4x128xf32> -> vector<4x128xf32>
      %c0_111 = arith.constant 0 : index
      %c0_112 = arith.constant 0 : index
      %216 = vector.load %arg18[%c0_111, %c0_112] : memref<1x128xf32, #tpu.memory_space<vmem>>, vector<1x128xf32>
      %217 = vector.broadcast %216 : vector<1x128xf32> to vector<4x128xf32>
      %218 = arith.addf %215, %217 : vector<4x128xf32>
      %c0_113 = arith.constant 0 : index
      %c0_114 = arith.constant 0 : index
      %c0_115 = arith.constant 0 : index
      %219 = vector.load %arg20[%c0_113, %c0_114, %c0_115] : memref<1x4x1xf32, #tpu.memory_space<vmem>>, vector<1x4x1xf32>
      %220 = vector.shape_cast %219 : vector<1x4x1xf32> to vector<4x1xf32>
      %221 = vector.broadcast %220 : vector<4x1xf32> to vector<4x128xf32>
      %222 = arith.mulf %218, %221 : vector<4x128xf32>
      %c0_116 = arith.constant 0 : index
      %c0_117 = arith.constant 0 : index
      %c0_118 = arith.constant 0 : index
      %223 = vector.load %arg19[%c0_116, %c0_117, %c0_118] : memref<1x4x1xf32, #tpu.memory_space<vmem>>, vector<1x4x1xf32>
      %224 = vector.shape_cast %223 : vector<1x4x1xf32> to vector<4x1xf32>
      %225 = vector.broadcast %224 : vector<4x1xf32> to vector<4x128xf32>
      %226 = arith.addf %222, %225 : vector<4x128xf32>
      %c0_119 = arith.constant 0 : index
      %c0_120 = arith.constant 0 : index
      %c0_121 = arith.constant 0 : index
      %227 = vector.load %arg21[%c0_119, %c0_120, %c0_121] : memref<1x4x128xf32, #tpu.memory_space<vmem>>, vector<1x4x128xf32>
      %228 = vector.shape_cast %227 : vector<1x4x128xf32> to vector<4x128xf32>
      %229 = vector.shape_cast %226 : vector<4x128xf32> to vector<1x4x128xf32>
      tpu.vector_store %arg21[%c0_119, %c0_120, %c0_121], %229 {strides = array<i32>} : memref<1x4x128xf32, #tpu.memory_space<vmem>>, vector<1x4x128xf32>,
    } else {
    }
    return
  }
  func.func @transform_0(%arg0: i32, %arg1: i32) -> (i32, i32, i32) {
    %c0_i32 = arith.constant 0 : i32
    %c0_i32_0 = arith.constant 0 : i32
    %c0_i32_1 = arith.constant 0 : i32
    return %arg0, %c0_i32, %c0_i32_0 : i32, i32, i32
  }
  func.func @transform_1(%arg0: i32, %arg1: i32) -> (i32, i32, i32) {
    %c0_i32 = arith.constant 0 : i32
    %c0_i32_0 = arith.constant 0 : i32
    %c0_i32_1 = arith.constant 0 : i32
    return %arg1, %c0_i32, %c0_i32_0 : i32, i32, i32
  }
  func.func @transform_2(%arg0: i32, %arg1: i32) -> (i32, i32, i32) {
    %c0_i32 = arith.constant 0 : i32
    %c0_i32_0 = arith.constant 0 : i32
    %c0_i32_1 = arith.constant 0 : i32
    return %arg1, %c0_i32, %c0_i32_0 : i32, i32, i32
  }
  func.func @transform_3(%arg0: i32, %arg1: i32) -> (i32, i32, i32) {
    %c0_i32 = arith.constant 0 : i32
    %c0_i32_0 = arith.constant 0 : i32
    %c0_i32_1 = arith.constant 0 : i32
    return %arg1, %c0_i32, %c0_i32_0 : i32, i32, i32
  }
  func.func @transform_4(%arg0: i32, %arg1: i32) -> (i32, i32, i32) {
    %c0_i32 = arith.constant 0 : i32
    %c0_i32_0 = arith.constant 0 : i32
    %c0_i32_1 = arith.constant 0 : i32
    return %arg1, %c0_i32, %c0_i32_0 : i32, i32, i32
  }
  func.func @transform_5(%arg0: i32, %arg1: i32) -> (i32, i32, i32) {
    %c0_i32 = arith.constant 0 : i32
    %c0_i32_0 = arith.constant 0 : i32
    %c0_i32_1 = arith.constant 0 : i32
    return %arg1, %c0_i32, %c0_i32_0 : i32, i32, i32
  }
  func.func @transform_6(%arg0: i32, %arg1: i32) -> (i32, i32, i32) {
    %c0_i32 = arith.constant 0 : i32
    %c0_i32_0 = arith.constant 0 : i32
    %c0_i32_1 = arith.constant 0 : i32
    return %arg1, %c0_i32, %c0_i32_0 : i32, i32, i32
  }
  func.func @transform_7(%arg0: i32, %arg1: i32) -> (i32, i32, i32) {
    %c0_i32 = arith.constant 0 : i32
    %c0_i32_0 = arith.constant 0 : i32
    %c0_i32_1 = arith.constant 0 : i32
    return %arg1, %c0_i32, %c0_i32_0 : i32, i32, i32
  }
  func.func @transform_8(%arg0: i32, %arg1: i32) -> (i32, i32, i32) {
    %c0_i32 = arith.constant 0 : i32
    %c0_i32_0 = arith.constant 0 : i32
    %c0_i32_1 = arith.constant 0 : i32
    return %arg1, %c0_i32, %c0_i32_0 : i32, i32, i32
  }
  func.func @transform_9(%arg0: i32, %arg1: i32) -> (i32, i32, i32) {
    %c0_i32 = arith.constant 0 : i32
    %c0_i32_0 = arith.constant 0 : i32
    %c0_i32_1 = arith.constant 0 : i32
    return %arg1, %c0_i32, %c0_i32_0 : i32, i32, i32
  }
  func.func @transform_10(%arg0: i32, %arg1: i32) -> (i32, i32, i32) {
    %c0_i32 = arith.constant 0 : i32
    %c0_i32_0 = arith.constant 0 : i32
    %c0_i32_1 = arith.constant 0 : i32
    return %arg1, %c0_i32, %c0_i32_0 : i32, i32, i32
  }
  func.func @transform_11(%arg0: i32, %arg1: i32) -> (i32, i32, i32) {
    %c0_i32 = arith.constant 0 : i32
    %c0_i32_0 = arith.constant 0 : i32
    %c0_i32_1 = arith.constant 0 : i32
    return %arg1, %c0_i32, %c0_i32_0 : i32, i32, i32
  }
  func.func @transform_12(%arg0: i32, %arg1: i32) -> (i32, i32, i32) {
    %c0_i32 = arith.constant 0 : i32
    %c0_i32_0 = arith.constant 0 : i32
    %c0_i32_1 = arith.constant 0 : i32
    return %arg1, %c0_i32, %c0_i32_0 : i32, i32, i32
  }
  func.func @transform_13(%arg0: i32, %arg1: i32) -> (i32, i32) {
    %c0_i32 = arith.constant 0 : i32
    %c0_i32_0 = arith.constant 0 : i32
    %c0_i32_1 = arith.constant 0 : i32
    return %c0_i32, %c0_i32_0 : i32, i32
  }
  func.func @transform_14(%arg0: i32, %arg1: i32) -> (i32, i32) {
    %c0_i32 = arith.constant 0 : i32
    %c0_i32_0 = arith.constant 0 : i32
    %c0_i32_1 = arith.constant 0 : i32
    return %c0_i32, %c0_i32_0 : i32, i32
  }
  func.func @transform_15(%arg0: i32, %arg1: i32) -> (i32, i32) {
    %c0_i32 = arith.constant 0 : i32
    %c0_i32_0 = arith.constant 0 : i32
    %c0_i32_1 = arith.constant 0 : i32
    return %c0_i32, %c0_i32_0 : i32, i32
  }
  func.func @transform_16(%arg0: i32, %arg1: i32) -> (i32, i32) {
    %c0_i32 = arith.constant 0 : i32
    %c0_i32_0 = arith.constant 0 : i32
    %c0_i32_1 = arith.constant 0 : i32
    return %c0_i32, %c0_i32_0 : i32, i32
  }
  func.func @transform_17(%arg0: i32, %arg1: i32) -> (i32, i32, i32) {
    %c0_i32 = arith.constant 0 : i32
    %c0_i32_0 = arith.constant 0 : i32
    %c0_i32_1 = arith.constant 0 : i32
    return %arg0, %c0_i32, %c0_i32_0 : i32, i32, i32
  }
  func.func @transform_18(%arg0: i32, %arg1: i32) -> (i32, i32, i32) {
    %c0_i32 = arith.constant 0 : i32
    %c0_i32_0 = arith.constant 0 : i32
    %c0_i32_1 = arith.constant 0 : i32
    return %arg0, %c0_i32, %c0_i32_0 : i32, i32, i32
  }
  func.func @transform_19(%arg0: i32, %arg1: i32) -> (i32, i32, i32) {
    %c0_i32 = arith.constant 0 : i32
    %c0_i32_0 = arith.constant 0 : i32
    %c0_i32_1 = arith.constant 0 : i32
    return %arg0, %c0_i32, %c0_i32_0 : i32, i32, i32
  }
}

</mosaic_0001>

<llo_original>
// kernel: itransformer_forward.2
$region0: #{itransformer_forward.2}
  #allocation0 [shape = 'u32[]', space=smem, size = 0x4, offset = 0x4, fixed_abs, tag = 'smem constant byte address 0x4 - core index']
  #allocation1 [shape = 'u32[144,128]{1,0:T(1,128)}', space=vmem, size = 0x12000, scoped, tag = 'internal scratch']
  %s0 = inlined_call_operand.vmem [shape: f32[4,2,8], index: 0, kind: input, shape index: {}]
  %s1 = inlined_call_operand.hbm [shape: bf16[4,8,32], index: 1, kind: input, shape index: {}]
  %s2 = inlined_call_operand.hbm [shape: f32[4,1,32], index: 2, kind: input, shape index: {}]
  %s3 = inlined_call_operand.vmem [shape: f32[4,2,32], index: 3, kind: output, shape index: {0}]
  %s4 = inlined_call_operand.vmem [shape: f32[4,2,1], index: 4, kind: output, shape index: {1}]
  %s5 = inlined_call_operand.vmem [shape: f32[4,2,1], index: 5, kind: output, shape index: {2}]
  %6 = xla_tuple %s3, %s4, %s5
  %s7 = sld [smem:[#allocation0]]
  $region46: #{itransformer_forward.2} parent=0
    _
  %s9 = ssub.s32 1, %s7
  %s10 = scalar_select 0, %s9, %s7
  $region1: #{itransformer_forward.2} parent=0
    #allocation2 [shape = 'u8[8192]{0}', space=vmem, size = 0x2000, scoped, tag = 'input window, operand 1, single buffered']
    #allocation3 [shape = 's32[1]{0}', space=sflag, size = 0x4, scoped, tag = 'scoped memory for itransformer_forward.2']
    #allocation4 [shape = 'u8[2048]{0}', space=vmem, size = 0x800, scoped, tag = 'input window, operand 2, single buffered']
    #allocation5 [shape = 's32[1]{0}', space=sflag, size = 0x4, scoped, tag = 'scoped memory for itransformer_forward.2']
    %11 = vsyncpa [#allocation3], 0
    %12 = vsyncpa [#allocation5], 0
    // Predicated region
    $region2: #{itransformer_forward.2} parent=1 // pred_check
      _
    $region3: #{itransformer_forward.2} parent=1 // pred_check_branch
      %14 = sbr.rel (0) target = $region5
    $region4: #{itransformer_forward.2} parent=1 // pred_region
      _
    $region5: #{itransformer_forward.2} parent=1 // pred_fallthru
      _
    // Predicated region
    $region6: #{itransformer_forward.2} parent=1 // pred_check
      _
    $region7: #{itransformer_forward.2} parent=1 // pred_check_branch
      %16 = sbr.rel (0) target = $region9
    $region8: #{itransformer_forward.2} parent=1 // pred_region
      %s18 = ssub.s32 256, 256
      %19 = vsyncadd [#allocation3], %s18
      %s20 = sshll.u32 [#allocation2], 4
      %s21 = int_to_ptr.vmem [resolvable:$true] %s20
      %26 = dma.hbm_to_vmem [thread:$0]  %s1, 256, %s21, [#allocation3], 64, 64, 4
    $region9: #{itransformer_forward.2} parent=1 // pred_fallthru
      _
    // Predicated region
    $region10: #{itransformer_forward.2} parent=1 // pred_check
      _
    $region11: #{itransformer_forward.2} parent=1 // pred_check_branch
      %28 = sbr.rel (0) target = $region13
    $region12: #{itransformer_forward.2} parent=1 // pred_region
      %s30 = ssub.s32 64, 64
      %31 = vsyncadd [#allocation5], %s30
      %s32 = sshll.u32 [#allocation4], 4
      %s33 = int_to_ptr.vmem [resolvable:$true] %s32
      %38 = dma.hbm_to_vmem [thread:$0]  %s2, 64, %s33, [#allocation5], 16, 16, 1
    $region13: #{itransformer_forward.2} parent=1 // pred_fallthru
      _
    // Predicated region
    $region14: #{itransformer_forward.2} parent=1 // pred_check
      _
    $region15: #{itransformer_forward.2} parent=1 // pred_check_branch
      %40 = sbr.rel (0) target = $region17
    $region16: #{itransformer_forward.2} parent=1 // pred_region
      %41 = dma.done [#allocation3], 256
    $region17: #{itransformer_forward.2} parent=1 // pred_fallthru
      _
    // Predicated region
    $region18: #{itransformer_forward.2} parent=1 // pred_check
      _
    $region19: #{itransformer_forward.2} parent=1 // pred_check_branch
      %43 = sbr.rel (0) target = $region21
    $region20: #{itransformer_forward.2} parent=1 // pred_region
      %44 = dma.done [#allocation5], 64
    $region21: #{itransformer_forward.2} parent=1 // pred_fallthru
      _
    %v46 = vld [vmem:[%s0] sm:$0x3]
    %v47 = vld [vmem:[%s0 + $0x2] sm:$0x3]
    %v48 = vld [vmem:[%s0 + $0x4] sm:$0x3]
    %v49 = vld [vmem:[%s0 + $0x6] sm:$0x3]
    %vm50 = vcmask 58368
    %v51 = vsel %vm50, %v46, 0.0
    %52 = vadd.xlane.f32.xlu0 %v51
    %v53 = vpop.xlane.xlu0 %52
    %v54 = vsel %vm50, %v47, 0.0
    %55 = vadd.xlane.f32.xlu0 %v54
    %v56 = vpop.xlane.xlu0 %55
    %v57 = vsel %vm50, %v48, 0.0
    %58 = vadd.xlane.f32.xlu0 %v57
    %v59 = vpop.xlane.xlu0 %58
    %v60 = vsel %vm50, %v49, 0.0
    %61 = vadd.xlane.f32.xlu0 %v60
    %v62 = vpop.xlane.xlu0 %61
    %v63 = vrcp.pop 8.0
    %v64 = vmul.f32 %v53, %v63
    %v65 = vmul.f32 %v56, %v63
    %v66 = vmul.f32 %v59, %v63
    %v67 = vmul.f32 %v62, %v63
    %v68 = vsub.f32 %v46, %v64
    %v69 = vsub.f32 %v47, %v65
    %v70 = vsub.f32 %v48, %v66
    %v71 = vsub.f32 %v49, %v67
    %v72 = vmul.f32 %v68, %v68
    %v73 = vmul.f32 %v69, %v69
    %v74 = vmul.f32 %v70, %v70
    %v75 = vmul.f32 %v71, %v71
    %v76 = vsel %vm50, %v72, 0.0
    %77 = vadd.xlane.f32.xlu0 %v76
    %v78 = vpop.xlane.xlu0 %77
    %v79 = vsel %vm50, %v73, 0.0
    %80 = vadd.xlane.f32.xlu0 %v79
    %v81 = vpop.xlane.xlu0 %80
    %v82 = vsel %vm50, %v74, 0.0
    %83 = vadd.xlane.f32.xlu0 %v82
    %v84 = vpop.xlane.xlu0 %83
    %v85 = vsel %vm50, %v75, 0.0
    %86 = vadd.xlane.f32.xlu0 %v85
    %v87 = vpop.xlane.xlu0 %86
    %v88 = vmul.f32 %v78, %v63
    %v89 = vmul.f32 %v81, %v63
    %v90 = vmul.f32 %v84, %v63
    %v91 = vmul.f32 %v87, %v63
    %v92 = vadd.f32 %v88, 1e-05
    %v93 = vadd.f32 %v89, 1e-05
    %v94 = vadd.f32 %v90, 1e-05
    %v95 = vadd.f32 %v91, 1e-05
    %v96 = vrsqrt.pop %v92
    %v97 = vmul.f32 %v92, %v96
    %vm98 = vcmp.eq.f32.partialorder %v92, inf
    %v99 = vsel %vm98, %v92, %v97
    %vm100 = vcmp.eq.f32.partialorder %v92, 0.0
    %v101 = vand.u32 %v92, 2147483648
    %v102 = vsel %vm100, %v101, %v99
    %v103 = vrsqrt.pop %v93
    %v104 = vmul.f32 %v93, %v103
    %vm105 = vcmp.eq.f32.partialorder %v93, inf
    %v106 = vsel %vm105, %v93, %v104
    %vm107 = vcmp.eq.f32.partialorder %v93, 0.0
    %v108 = vand.u32 %v93, 2147483648
    %v109 = vsel %vm107, %v108, %v106
    %v110 = vrsqrt.pop %v94
    %v111 = vmul.f32 %v94, %v110
    %vm112 = vcmp.eq.f32.partialorder %v94, inf
    %v113 = vsel %vm112, %v94, %v111
    %vm114 = vcmp.eq.f32.partialorder %v94, 0.0
    %v115 = vand.u32 %v94, 2147483648
    %v116 = vsel %vm114, %v115, %v113
    %v117 = vrsqrt.pop %v95
    %v118 = vmul.f32 %v95, %v117
    %vm119 = vcmp.eq.f32.partialorder %v95, inf
    %v120 = vsel %vm119, %v95, %v118
    %vm121 = vcmp.eq.f32.partialorder %v95, 0.0
    %v122 = vand.u32 %v95, 2147483648
    %v123 = vsel %vm121, %v122, %v120
    %v124 = vrsqrt.pop %v92
    %v125 = vrsqrt.pop %v93
    %v126 = vrsqrt.pop %v94
    %v127 = vrsqrt.pop %v95
    %v128 = vmul.f32 %v68, %v124
    %v129 = vmul.f32 %v69, %v125
    %v130 = vmul.f32 %v70, %v126
    %v131 = vmul.f32 %v71, %v127
    %v132 = vpack.c.bf16 %v128, %v128
    %v133 = vpack.c.bf16 %v129, %v129
    %v134 = vpack.c.bf16 %v130, %v130
    %v135 = vpack.c.bf16 %v131, %v131
    %v136 = vld [vmem:[#allocation2] sm:$0xf]
    %v137 = vld [vmem:[#allocation2 + $0x4] sm:$0xf]
    %v138 = vld [vmem:[#allocation2 + $0x8] sm:$0xf]
    %v139 = vld [vmem:[#allocation2 + $0xc] sm:$0xf]
    %v140 = vld [vmem:[#allocation4] sm:$0x1]
    %v141 = vld [vmem:[#allocation4 + $0x1] sm:$0x1]
    %v142 = vld [vmem:[#allocation4 + $0x2] sm:$0x1]
    %v143 = vld [vmem:[#allocation4 + $0x3] sm:$0x1]
    %v148 = vlaneseq
    %v149 = vshrl.u32 %v148, 7
    %v150 = vsub.s32 0, %v149
    %v151 = vrot.slane %v140, %v150
    %v152 = vlaneseq
    %v153 = vshrl.u32 %v152, 7
    %v154 = vsub.s32 0, %v153
    %v155 = vrot.slane %v141, %v154
    %v156 = vlaneseq
    %v157 = vshrl.u32 %v156, 7
    %v158 = vsub.s32 0, %v157
    %v159 = vrot.slane %v142, %v158
    %v160 = vlaneseq
    %v161 = vshrl.u32 %v160, 7
    %v162 = vsub.s32 0, %v161
    %v163 = vrot.slane %v143, %v162
    %vm168 = vcmask 64512
    %v170 = vsel %vm168, %v132, 0
    %vm172 = vcmask 1043456
    %v174 = vsel %vm172, %v136, 0
    %176 = vmatprep.subr.bf16.mxu0 0
    %177 = vmatpush1.bf16.msra.mxu0 0
    %178 = vmatprep.subr.bf16.mxu0 0
    %179 = vmatpush1.bf16.msra.mxu0 0
    %180 = vmatprep.subr.bf16.mxu0 0
    %181 = vmatpush1.bf16.msra.mxu0 0
    %182 = vmatprep.subr.bf16.mxu0 0
    %183 = vmatpush1.bf16.msra.mxu0 0
    %184 = vmatprep.subr.bf16.mxu0 0
    %185 = vmatpush1.bf16.msra.mxu0 0
    %186 = vmatprep.subr.bf16.mxu0 0
    %187 = vmatpush1.bf16.msra.mxu0 0
    %188 = vmatprep.subr.bf16.mxu0 0
    %189 = vmatpush1.bf16.msra.mxu0 0
    %190 = vmatprep.subr.bf16.mxu0 0
    %191 = vmatpush1.bf16.msra.mxu0 %v174
    %192 = vmatprep.subr.bf16.mxu0 0
    %193 = vmatpush2.bf16.msra.mxu0 0
    %194 = vmatprep.subr.bf16.mxu0 0
    %195 = vmatpush2.bf16.msra.mxu0 0
    %196 = vmatprep.subr.bf16.mxu0 0
    %197 = vmatpush2.bf16.msra.mxu0 0
    %198 = vmatprep.subr.bf16.mxu0 0
    %199 = vmatpush2.bf16.msra.mxu0 0
    %200 = vmatprep.subr.bf16.mxu0 0
    %201 = vmatpush2.bf16.msra.mxu0 0
    %202 = vmatprep.subr.bf16.mxu0 0
    %203 = vmatpush2.bf16.msra.mxu0 0
    %204 = vmatprep.subr.bf16.mxu0 0
    %205 = vmatpush2.bf16.msra.mxu0 0
    %206 = vmatprep.subr.bf16.mxu0 0
    %207 = vmatpush2.bf16.msra.mxu0 0
    %208 = vmatprep.mubr.bf16.mxu0 0
    %209 = vmatmul.mubr.bf16.gmra.mxu0 %v170
    %v210 = vpop.f32.mrf.mxu0
    %v211 = vadd.f32 %v151, %v210
    %v212 = vpop.f32.mrf.mxu0
    %v213 = vpop.f32.mrf.mxu0
    %v214 = vpop.f32.mrf.mxu0
    %215 = vdwg.mxu0
    %v217 = vsel %vm168, %v133, 0
    %v220 = vsel %vm172, %v137, 0
    %222 = vmatprep.subr.bf16.mxu0 0
    %223 = vmatpush1.bf16.msra.mxu0 0
    %224 = vmatprep.subr.bf16.mxu0 0
    %225 = vmatpush1.bf16.msra.mxu0 0
    %226 = vmatprep.subr.bf16.mxu0 0
    %227 = vmatpush1.bf16.msra.mxu0 0
    %228 = vmatprep.subr.bf16.mxu0 0
    %229 = vmatpush1.bf16.msra.mxu0 0
    %230 = vmatprep.subr.bf16.mxu0 0
    %231 = vmatpush1.bf16.msra.mxu0 0
    %232 = vmatprep.subr.bf16.mxu0 0
    %233 = vmatpush1.bf16.msra.mxu0 0
    %234 = vmatprep.subr.bf16.mxu0 0
    %235 = vmatpush1.bf16.msra.mxu0 0
    %236 = vmatprep.subr.bf16.mxu0 0
    %237 = vmatpush1.bf16.msra.mxu0 %v220
    %238 = vmatprep.subr.bf16.mxu0 0
    %239 = vmatpush2.bf16.msra.mxu0 0
    %240 = vmatprep.subr.bf16.mxu0 0
    %241 = vmatpush2.bf16.msra.mxu0 0
    %242 = vmatprep.subr.bf16.mxu0 0
    %243 = vmatpush2.bf16.msra.mxu0 0
    %244 = vmatprep.subr.bf16.mxu0 0
    %245 = vmatpush2.bf16.msra.mxu0 0
    %246 = vmatprep.subr.bf16.mxu0 0
    %247 = vmatpush2.bf16.msra.mxu0 0
    %248 = vmatprep.subr.bf16.mxu0 0
    %249 = vmatpush2.bf16.msra.mxu0 0
    %250 = vmatprep.subr.bf16.mxu0 0
    %251 = vmatpush2.bf16.msra.mxu0 0
    %252 = vmatprep.subr.bf16.mxu0 0
    %253 = vmatpush2.bf16.msra.mxu0 0
    %254 = vmatprep.mubr.bf16.mxu0 0
    %255 = vmatmul.mubr.bf16.gmra.mxu0 %v217
    %v256 = vpop.f32.mrf.mxu0
    %v257 = vadd.f32 %v155, %v256
    %v258 = vpop.f32.mrf.mxu0
    %v259 = vpop.f32.mrf.mxu0
    %v260 = vpop.f32.mrf.mxu0
    %261 = vdwg.mxu0
    %v263 = vsel %vm168, %v134, 0
    %v266 = vsel %vm172, %v138, 0
    %268 = vmatprep.subr.bf16.mxu0 0
    %269 = vmatpush1.bf16.msra.mxu0 0
    %270 = vmatprep.subr.bf16.mxu0 0
    %271 = vmatpush1.bf16.msra.mxu0 0
    %272 = vmatprep.subr.bf16.mxu0 0
    %273 = vmatpush1.bf16.msra.mxu0 0
    %274 = vmatprep.subr.bf16.mxu0 0
    %275 = vmatpush1.bf16.msra.mxu0 0
    %276 = vmatprep.subr.bf16.mxu0 0
    %277 = vmatpush1.bf16.msra.mxu0 0
    %278 = vmatprep.subr.bf16.mxu0 0
    %279 = vmatpush1.bf16.msra.mxu0 0
    %280 = vmatprep.subr.bf16.mxu0 0
    %281 = vmatpush1.bf16.msra.mxu0 0
    %282 = vmatprep.subr.bf16.mxu0 0
    %283 = vmatpush1.bf16.msra.mxu0 %v266
    %284 = vmatprep.subr.bf16.mxu0 0
    %285 = vmatpush2.bf16.msra.mxu0 0
    %286 = vmatprep.subr.bf16.mxu0 0
    %287 = vmatpush2.bf16.msra.mxu0 0
    %288 = vmatprep.subr.bf16.mxu0 0
    %289 = vmatpush2.bf16.msra.mxu0 0
    %290 = vmatprep.subr.bf16.mxu0 0
    %291 = vmatpush2.bf16.msra.mxu0 0
    %292 = vmatprep.subr.bf16.mxu0 0
    %293 = vmatpush2.bf16.msra.mxu0 0
    %294 = vmatprep.subr.bf16.mxu0 0
    %295 = vmatpush2.bf16.msra.mxu0 0
    %296 = vmatprep.subr.bf16.mxu0 0
    %297 = vmatpush2.bf16.msra.mxu0 0
    %298 = vmatprep.subr.bf16.mxu0 0
    %299 = vmatpush2.bf16.msra.mxu0 0
    %300 = vmatprep.mubr.bf16.mxu0 0
    %301 = vmatmul.mubr.bf16.gmra.mxu0 %v263
    %v302 = vpop.f32.mrf.mxu0
    %v303 = vadd.f32 %v159, %v302
    %v304 = vpop.f32.mrf.mxu0
    %v305 = vpop.f32.mrf.mxu0
    %v306 = vpop.f32.mrf.mxu0
    %307 = vdwg.mxu0
    %v309 = vsel %vm168, %v135, 0
    %v312 = vsel %vm172, %v139, 0
    %314 = vmatprep.subr.bf16.mxu0 0
    %315 = vmatpush1.bf16.msra.mxu0 0
    %316 = vmatprep.subr.bf16.mxu0 0
    %317 = vmatpush1.bf16.msra.mxu0 0
    %318 = vmatprep.subr.bf16.mxu0 0
    %319 = vmatpush1.bf16.msra.mxu0 0
    %320 = vmatprep.subr.bf16.mxu0 0
    %321 = vmatpush1.bf16.msra.mxu0 0
    %322 = vmatprep.subr.bf16.mxu0 0
    %323 = vmatpush1.bf16.msra.mxu0 0
    %324 = vmatprep.subr.bf16.mxu0 0
    %325 = vmatpush1.bf16.msra.mxu0 0
    %326 = vmatprep.subr.bf16.mxu0 0
    %327 = vmatpush1.bf16.msra.mxu0 0
    %328 = vmatprep.subr.bf16.mxu0 0
    %329 = vmatpush1.bf16.msra.mxu0 %v312
    %330 = vmatprep.subr.bf16.mxu0 0
    %331 = vmatpush2.bf16.msra.mxu0 0
    %332 = vmatprep.subr.bf16.mxu0 0
    %333 = vmatpush2.bf16.msra.mxu0 0
    %334 = vmatprep.subr.bf16.mxu0 0
    %335 = vmatpush2.bf16.msra.mxu0 0
    %336 = vmatprep.subr.bf16.mxu0 0
    %337 = vmatpush2.bf16.msra.mxu0 0
    %338 = vmatprep.subr.bf16.mxu0 0
    %339 = vmatpush2.bf16.msra.mxu0 0
    %340 = vmatprep.subr.bf16.mxu0 0
    %341 = vmatpush2.bf16.msra.mxu0 0
    %342 = vmatprep.subr.bf16.mxu0 0
    %343 = vmatpush2.bf16.msra.mxu0 0
    %344 = vmatprep.subr.bf16.mxu0 0
    %345 = vmatpush2.bf16.msra.mxu0 0
    %346 = vmatprep.mubr.bf16.mxu0 0
    %347 = vmatmul.mubr.bf16.gmra.mxu0 %v309
    %v348 = vpop.f32.mrf.mxu0
    %v349 = vadd.f32 %v163, %v348
    %v350 = vpop.f32.mrf.mxu0
    %v351 = vpop.f32.mrf.mxu0
    %v352 = vpop.f32.mrf.mxu0
    %353 = vdwg.mxu0
    %vm354 = vcmask 254976
    %355 = vst.msk [vmem:[%s3] sm:$0x3] %vm354, %v211
    %356 = vst.msk [vmem:[%s3 + $0x2] sm:$0x3] %vm354, %v257
    %357 = vst.msk [vmem:[%s3 + $0x4] sm:$0x3] %vm354, %v303
    %358 = vst.msk [vmem:[%s3 + $0x6] sm:$0x3] %vm354, %v349
    %vm359 = vcmask 1024
    %360 = vst.msk [vmem:[%s4] sm:$0x3] %vm359, %v64
    %361 = vst.msk [vmem:[%s4 + $0x2] sm:$0x3] %vm359, %v65
    %362 = vst.msk [vmem:[%s4 + $0x4] sm:$0x3] %vm359, %v66
    %363 = vst.msk [vmem:[%s4 + $0x6] sm:$0x3] %vm359, %v67
    %364 = vst.msk [vmem:[%s5] sm:$0x3] %vm359, %v102
    %365 = vst.msk [vmem:[%s5 + $0x2] sm:$0x3] %vm359, %v109
    %366 = vst.msk [vmem:[%s5 + $0x4] sm:$0x3] %vm359, %v116
    %367 = vst.msk [vmem:[%s5 + $0x6] sm:$0x3] %vm359, %v123
    // Predicated region
    $region22: #{itransformer_forward.2} parent=1 // pred_check
      _
    $region23: #{itransformer_forward.2} parent=1 // pred_check_branch
      %369 = sbr.rel (0) target = $region25
    $region24: #{itransformer_forward.2} parent=1 // pred_region
      _
    $region25: #{itransformer_forward.2} parent=1 // pred_fallthru
      _
    // Predicated region
    $region26: #{itransformer_forward.2} parent=1 // pred_check
      _
    $region27: #{itransformer_forward.2} parent=1 // pred_check_branch
      %371 = sbr.rel (0) target = $region29
    $region28: #{itransformer_forward.2} parent=1 // pred_region
      _
    $region29: #{itransformer_forward.2} parent=1 // pred_fallthru
      _
    // Predicated region
    $region30: #{itransformer_forward.2} parent=1 // pred_check
      _
    $region31: #{itransformer_forward.2} parent=1 // pred_check_branch
      %373 = sbr.rel (0) target = $region33
    $region32: #{itransformer_forward.2} parent=1 // pred_region
      _
    $region33: #{itransformer_forward.2} parent=1 // pred_fallthru
      _
    // Predicated region
    $region34: #{itransformer_forward.2} parent=1 // pred_check
      _
    $region35: #{itransformer_forward.2} parent=1 // pred_check_branch
      %375 = sbr.rel (0) target = $region37
    $region36: #{itransformer_forward.2} parent=1 // pred_region
      _
    $region37: #{itransformer_forward.2} parent=1 // pred_fallthru
      _
    // Predicated region
    $region38: #{itransformer_forward.2} parent=1 // pred_check
      _
    $region39: #{itransformer_forward.2} parent=1 // pred_check_branch
      %377 = sbr.rel (0) target = $region41
    $region40: #{itransformer_forward.2} parent=1 // pred_region
      _
    $region41: #{itransformer_forward.2} parent=1 // pred_fallthru
      _
    // Predicated region
    $region42: #{itransformer_forward.2} parent=1 // pred_check
      _
    $region43: #{itransformer_forward.2} parent=1 // pred_check_branch
      %379 = sbr.rel (0) target = $region45
    $region44: #{itransformer_forward.2} parent=1 // pred_region
      _
    $region45: #{itransformer_forward.2} parent=1 // pred_fallthru
      _
    %380 = vsyncpa [#allocation3], 1
    %381 = vsyncpa [#allocation5], 1

// kernel: itransformer_forward.3
$region0: #{itransformer_forward.3}
  #allocation0 [shape = 'u32[]', space=smem, size = 0x4, offset = 0x4, fixed_abs, tag = 'smem constant byte address 0x4 - core index']
  #allocation1 [shape = 'u32[144,128]{1,0:T(1,128)}', space=vmem, size = 0x12000, scoped, tag = 'internal scratch']
  #allocation2 [shape = 'f32[4,32]{1,0:T(4,128)}', space=vmem, size = 0x800, scoped, tag = 'scratch operand']
  #allocation3 [shape = 'f32[4,96]{1,0:T(4,128)}', space=vmem, size = 0x800, scoped, tag = 'scratch operand']
  #allocation4 [shape = 'f32[4,32]{1,0:T(4,128)}', space=vmem, size = 0x800, scoped, tag = 'scratch operand']
  %s0 = inlined_call_operand.vmem [shape: f32[2,4,32], index: 0, kind: input, shape index: {}]
  %s1 = inlined_call_operand.vmem [shape: bf16[2,32,96], index: 1, kind: input, shape index: {}]
  %s2 = inlined_call_operand.hbm [shape: f32[2,1,96], index: 2, kind: input, shape index: {}]
  %s3 = inlined_call_operand.vmem [shape: bf16[2,32,32], index: 3, kind: input, shape index: {}]
  %s4 = inlined_call_operand.hbm [shape: f32[2,1,32], index: 4, kind: input, shape index: {}]
  %s5 = inlined_call_operand.vmem [shape: bf16[2,32,32], index: 5, kind: input, shape index: {}]
  %s6 = inlined_call_operand.hbm [shape: f32[2,1,32], index: 6, kind: input, shape index: {}]
  %s7 = inlined_call_operand.vmem [shape: bf16[2,32,32], index: 7, kind: input, shape index: {}]
  %s8 = inlined_call_operand.hbm [shape: f32[2,1,32], index: 8, kind: input, shape index: {}]
  %s9 = inlined_call_operand.hbm [shape: f32[2,1,32], index: 9, kind: input, shape index: {}]
  %s10 = inlined_call_operand.hbm [shape: f32[2,1,32], index: 10, kind: input, shape index: {}]
  %s11 = inlined_call_operand.hbm [shape: f32[2,1,32], index: 11, kind: input, shape index: {}]
  %s12 = inlined_call_operand.hbm [shape: f32[2,1,32], index: 12, kind: input, shape index: {}]
  %s13 = inlined_call_operand.hbm [shape: f32[1,32], index: 13, kind: input, shape index: {}]
  %s14 = inlined_call_operand.hbm [shape: f32[1,32], index: 14, kind: input, shape index: {}]
  %s15 = inlined_call_operand.hbm [shape: bf16[32,128], index: 15, kind: input, shape index: {}]
  %s16 = inlined_call_operand.hbm [shape: f32[1,128], index: 16, kind: input, shape index: {}]
  %s17 = inlined_call_operand.vmem [shape: f32[2,4,1], index: 17, kind: input, shape index: {}]
  %s18 = inlined_call_operand.vmem [shape: f32[2,4,1], index: 18, kind: input, shape index: {}]
  %s19 = inlined_call_operand.vmem [shape: f32[2,4,128], index: 19, kind: output, shape index: {}]
  %s20 = sld [smem:[#allocation0]]
  $region165: #{itransformer_forward.3} parent=0
    _
  %s22 = ssub.s32 1, %s20
  %s23 = scalar_select 0, %s22, %s20
  $region1: #{itransformer_forward.3} parent=0
    #allocation5 [shape = 'u8[1024]{0}', space=vmem, size = 0x400, scoped, tag = 'input window, operand 2']
    #allocation6 [shape = 's32[2]{0}', space=sflag, size = 0x8, scoped, tag = 'scoped memory for itransformer_forward.3']
    #allocation7 [shape = 'u8[1024]{0}', space=vmem, size = 0x400, scoped, tag = 'input window, operand 4']
    #allocation8 [shape = 's32[2]{0}', space=sflag, size = 0x8, scoped, tag = 'scoped memory for itransformer_forward.3']
    #allocation9 [shape = 'u8[1024]{0}', space=vmem, size = 0x400, scoped, tag = 'input window, operand 6']
    #allocation10 [shape = 'u8[1024]{0}', space=vmem, size = 0x400, scoped, tag = 'input window, operand 8']
    #allocation11 [shape = 's32[2]{0}', space=sflag, size = 0x8, scoped, tag = 'scoped memory for itransformer_forward.3']
    #allocation12 [shape = 'u8[1024]{0}', space=vmem, size = 0x400, scoped, tag = 'input window, operand 9']
    #allocation13 [shape = 'u8[1024]{0}', space=vmem, size = 0x400, scoped, tag = 'input window, operand 10']
    #allocation14 [shape = 's32[2]{0}', space=sflag, size = 0x8, scoped, tag = 'scoped memory for itransformer_forward.3']
    #allocation15 [shape = 'u8[1024]{0}', space=vmem, size = 0x400, scoped, tag = 'input window, operand 11']
    #allocation16 [shape = 'u8[1024]{0}', space=vmem, size = 0x400, scoped, tag = 'input window, operand 12']
    #allocation17 [shape = 's32[2]{0}', space=sflag, size = 0x8, scoped, tag = 'scoped memory for itransformer_forward.3']
    #allocation18 [shape = 'u8[512]{0}', space=vmem, size = 0x400, scoped, tag = 'input window, operand 13, single buffered']
    #allocation19 [shape = 'u8[512]{0}', space=vmem, size = 0x400, scoped, tag = 'input window, operand 14, single buffered']
    #allocation20 [shape = 's32[1]{0}', space=sflag, size = 0x4, scoped, tag = 'scoped memory for itransformer_forward.3']
    #allocation21 [shape = 'u8[8192]{0}', space=vmem, size = 0x2000, scoped, tag = 'input window, operand 15, single buffered']
    #allocation22 [shape = 'u8[512]{0}', space=vmem, size = 0x400, scoped, tag = 'input window, operand 16, single buffered']
    #allocation23 [shape = 's32[1]{0}', space=sflag, size = 0x4, scoped, tag = 'scoped memory for itransformer_forward.3']
    %24 = vsyncpa [#allocation6], 0
    %s25 = scalar_lea.sflag [#allocation6], 1
    %26 = vsyncpa %s25, 0
    %27 = vsyncpa [#allocation8], 0
    %s28 = scalar_lea.sflag [#allocation8], 1
    %29 = vsyncpa %s28, 0
    %30 = vsyncpa [#allocation11], 0
    %s31 = scalar_lea.sflag [#allocation11], 1
    %32 = vsyncpa %s31, 0
    %33 = vsyncpa [#allocation14], 0
    %s34 = scalar_lea.sflag [#allocation14], 1
    %35 = vsyncpa %s34, 0
    %36 = vsyncpa [#allocation17], 0
    %s37 = scalar_lea.sflag [#allocation17], 1
    %38 = vsyncpa %s37, 0
    %39 = vsyncpa [#allocation20], 0
    %40 = vsyncpa [#allocation23], 0
    loop: start=0, step=1, limit=6
    $region2: #{itransformer_forward.3} parent=1 // loop_pre_header
      _
    $region3: #{itransformer_forward.3} parent=1 // loop_header
      %s42 = sphi 0, %s46
      %p43 = scmp.ge.s32.totalorder %s42, 6
      %s49 = sphi 0, %s61
      %s50 = sphi 0, %s57
      %s51 = sphi 0, %s49
      %s52 = sphi 0, %s50
      %s53 = sphi 0, %s51
      %s54 = sphi 0, %s52
      %s64 = sphi 0, %s66
      %s67 = sphi 0, %s64
      %s68 = sphi 0, %s67
      %s84 = sphi 0, %s68
      %s90 = sphi 0, %s92
      %s93 = sphi 0, %s90
      %s94 = sphi 0, %s93
      %s110 = sphi 0, %s94
      %s116 = sphi 0, %s118
      %s119 = sphi 0, %s116
      %s120 = sphi 0, %s119
      %s136 = sphi 0, %s120
      %s142 = sphi 0, %s144
      %s145 = sphi 0, %s142
      %s146 = sphi 0, %s145
      %s162 = sphi 0, %s146
      %s168 = sphi 0, %s170
      %s171 = sphi 0, %s168
      %s172 = sphi 0, %s171
      %s188 = sphi 0, %s172
      %s194 = sphi 0, %s196
      %s197 = sphi 0, %s194
      %s198 = sphi 0, %s197
      %s214 = sphi 0, %s198
      %s220 = sphi 0, %s222
      %s223 = sphi 0, %s220
      %s224 = sphi 0, %s223
      %s240 = sphi 0, %s224
      %s246 = sphi 0, %s248
      %s249 = sphi 0, %s246
      %s250 = sphi 0, %s249
      %s266 = sphi 0, %s250
      %s272 = sphi 0, %s274
      %s275 = sphi 0, %s272
      %s276 = sphi 0, %s275
      %s292 = sphi 0, %s276
      %s298 = sphi 0, %s300
      %s301 = sphi 0, %s298
      %s302 = sphi 0, %s301
      %s318 = sphi 0, %s302
      %s324 = sphi 0, %s326
      %s327 = sphi 0, %s324
      %s328 = sphi 0, %s327
      %s344 = sphi 0, %s328
      %s350 = sphi 0, %s352
      %s353 = sphi 0, %s350
      %s354 = sphi 0, %s353
      %s370 = sphi 0, %s354
      %s376 = sphi 0, %s378
      %s379 = sphi 0, %s376
      %s380 = sphi 0, %s379
      %s396 = sphi 0, %s380
      %s400 = sphi 0, %s400
      %s402 = sphi 0, %s400
      %s403 = sphi 0, %s402
      %s417 = sphi 0, %s403
      %s421 = sphi 0, %s421
      %s423 = sphi 0, %s421
      %s424 = sphi 0, %s423
      %s438 = sphi 0, %s424
      %s442 = sphi 0, %s442
      %s444 = sphi 0, %s442
      %s445 = sphi 0, %s444
      %s459 = sphi 0, %s445
      %s463 = sphi 0, %s463
      %s465 = sphi 0, %s463
      %s466 = sphi 0, %s465
      %s480 = sphi 0, %s466
      %s486 = sphi 0, %s488
      %s489 = sphi 0, %s486
      %s490 = sphi 0, %s489
      %s506 = sphi 0, %s490
      %s512 = sphi 0, %s514
      %s515 = sphi 0, %s512
      %s516 = sphi 0, %s515
      %s532 = sphi 0, %s516
      %s538 = sphi 0, %s540
      %s541 = sphi 0, %s538
      %s542 = sphi 0, %s541
      %s558 = sphi 0, %s542
    $region4: #{itransformer_forward.3} parent=1 // loop_header_branch
      %45 = sbr.rel (%p43) target = $region8
    $region5: #{itransformer_forward.3} parent=1 // loop_body
      %s47 = ssub.s32 %s42, 1
      %s48 = ssub.s32 %s42, 2
      %s55 = sadd.s32 1, %s50
      %p56 = scmp.ge.s32.totalorder %s55, 2
      %s57 = scalar_select %p56, 0, %s55
      %s58 = sadd.s32 1, %s49
      %s59 = scalar_select %p56, %s58, %s49
      %p60 = scmp.ge.s32.totalorder %s59, 2
      %s61 = scalar_select %p60, 0, %s59
      %s62 = ssub.s32 %s49, %s61
      %p63 = scmp.eq.s32.totalorder %s62, 0
      %s65 = sadd.s32 %s64, 1
      %s66 = scalar_select %p63, %s64, %s65
      %p69 = pneg %p63
      %p70 = scmp.eq.s32.totalorder %s42, 3
      %p71 = por %p69, %p70
      %p72 = scmp.ne.s32.totalorder %s64, %s67
      %p73 = scmp.eq.s32.totalorder %s42, 0
      %p74 = por %p72, %p73
      %p75 = scmp.ne.s32.totalorder %s64, %s67
      %p76 = scmp.eq.s32.totalorder %s47, 3
      %p77 = por %p75, %p76
      %p78 = scmp.ne.s32.totalorder %s67, %s68
      %p79 = scmp.eq.s32.totalorder %s47, 0
      %p80 = por %p78, %p79
      %p81 = scmp.ne.s32.totalorder %s67, %s68
      %p82 = scmp.eq.s32.totalorder %s48, 3
      %p83 = por %p81, %p82
      %p85 = scmp.ne.s32.totalorder %s68, %s84
      %p86 = scmp.eq.s32.totalorder %s48, 0
      %p87 = por %p85, %p86
      %s88 = ssub.s32 %s50, %s57
      %p89 = scmp.eq.s32.totalorder %s88, 0
      %s91 = sadd.s32 %s90, 1
      %s92 = scalar_select %p89, %s90, %s91
      %p95 = pneg %p89
      %p96 = scmp.eq.s32.totalorder %s42, 3
      %p97 = por %p95, %p96
      %p98 = scmp.ne.s32.totalorder %s90, %s93
      %p99 = scmp.eq.s32.totalorder %s42, 0
      %p100 = por %p98, %p99
      %p101 = scmp.ne.s32.totalorder %s90, %s93
      %p102 = scmp.eq.s32.totalorder %s47, 3
      %p103 = por %p101, %p102
      %p104 = scmp.ne.s32.totalorder %s93, %s94
      %p105 = scmp.eq.s32.totalorder %s47, 0
      %p106 = por %p104, %p105
      %p107 = scmp.ne.s32.totalorder %s93, %s94
      %p108 = scmp.eq.s32.totalorder %s48, 3
      %p109 = por %p107, %p108
      %p111 = scmp.ne.s32.totalorder %s94, %s110
      %p112 = scmp.eq.s32.totalorder %s48, 0
      %p113 = por %p111, %p112
      %s114 = ssub.s32 %s50, %s57
      %p115 = scmp.eq.s32.totalorder %s114, 0
      %s117 = sadd.s32 %s116, 1
      %s118 = scalar_select %p115, %s116, %s117
      %p121 = pneg %p115
      %p122 = scmp.eq.s32.totalorder %s42, 3
      %p123 = por %p121, %p122
      %p124 = scmp.ne.s32.totalorder %s116, %s119
      %p125 = scmp.eq.s32.totalorder %s42, 0
      %p126 = por %p124, %p125
      %p127 = scmp.ne.s32.totalorder %s116, %s119
      %p128 = scmp.eq.s32.totalorder %s47, 3
      %p129 = por %p127, %p128
      %p130 = scmp.ne.s32.totalorder %s119, %s120
      %p131 = scmp.eq.s32.totalorder %s47, 0
      %p132 = por %p130, %p131
      %p133 = scmp.ne.s32.totalorder %s119, %s120
      %p134 = scmp.eq.s32.totalorder %s48, 3
      %p135 = por %p133, %p134
      %p137 = scmp.ne.s32.totalorder %s120, %s136
      %p138 = scmp.eq.s32.totalorder %s48, 0
      %p139 = por %p137, %p138
      %s140 = ssub.s32 %s50, %s57
      %p141 = scmp.eq.s32.totalorder %s140, 0
      %s143 = sadd.s32 %s142, 1
      %s144 = scalar_select %p141, %s142, %s143
      %p147 = pneg %p141
      %p148 = scmp.eq.s32.totalorder %s42, 3
      %p149 = por %p147, %p148
      %p150 = scmp.ne.s32.totalorder %s142, %s145
      %p151 = scmp.eq.s32.totalorder %s42, 0
      %p152 = por %p150, %p151
      %p153 = scmp.ne.s32.totalorder %s142, %s145
      %p154 = scmp.eq.s32.totalorder %s47, 3
      %p155 = por %p153, %p154
      %p156 = scmp.ne.s32.totalorder %s145, %s146
      %p157 = scmp.eq.s32.totalorder %s47, 0
      %p158 = por %p156, %p157
      %p159 = scmp.ne.s32.totalorder %s145, %s146
      %p160 = scmp.eq.s32.totalorder %s48, 3
      %p161 = por %p159, %p160
      %p163 = scmp.ne.s32.totalorder %s146, %s162
      %p164 = scmp.eq.s32.totalorder %s48, 0
      %p165 = por %p163, %p164
      %s166 = ssub.s32 %s50, %s57
      %p167 = scmp.eq.s32.totalorder %s166, 0
      %s169 = sadd.s32 %s168, 1
      %s170 = scalar_select %p167, %s168, %s169
      %p173 = pneg %p167
      %p174 = scmp.eq.s32.totalorder %s42, 3
      %p175 = por %p173, %p174
      %p176 = scmp.ne.s32.totalorder %s168, %s171
      %p177 = scmp.eq.s32.totalorder %s42, 0
      %p178 = por %p176, %p177
      %p179 = scmp.ne.s32.totalorder %s168, %s171
      %p180 = scmp.eq.s32.totalorder %s47, 3
      %p181 = por %p179, %p180
      %p182 = scmp.ne.s32.totalorder %s171, %s172
      %p183 = scmp.eq.s32.totalorder %s47, 0
      %p184 = por %p182, %p183
      %p185 = scmp.ne.s32.totalorder %s171, %s172
      %p186 = scmp.eq.s32.totalorder %s48, 3
      %p187 = por %p185, %p186
      %p189 = scmp.ne.s32.totalorder %s172, %s188
      %p190 = scmp.eq.s32.totalorder %s48, 0
      %p191 = por %p189, %p190
      %s192 = ssub.s32 %s50, %s57
      %p193 = scmp.eq.s32.totalorder %s192, 0
      %s195 = sadd.s32 %s194, 1
      %s196 = scalar_select %p193, %s194, %s195
      %p199 = pneg %p193
      %p200 = scmp.eq.s32.totalorder %s42, 3
      %p201 = por %p199, %p200
      %p202 = scmp.ne.s32.totalorder %s194, %s197
      %p203 = scmp.eq.s32.totalorder %s42, 0
      %p204 = por %p202, %p203
      %p205 = scmp.ne.s32.totalorder %s194, %s197
      %p206 = scmp.eq.s32.totalorder %s47, 3
      %p207 = por %p205, %p206
      %p208 = scmp.ne.s32.totalorder %s197, %s198
      %p209 = scmp.eq.s32.totalorder %s47, 0
      %p210 = por %p208, %p209
      %p211 = scmp.ne.s32.totalorder %s197, %s198
      %p212 = scmp.eq.s32.totalorder %s48, 3
      %p213 = por %p211, %p212
      %p215 = scmp.ne.s32.totalorder %s198, %s214
      %p216 = scmp.eq.s32.totalorder %s48, 0
      %p217 = por %p215, %p216
      %s218 = ssub.s32 %s50, %s57
      %p219 = scmp.eq.s32.totalorder %s218, 0
      %s221 = sadd.s32 %s220, 1
      %s222 = scalar_select %p219, %s220, %s221
      %p225 = pneg %p219
      %p226 = scmp.eq.s32.totalorder %s42, 3
      %p227 = por %p225, %p226
      %p228 = scmp.ne.s32.totalorder %s220, %s223
      %p229 = scmp.eq.s32.totalorder %s42, 0
      %p230 = por %p228, %p229
      %p231 = scmp.ne.s32.totalorder %s220, %s223
      %p232 = scmp.eq.s32.totalorder %s47, 3
      %p233 = por %p231, %p232
      %p234 = scmp.ne.s32.totalorder %s223, %s224
      %p235 = scmp.eq.s32.totalorder %s47, 0
      %p236 = por %p234, %p235
      %p237 = scmp.ne.s32.totalorder %s223, %s224
      %p238 = scmp.eq.s32.totalorder %s48, 3
      %p239 = por %p237, %p238
      %p241 = scmp.ne.s32.totalorder %s224, %s240
      %p242 = scmp.eq.s32.totalorder %s48, 0
      %p243 = por %p241, %p242
      %s244 = ssub.s32 %s50, %s57
      %p245 = scmp.eq.s32.totalorder %s244, 0
      %s247 = sadd.s32 %s246, 1
      %s248 = scalar_select %p245, %s246, %s247
      %p251 = pneg %p245
      %p252 = scmp.eq.s32.totalorder %s42, 3
      %p253 = por %p251, %p252
      %p254 = scmp.ne.s32.totalorder %s246, %s249
      %p255 = scmp.eq.s32.totalorder %s42, 0
      %p256 = por %p254, %p255
      %p257 = scmp.ne.s32.totalorder %s246, %s249
      %p258 = scmp.eq.s32.totalorder %s47, 3
      %p259 = por %p257, %p258
      %p260 = scmp.ne.s32.totalorder %s249, %s250
      %p261 = scmp.eq.s32.totalorder %s47, 0
      %p262 = por %p260, %p261
      %p263 = scmp.ne.s32.totalorder %s249, %s250
      %p264 = scmp.eq.s32.totalorder %s48, 3
      %p265 = por %p263, %p264
      %p267 = scmp.ne.s32.totalorder %s250, %s266
      %p268 = scmp.eq.s32.totalorder %s48, 0
      %p269 = por %p267, %p268
      %s270 = ssub.s32 %s50, %s57
      %p271 = scmp.eq.s32.totalorder %s270, 0
      %s273 = sadd.s32 %s272, 1
      %s274 = scalar_select %p271, %s272, %s273
      %p277 = pneg %p271
      %p278 = scmp.eq.s32.totalorder %s42, 3
      %p279 = por %p277, %p278
      %p280 = scmp.ne.s32.totalorder %s272, %s275
      %p281 = scmp.eq.s32.totalorder %s42, 0
      %p282 = por %p280, %p281
      %p283 = scmp.ne.s32.totalorder %s272, %s275
      %p284 = scmp.eq.s32.totalorder %s47, 3
      %p285 = por %p283, %p284
      %p286 = scmp.ne.s32.totalorder %s275, %s276
      %p287 = scmp.eq.s32.totalorder %s47, 0
      %p288 = por %p286, %p287
      %p289 = scmp.ne.s32.totalorder %s275, %s276
      %p290 = scmp.eq.s32.totalorder %s48, 3
      %p291 = por %p289, %p290
      %p293 = scmp.ne.s32.totalorder %s276, %s292
      %p294 = scmp.eq.s32.totalorder %s48, 0
      %p295 = por %p293, %p294
      %s296 = ssub.s32 %s50, %s57
      %p297 = scmp.eq.s32.totalorder %s296, 0
      %s299 = sadd.s32 %s298, 1
      %s300 = scalar_select %p297, %s298, %s299
      %p303 = pneg %p297
      %p304 = scmp.eq.s32.totalorder %s42, 3
      %p305 = por %p303, %p304
      %p306 = scmp.ne.s32.totalorder %s298, %s301
      %p307 = scmp.eq.s32.totalorder %s42, 0
      %p308 = por %p306, %p307
      %p309 = scmp.ne.s32.totalorder %s298, %s301
      %p310 = scmp.eq.s32.totalorder %s47, 3
      %p311 = por %p309, %p310
      %p312 = scmp.ne.s32.totalorder %s301, %s302
      %p313 = scmp.eq.s32.totalorder %s47, 0
      %p314 = por %p312, %p313
      %p315 = scmp.ne.s32.totalorder %s301, %s302
      %p316 = scmp.eq.s32.totalorder %s48, 3
      %p317 = por %p315, %p316
      %p319 = scmp.ne.s32.totalorder %s302, %s318
      %p320 = scmp.eq.s32.totalorder %s48, 0
      %p321 = por %p319, %p320
      %s322 = ssub.s32 %s50, %s57
      %p323 = scmp.eq.s32.totalorder %s322, 0
      %s325 = sadd.s32 %s324, 1
      %s326 = scalar_select %p323, %s324, %s325
      %p329 = pneg %p323
      %p330 = scmp.eq.s32.totalorder %s42, 3
      %p331 = por %p329, %p330
      %p332 = scmp.ne.s32.totalorder %s324, %s327
      %p333 = scmp.eq.s32.totalorder %s42, 0
      %p334 = por %p332, %p333
      %p335 = scmp.ne.s32.totalorder %s324, %s327
      %p336 = scmp.eq.s32.totalorder %s47, 3
      %p337 = por %p335, %p336
      %p338 = scmp.ne.s32.totalorder %s327, %s328
      %p339 = scmp.eq.s32.totalorder %s47, 0
      %p340 = por %p338, %p339
      %p341 = scmp.ne.s32.totalorder %s327, %s328
      %p342 = scmp.eq.s32.totalorder %s48, 3
      %p343 = por %p341, %p342
      %p345 = scmp.ne.s32.totalorder %s328, %s344
      %p346 = scmp.eq.s32.totalorder %s48, 0
      %p347 = por %p345, %p346
      %s348 = ssub.s32 %s50, %s57
      %p349 = scmp.eq.s32.totalorder %s348, 0
      %s351 = sadd.s32 %s350, 1
      %s352 = scalar_select %p349, %s350, %s351
      %p355 = pneg %p349
      %p356 = scmp.eq.s32.totalorder %s42, 3
      %p357 = por %p355, %p356
      %p358 = scmp.ne.s32.totalorder %s350, %s353
      %p359 = scmp.eq.s32.totalorder %s42, 0
      %p360 = por %p358, %p359
      %p361 = scmp.ne.s32.totalorder %s350, %s353
      %p362 = scmp.eq.s32.totalorder %s47, 3
      %p363 = por %p361, %p362
      %p364 = scmp.ne.s32.totalorder %s353, %s354
      %p365 = scmp.eq.s32.totalorder %s47, 0
      %p366 = por %p364, %p365
      %p367 = scmp.ne.s32.totalorder %s353, %s354
      %p368 = scmp.eq.s32.totalorder %s48, 3
      %p369 = por %p367, %p368
      %p371 = scmp.ne.s32.totalorder %s354, %s370
      %p372 = scmp.eq.s32.totalorder %s48, 0
      %p373 = por %p371, %p372
      %s374 = ssub.s32 %s50, %s57
      %p375 = scmp.eq.s32.totalorder %s374, 0
      %s377 = sadd.s32 %s376, 1
      %s378 = scalar_select %p375, %s376, %s377
      %p381 = pneg %p375
      %p382 = scmp.eq.s32.totalorder %s42, 3
      %p383 = por %p381, %p382
      %p384 = scmp.ne.s32.totalorder %s376, %s379
      %p385 = scmp.eq.s32.totalorder %s42, 0
      %p386 = por %p384, %p385
      %p387 = scmp.ne.s32.totalorder %s376, %s379
      %p388 = scmp.eq.s32.totalorder %s47, 3
      %p389 = por %p387, %p388
      %p390 = scmp.ne.s32.totalorder %s379, %s380
      %p391 = scmp.eq.s32.totalorder %s47, 0
      %p392 = por %p390, %p391
      %p393 = scmp.ne.s32.totalorder %s379, %s380
      %p394 = scmp.eq.s32.totalorder %s48, 3
      %p395 = por %p393, %p394
      %p397 = scmp.ne.s32.totalorder %s380, %s396
      %p398 = scmp.eq.s32.totalorder %s48, 0
      %p399 = por %p397, %p398
      %s401 = sadd.s32 %s400, 1
      %p404 = scmp.eq.s32.totalorder %s42, 3
      %p405 = scmp.ne.s32.totalorder %s400, %s402
      %p406 = scmp.eq.s32.totalorder %s42, 0
      %p407 = por %p405, %p406
      %p408 = scmp.ne.s32.totalorder %s400, %s402
      %p409 = scmp.eq.s32.totalorder %s47, 3
      %p410 = por %p408, %p409
      %p411 = scmp.ne.s32.totalorder %s402, %s403
      %p412 = scmp.eq.s32.totalorder %s47, 0
      %p413 = por %p411, %p412
      %p414 = scmp.ne.s32.totalorder %s402, %s403
      %p415 = scmp.eq.s32.totalorder %s48, 3
      %p416 = por %p414, %p415
      %p418 = scmp.ne.s32.totalorder %s403, %s417
      %p419 = scmp.eq.s32.totalorder %s48, 0
      %p420 = por %p418, %p419
      %s422 = sadd.s32 %s421, 1
      %p425 = scmp.eq.s32.totalorder %s42, 3
      %p426 = scmp.ne.s32.totalorder %s421, %s423
      %p427 = scmp.eq.s32.totalorder %s42, 0
      %p428 = por %p426, %p427
      %p429 = scmp.ne.s32.totalorder %s421, %s423
      %p430 = scmp.eq.s32.totalorder %s47, 3
      %p431 = por %p429, %p430
      %p432 = scmp.ne.s32.totalorder %s423, %s424
      %p433 = scmp.eq.s32.totalorder %s47, 0
      %p434 = por %p432, %p433
      %p435 = scmp.ne.s32.totalorder %s423, %s424
      %p436 = scmp.eq.s32.totalorder %s48, 3
      %p437 = por %p435, %p436
      %p439 = scmp.ne.s32.totalorder %s424, %s438
      %p440 = scmp.eq.s32.totalorder %s48, 0
      %p441 = por %p439, %p440
      %s443 = sadd.s32 %s442, 1
      %p446 = scmp.eq.s32.totalorder %s42, 3
      %p447 = scmp.ne.s32.totalorder %s442, %s444
      %p448 = scmp.eq.s32.totalorder %s42, 0
      %p449 = por %p447, %p448
      %p450 = scmp.ne.s32.totalorder %s442, %s444
      %p451 = scmp.eq.s32.totalorder %s47, 3
      %p452 = por %p450, %p451
      %p453 = scmp.ne.s32.totalorder %s444, %s445
      %p454 = scmp.eq.s32.totalorder %s47, 0
      %p455 = por %p453, %p454
      %p456 = scmp.ne.s32.totalorder %s444, %s445
      %p457 = scmp.eq.s32.totalorder %s48, 3
      %p458 = por %p456, %p457
      %p460 = scmp.ne.s32.totalorder %s445, %s459
      %p461 = scmp.eq.s32.totalorder %s48, 0
      %p462 = por %p460, %p461
      %s464 = sadd.s32 %s463, 1
      %p467 = scmp.eq.s32.totalorder %s42, 3
      %p468 = scmp.ne.s32.totalorder %s463, %s465
      %p469 = scmp.eq.s32.totalorder %s42, 0
      %p470 = por %p468, %p469
      %p471 = scmp.ne.s32.totalorder %s463, %s465
      %p472 = scmp.eq.s32.totalorder %s47, 3
      %p473 = por %p471, %p472
      %p474 = scmp.ne.s32.totalorder %s465, %s466
      %p475 = scmp.eq.s32.totalorder %s47, 0
      %p476 = por %p474, %p475
      %p477 = scmp.ne.s32.totalorder %s465, %s466
      %p478 = scmp.eq.s32.totalorder %s48, 3
      %p479 = por %p477, %p478
      %p481 = scmp.ne.s32.totalorder %s466, %s480
      %p482 = scmp.eq.s32.totalorder %s48, 0
      %p483 = por %p481, %p482
      %s484 = ssub.s32 %s49, %s61
      %p485 = scmp.eq.s32.totalorder %s484, 0
      %s487 = sadd.s32 %s486, 1
      %s488 = scalar_select %p485, %s486, %s487
      %p491 = pneg %p485
      %p492 = scmp.eq.s32.totalorder %s42, 3
      %p493 = por %p491, %p492
      %p494 = scmp.ne.s32.totalorder %s486, %s489
      %p495 = scmp.eq.s32.totalorder %s42, 0
      %p496 = por %p494, %p495
      %p497 = scmp.ne.s32.totalorder %s486, %s489
      %p498 = scmp.eq.s32.totalorder %s47, 3
      %p499 = por %p497, %p498
      %p500 = scmp.ne.s32.totalorder %s489, %s490
      %p501 = scmp.eq.s32.totalorder %s47, 0
      %p502 = por %p500, %p501
      %p503 = scmp.ne.s32.totalorder %s489, %s490
      %p504 = scmp.eq.s32.totalorder %s48, 3
      %p505 = por %p503, %p504
      %p507 = scmp.ne.s32.totalorder %s490, %s506
      %p508 = scmp.eq.s32.totalorder %s48, 0
      %p509 = por %p507, %p508
      %s510 = ssub.s32 %s49, %s61
      %p511 = scmp.eq.s32.totalorder %s510, 0
      %s513 = sadd.s32 %s512, 1
      %s514 = scalar_select %p511, %s512, %s513
      %p517 = pneg %p511
      %p518 = scmp.eq.s32.totalorder %s42, 3
      %p519 = por %p517, %p518
      %p520 = scmp.ne.s32.totalorder %s512, %s515
      %p521 = scmp.eq.s32.totalorder %s42, 0
      %p522 = por %p520, %p521
      %p523 = scmp.ne.s32.totalorder %s512, %s515
      %p524 = scmp.eq.s32.totalorder %s47, 3
      %p525 = por %p523, %p524
      %p526 = scmp.ne.s32.totalorder %s515, %s516
      %p527 = scmp.eq.s32.totalorder %s47, 0
      %p528 = por %p526, %p527
      %p529 = scmp.ne.s32.totalorder %s515, %s516
      %p530 = scmp.eq.s32.totalorder %s48, 3
      %p531 = por %p529, %p530
      %p533 = scmp.ne.s32.totalorder %s516, %s532
      %p534 = scmp.eq.s32.totalorder %s48, 0
      %p535 = por %p533, %p534
      %s536 = ssub.s32 %s49, %s61
      %p537 = scmp.eq.s32.totalorder %s536, 0
      %s539 = sadd.s32 %s538, 1
      %s540 = scalar_select %p537, %s538, %s539
      %p543 = pneg %p537
      %p544 = scmp.eq.s32.totalorder %s42, 3
      %p545 = por %p543, %p544
      %p546 = scmp.ne.s32.totalorder %s538, %s541
      %p547 = scmp.eq.s32.totalorder %s42, 0
      %p548 = por %p546, %p547
      %p549 = scmp.ne.s32.totalorder %s538, %s541
      %p550 = scmp.eq.s32.totalorder %s47, 3
      %p551 = por %p549, %p550
      %p552 = scmp.ne.s32.totalorder %s541, %s542
      %p553 = scmp.eq.s32.totalorder %s47, 0
      %p554 = por %p552, %p553
      %p555 = scmp.ne.s32.totalorder %s541, %s542
      %p556 = scmp.eq.s32.totalorder %s48, 3
      %p557 = por %p555, %p556
      %p559 = scmp.ne.s32.totalorder %s542, %s558
      %p560 = scmp.eq.s32.totalorder %s48, 0
      %p561 = por %p559, %p560
      %p562 = scmp.le.s32.totalorder 1, %s42
      %p563 = scmp.lt.s32.totalorder %s42, 5
      %p564 = pnand %p562, %p563
      %p565 = pneg %p564
      // Predicated region
      $region9: #{itransformer_forward.3} parent=5 // pred_check
        _
      $region10: #{itransformer_forward.3} parent=5 // pred_check_branch
        %567 = sbr.rel (%p564) target = $region12
      $region11: #{itransformer_forward.3} parent=5 // pred_region
        %s568 = ssub.s32 %s42, 1
        // Predicated region
        $region13: #{itransformer_forward.3} parent=11 // pred_check
          %p569 = pneg %p413
        $region14: #{itransformer_forward.3} parent=11 // pred_check_branch
          %571 = sbr.rel (%p569) target = $region16
        $region15: #{itransformer_forward.3} parent=11 // pred_region
          %s573 = ssub.s32 16, 16
          %574 = vsyncadd [#allocation17], %s573
          %s576 = sshll.u32 [#allocation18], 4
          %s577 = int_to_ptr.vmem [resolvable:$true] %s576
          %579 = dma.hbm_to_vmem [thread:$0]  %s13, 16, %s577, [#allocation17]
        $region16: #{itransformer_forward.3} parent=11 // pred_fallthru
          _
        // Predicated region
        $region17: #{itransformer_forward.3} parent=11 // pred_check
          %p580 = pneg %p434
        $region18: #{itransformer_forward.3} parent=11 // pred_check_branch
          %582 = sbr.rel (%p580) target = $region20
        $region19: #{itransformer_forward.3} parent=11 // pred_region
          %s584 = ssub.s32 16, 16
          %585 = vsyncadd [#allocation20], %s584
          %s587 = sshll.u32 [#allocation19], 4
          %s588 = int_to_ptr.vmem [resolvable:$true] %s587
          %590 = dma.hbm_to_vmem [thread:$0]  %s14, 16, %s588, [#allocation20]
        $region20: #{itransformer_forward.3} parent=11 // pred_fallthru
          _
        // Predicated region
        $region21: #{itransformer_forward.3} parent=11 // pred_check
          %p591 = pneg %p455
        $region22: #{itransformer_forward.3} parent=11 // pred_check_branch
          %593 = sbr.rel (%p591) target = $region24
        $region23: #{itransformer_forward.3} parent=11 // pred_region
          %s595 = ssub.s32 256, 256
          %596 = vsyncadd [#allocation20], %s595
          %s597 = sshll.u32 [#allocation21], 4
          %s598 = int_to_ptr.vmem [resolvable:$true] %s597
          %603 = dma.hbm_to_vmem [thread:$0]  %s15, 256, %s598, [#allocation20], 64, 64, 4
        $region24: #{itransformer_forward.3} parent=11 // pred_fallthru
          _
        // Predicated region
        $region25: #{itransformer_forward.3} parent=11 // pred_check
          %p604 = pneg %p476
        $region26: #{itransformer_forward.3} parent=11 // pred_check_branch
          %606 = sbr.rel (%p604) target = $region28
        $region27: #{itransformer_forward.3} parent=11 // pred_region
          %s608 = ssub.s32 16, 16
          %609 = vsyncadd [#allocation23], %s608
          %s611 = sshll.u32 [#allocation22], 4
          %s612 = int_to_ptr.vmem [resolvable:$true] %s611
          %614 = dma.hbm_to_vmem [thread:$0]  %s16, 16, %s612, [#allocation23]
        $region28: #{itransformer_forward.3} parent=11 // pred_fallthru
          _
      $region12: #{itransformer_forward.3} parent=5 // pred_fallthru
        _
      %p615 = scmp.lt.s32.totalorder %s42, 4
      // Predicated region
      $region29: #{itransformer_forward.3} parent=5 // pred_check
        %p616 = pneg %p615
      $region30: #{itransformer_forward.3} parent=5 // pred_check_branch
        %618 = sbr.rel (%p616) target = $region32
      $region31: #{itransformer_forward.3} parent=5 // pred_region
        // Predicated region
        $region33: #{itransformer_forward.3} parent=31 // pred_check
          %p619 = pneg %p74
        $region34: #{itransformer_forward.3} parent=31 // pred_check_branch
          %621 = sbr.rel (%p619) target = $region36
        $region35: #{itransformer_forward.3} parent=31 // pred_region
          %p622 = scmp.lt.s32.totalorder %s49, 1
          %s623 = scalar_select %p622, %s49, 1
          %s624 = smul.addr %s623, 4
          %s625 = scalar_lea.vmem %s0, %s624
        $region36: #{itransformer_forward.3} parent=31 // pred_fallthru
          _
        // Predicated region
        $region37: #{itransformer_forward.3} parent=31 // pred_check
          %p626 = pneg %p100
        $region38: #{itransformer_forward.3} parent=31 // pred_check_branch
          %628 = sbr.rel (%p626) target = $region40
        $region39: #{itransformer_forward.3} parent=31 // pred_region
          %p629 = scmp.lt.s32.totalorder %s50, 1
          %s630 = scalar_select %p629, %s50, 1
          %s631 = smul.addr %s630, 4
          %s632 = smul.addr %s631, 4
          %s633 = scalar_lea.vmem %s1, %s632
        $region40: #{itransformer_forward.3} parent=31 // pred_fallthru
          _
        // Predicated region
        $region41: #{itransformer_forward.3} parent=31 // pred_check
          %p634 = pneg %p126
        $region42: #{itransformer_forward.3} parent=31 // pred_check_branch
          %636 = sbr.rel (%p634) target = $region44
        $region43: #{itransformer_forward.3} parent=31 // pred_region
          %s637 = sand.u32 %s116, 1
          %s638 = scalar_lea.sflag [#allocation6], %s637
          %s639 = sand.u32 %s116, 1
          %s640 = scalar_lea.vmem [#allocation5], %s639
          %s642 = ssub.s32 16, 16
          %643 = vsyncadd %s638, %s642
          %s644 = smul.addr %s50, 16
          %s645 = scalar_lea.hbm %s2, %s644
          %s647 = sshll.u32 %s640, 4
          %s648 = int_to_ptr.vmem [resolvable:$true] %s647
          %650 = dma.hbm_to_vmem [thread:$0]  %s645, 16, %s648, %s638
        $region44: #{itransformer_forward.3} parent=31 // pred_fallthru
          _
        // Predicated region
        $region45: #{itransformer_forward.3} parent=31 // pred_check
          %p651 = pneg %p152
        $region46: #{itransformer_forward.3} parent=31 // pred_check_branch
          %653 = sbr.rel (%p651) target = $region48
        $region47: #{itransformer_forward.3} parent=31 // pred_region
          %p654 = scmp.lt.s32.totalorder %s50, 1
          %s655 = scalar_select %p654, %s50, 1
          %s656 = smul.addr %s655, 4
          %s657 = smul.addr %s656, 4
          %s658 = scalar_lea.vmem %s3, %s657
        $region48: #{itransformer_forward.3} parent=31 // pred_fallthru
          _
        // Predicated region
        $region49: #{itransformer_forward.3} parent=31 // pred_check
          %p659 = pneg %p178
        $region50: #{itransformer_forward.3} parent=31 // pred_check_branch
          %661 = sbr.rel (%p659) target = $region52
        $region51: #{itransformer_forward.3} parent=31 // pred_region
          %s662 = sand.u32 %s42, 1
          %s663 = scalar_lea.sflag [#allocation8], %s662
          %s664 = sand.u32 %s168, 1
          %s665 = scalar_lea.vmem [#allocation7], %s664
          %s667 = ssub.s32 16, 16
          %668 = vsyncadd %s663, %s667
          %s669 = smul.addr %s50, 16
          %s670 = scalar_lea.hbm %s4, %s669
          %s672 = sshll.u32 %s665, 4
          %s673 = int_to_ptr.vmem [resolvable:$true] %s672
          %675 = dma.hbm_to_vmem [thread:$0]  %s670, 16, %s673, %s663
        $region52: #{itransformer_forward.3} parent=31 // pred_fallthru
          _
        // Predicated region
        $region53: #{itransformer_forward.3} parent=31 // pred_check
          %p676 = pneg %p204
        $region54: #{itransformer_forward.3} parent=31 // pred_check_branch
          %678 = sbr.rel (%p676) target = $region56
        $region55: #{itransformer_forward.3} parent=31 // pred_region
          %p679 = scmp.lt.s32.totalorder %s50, 1
          %s680 = scalar_select %p679, %s50, 1
          %s681 = smul.addr %s680, 4
          %s682 = smul.addr %s681, 4
          %s683 = scalar_lea.vmem %s5, %s682
        $region56: #{itransformer_forward.3} parent=31 // pred_fallthru
          _
        // Predicated region
        $region57: #{itransformer_forward.3} parent=31 // pred_check
          %p684 = pneg %p230
        $region58: #{itransformer_forward.3} parent=31 // pred_check_branch
          %686 = sbr.rel (%p684) target = $region60
        $region59: #{itransformer_forward.3} parent=31 // pred_region
          %s687 = sand.u32 %s42, 1
          %s688 = scalar_lea.sflag [#allocation8], %s687
          %s689 = sand.u32 %s220, 1
          %s690 = scalar_lea.vmem [#allocation9], %s689
          %s692 = ssub.s32 16, 16
          %693 = vsyncadd %s688, %s692
          %s694 = smul.addr %s50, 16
          %s695 = scalar_lea.hbm %s6, %s694
          %s697 = sshll.u32 %s690, 4
          %s698 = int_to_ptr.vmem [resolvable:$true] %s697
          %700 = dma.hbm_to_vmem [thread:$0]  %s695, 16, %s698, %s688
        $region60: #{itransformer_forward.3} parent=31 // pred_fallthru
          _
        // Predicated region
        $region61: #{itransformer_forward.3} parent=31 // pred_check
          %p701 = pneg %p256
        $region62: #{itransformer_forward.3} parent=31 // pred_check_branch
          %703 = sbr.rel (%p701) target = $region64
        $region63: #{itransformer_forward.3} parent=31 // pred_region
          %p704 = scmp.lt.s32.totalorder %s50, 1
          %s705 = scalar_select %p704, %s50, 1
          %s706 = smul.addr %s705, 4
          %s707 = smul.addr %s706, 4
          %s708 = scalar_lea.vmem %s7, %s707
        $region64: #{itransformer_forward.3} parent=31 // pred_fallthru
          _
        // Predicated region
        $region65: #{itransformer_forward.3} parent=31 // pred_check
          %p709 = pneg %p282
        $region66: #{itransformer_forward.3} parent=31 // pred_check_branch
          %711 = sbr.rel (%p709) target = $region68
        $region67: #{itransformer_forward.3} parent=31 // pred_region
          %s712 = sand.u32 %s42, 1
          %s713 = scalar_lea.sflag [#allocation11], %s712
          %s714 = sand.u32 %s272, 1
          %s715 = scalar_lea.vmem [#allocation10], %s714
          %s717 = ssub.s32 16, 16
          %718 = vsyncadd %s713, %s717
          %s719 = smul.addr %s50, 16
          %s720 = scalar_lea.hbm %s8, %s719
          %s722 = sshll.u32 %s715, 4
          %s723 = int_to_ptr.vmem [resolvable:$true] %s722
          %725 = dma.hbm_to_vmem [thread:$0]  %s720, 16, %s723, %s713
        $region68: #{itransformer_forward.3} parent=31 // pred_fallthru
          _
        // Predicated region
        $region69: #{itransformer_forward.3} parent=31 // pred_check
          %p726 = pneg %p308
        $region70: #{itransformer_forward.3} parent=31 // pred_check_branch
          %728 = sbr.rel (%p726) target = $region72
        $region71: #{itransformer_forward.3} parent=31 // pred_region
          %s729 = sand.u32 %s42, 1
          %s730 = scalar_lea.sflag [#allocation11], %s729
          %s731 = sand.u32 %s298, 1
          %s732 = scalar_lea.vmem [#allocation12], %s731
          %s734 = ssub.s32 16, 16
          %735 = vsyncadd %s730, %s734
          %s736 = smul.addr %s50, 16
          %s737 = scalar_lea.hbm %s9, %s736
          %s739 = sshll.u32 %s732, 4
          %s740 = int_to_ptr.vmem [resolvable:$true] %s739
          %742 = dma.hbm_to_vmem [thread:$0]  %s737, 16, %s740, %s730
        $region72: #{itransformer_forward.3} parent=31 // pred_fallthru
          _
        // Predicated region
        $region73: #{itransformer_forward.3} parent=31 // pred_check
          %p743 = pneg %p334
        $region74: #{itransformer_forward.3} parent=31 // pred_check_branch
          %745 = sbr.rel (%p743) target = $region76
        $region75: #{itransformer_forward.3} parent=31 // pred_region
          %s746 = sand.u32 %s42, 1
          %s747 = scalar_lea.sflag [#allocation14], %s746
          %s748 = sand.u32 %s324, 1
          %s749 = scalar_lea.vmem [#allocation13], %s748
          %s751 = ssub.s32 16, 16
          %752 = vsyncadd %s747, %s751
          %s753 = smul.addr %s50, 16
          %s754 = scalar_lea.hbm %s10, %s753
          %s756 = sshll.u32 %s749, 4
          %s757 = int_to_ptr.vmem [resolvable:$true] %s756
          %759 = dma.hbm_to_vmem [thread:$0]  %s754, 16, %s757, %s747
        $region76: #{itransformer_forward.3} parent=31 // pred_fallthru
          _
        // Predicated region
        $region77: #{itransformer_forward.3} parent=31 // pred_check
          %p760 = pneg %p360
        $region78: #{itransformer_forward.3} parent=31 // pred_check_branch
          %762 = sbr.rel (%p760) target = $region80
        $region79: #{itransformer_forward.3} parent=31 // pred_region
          %s763 = sand.u32 %s42, 1
          %s764 = scalar_lea.sflag [#allocation14], %s763
          %s765 = sand.u32 %s350, 1
          %s766 = scalar_lea.vmem [#allocation15], %s765
          %s768 = ssub.s32 16, 16
          %769 = vsyncadd %s764, %s768
          %s770 = smul.addr %s50, 16
          %s771 = scalar_lea.hbm %s11, %s770
          %s773 = sshll.u32 %s766, 4
          %s774 = int_to_ptr.vmem [resolvable:$true] %s773
          %776 = dma.hbm_to_vmem [thread:$0]  %s771, 16, %s774, %s764
        $region80: #{itransformer_forward.3} parent=31 // pred_fallthru
          _
        // Predicated region
        $region81: #{itransformer_forward.3} parent=31 // pred_check
          %p777 = pneg %p386
        $region82: #{itransformer_forward.3} parent=31 // pred_check_branch
          %779 = sbr.rel (%p777) target = $region84
        $region83: #{itransformer_forward.3} parent=31 // pred_region
          %s780 = sand.u32 %s42, 1
          %s781 = scalar_lea.sflag [#allocation17], %s780
          %s782 = sand.u32 %s376, 1
          %s783 = scalar_lea.vmem [#allocation16], %s782
          %s785 = ssub.s32 16, 16
          %786 = vsyncadd %s781, %s785
          %s787 = smul.addr %s50, 16
          %s788 = scalar_lea.hbm %s12, %s787
          %s790 = sshll.u32 %s783, 4
          %s791 = int_to_ptr.vmem [resolvable:$true] %s790
          %793 = dma.hbm_to_vmem [thread:$0]  %s788, 16, %s791, %s781
        $region84: #{itransformer_forward.3} parent=31 // pred_fallthru
          _
        // Predicated region
        $region85: #{itransformer_forward.3} parent=31 // pred_check
          %p794 = pneg %p496
        $region86: #{itransformer_forward.3} parent=31 // pred_check_branch
          %796 = sbr.rel (%p794) target = $region88
        $region87: #{itransformer_forward.3} parent=31 // pred_region
          %p797 = scmp.lt.s32.totalorder %s49, 1
          %s798 = scalar_select %p797, %s49, 1
          %s799 = smul.addr %s798, 4
          %s800 = scalar_lea.vmem %s17, %s799
        $region88: #{itransformer_forward.3} parent=31 // pred_fallthru
          _
        // Predicated region
        $region89: #{itransformer_forward.3} parent=31 // pred_check
          %p801 = pneg %p522
        $region90: #{itransformer_forward.3} parent=31 // pred_check_branch
          %803 = sbr.rel (%p801) target = $region92
        $region91: #{itransformer_forward.3} parent=31 // pred_region
          %p804 = scmp.lt.s32.totalorder %s49, 1
          %s805 = scalar_select %p804, %s49, 1
          %s806 = smul.addr %s805, 4
          %s807 = scalar_lea.vmem %s18, %s806
        $region92: #{itransformer_forward.3} parent=31 // pred_fallthru
          _
      $region32: #{itransformer_forward.3} parent=5 // pred_fallthru
        _
      %p808 = scmp.le.s32.totalorder 1, %s42
      %p809 = scmp.lt.s32.totalorder %s42, 5
      %p810 = pnand %p808, %p809
      %p811 = pneg %p810
      // Predicated region
      $region93: #{itransformer_forward.3} parent=5 // pred_check
        _
      $region94: #{itransformer_forward.3} parent=5 // pred_check_branch
        %813 = sbr.rel (%p810) target = $region96
      $region95: #{itransformer_forward.3} parent=5 // pred_region
        %s814 = ssub.s32 %s42, 1
        %s815 = sand.u32 %s119, 1
        %s816 = scalar_lea.sflag [#allocation6], %s815
        %s817 = sand.u32 %s119, 1
        %s818 = scalar_lea.vmem [#allocation5], %s817
        // Predicated region
        $region97: #{itransformer_forward.3} parent=95 // pred_check
          %p819 = pneg %p132
        $region98: #{itransformer_forward.3} parent=95 // pred_check_branch
          %821 = sbr.rel (%p819) target = $region100
        $region99: #{itransformer_forward.3} parent=95 // pred_region
          %822 = dma.done %s816, 16
        $region100: #{itransformer_forward.3} parent=95 // pred_fallthru
          _
        %s823 = sand.u32 %s47, 1
        %s824 = scalar_lea.sflag [#allocation8], %s823
        %s825 = sand.u32 %s171, 1
        %s826 = scalar_lea.vmem [#allocation7], %s825
        // Predicated region
        $region101: #{itransformer_forward.3} parent=95 // pred_check
          %p827 = pneg %p184
        $region102: #{itransformer_forward.3} parent=95 // pred_check_branch
          %829 = sbr.rel (%p827) target = $region104
        $region103: #{itransformer_forward.3} parent=95 // pred_region
          %830 = dma.done %s824, 16
        $region104: #{itransformer_forward.3} parent=95 // pred_fallthru
          _
        %s831 = sand.u32 %s47, 1
        %s832 = scalar_lea.sflag [#allocation8], %s831
        %s833 = sand.u32 %s223, 1
        %s834 = scalar_lea.vmem [#allocation9], %s833
        // Predicated region
        $region105: #{itransformer_forward.3} parent=95 // pred_check
          %p835 = pneg %p236
        $region106: #{itransformer_forward.3} parent=95 // pred_check_branch
          %837 = sbr.rel (%p835) target = $region108
        $region107: #{itransformer_forward.3} parent=95 // pred_region
          %838 = dma.done %s832, 16
        $region108: #{itransformer_forward.3} parent=95 // pred_fallthru
          _
        %s839 = sand.u32 %s47, 1
        %s840 = scalar_lea.sflag [#allocation11], %s839
        %s841 = sand.u32 %s275, 1
        %s842 = scalar_lea.vmem [#allocation10], %s841
        // Predicated region
        $region109: #{itransformer_forward.3} parent=95 // pred_check
          %p843 = pneg %p288
        $region110: #{itransformer_forward.3} parent=95 // pred_check_branch
          %845 = sbr.rel (%p843) target = $region112
        $region111: #{itransformer_forward.3} parent=95 // pred_region
          %846 = dma.done %s840, 16
        $region112: #{itransformer_forward.3} parent=95 // pred_fallthru
          _
        %s847 = sand.u32 %s47, 1
        %s848 = scalar_lea.sflag [#allocation11], %s847
        %s849 = sand.u32 %s301, 1
        %s850 = scalar_lea.vmem [#allocation12], %s849
        // Predicated region
        $region113: #{itransformer_forward.3} parent=95 // pred_check
          %p851 = pneg %p314
        $region114: #{itransformer_forward.3} parent=95 // pred_check_branch
          %853 = sbr.rel (%p851) target = $region116
        $region115: #{itransformer_forward.3} parent=95 // pred_region
          %854 = dma.done %s848, 16
        $region116: #{itransformer_forward.3} parent=95 // pred_fallthru
          _
        %s855 = sand.u32 %s47, 1
        %s856 = scalar_lea.sflag [#allocation14], %s855
        %s857 = sand.u32 %s327, 1
        %s858 = scalar_lea.vmem [#allocation13], %s857
        // Predicated region
        $region117: #{itransformer_forward.3} parent=95 // pred_check
          %p859 = pneg %p340
        $region118: #{itransformer_forward.3} parent=95 // pred_check_branch
          %861 = sbr.rel (%p859) target = $region120
        $region119: #{itransformer_forward.3} parent=95 // pred_region
          %862 = dma.done %s856, 16
        $region120: #{itransformer_forward.3} parent=95 // pred_fallthru
          _
        %s863 = sand.u32 %s47, 1
        %s864 = scalar_lea.sflag [#allocation14], %s863
        %s865 = sand.u32 %s353, 1
        %s866 = scalar_lea.vmem [#allocation15], %s865
        // Predicated region
        $region121: #{itransformer_forward.3} parent=95 // pred_check
          %p867 = pneg %p366
        $region122: #{itransformer_forward.3} parent=95 // pred_check_branch
          %869 = sbr.rel (%p867) target = $region124
        $region123: #{itransformer_forward.3} parent=95 // pred_region
          %870 = dma.done %s864, 16
        $region124: #{itransformer_forward.3} parent=95 // pred_fallthru
          _
        %s871 = sand.u32 %s47, 1
        %s872 = scalar_lea.sflag [#allocation17], %s871
        %s873 = sand.u32 %s379, 1
        %s874 = scalar_lea.vmem [#allocation16], %s873
        // Predicated region
        $region125: #{itransformer_forward.3} parent=95 // pred_check
          %p875 = pneg %p392
        $region126: #{itransformer_forward.3} parent=95 // pred_check_branch
          %877 = sbr.rel (%p875) target = $region128
        $region127: #{itransformer_forward.3} parent=95 // pred_region
          %878 = dma.done %s872, 16
        $region128: #{itransformer_forward.3} parent=95 // pred_fallthru
          _
        // Predicated region
        $region129: #{itransformer_forward.3} parent=95 // pred_check
          %p879 = pneg %p413
        $region130: #{itransformer_forward.3} parent=95 // pred_check_branch
          %881 = sbr.rel (%p879) target = $region132
        $region131: #{itransformer_forward.3} parent=95 // pred_region
          %882 = dma.done [#allocation17], 16
        $region132: #{itransformer_forward.3} parent=95 // pred_fallthru
          _
        // Predicated region
        $region133: #{itransformer_forward.3} parent=95 // pred_check
          %p883 = pneg %p434
        $region134: #{itransformer_forward.3} parent=95 // pred_check_branch
          %885 = sbr.rel (%p883) target = $region136
        $region135: #{itransformer_forward.3} parent=95 // pred_region
          %886 = dma.done [#allocation20], 16
        $region136: #{itransformer_forward.3} parent=95 // pred_fallthru
          _
        // Predicated region
        $region137: #{itransformer_forward.3} parent=95 // pred_check
          %p887 = pneg %p455
        $region138: #{itransformer_forward.3} parent=95 // pred_check_branch
          %889 = sbr.rel (%p887) target = $region140
        $region139: #{itransformer_forward.3} parent=95 // pred_region
          %890 = dma.done [#allocation20], 256
        $region140: #{itransformer_forward.3} parent=95 // pred_fallthru
          _
        // Predicated region
        $region141: #{itransformer_forward.3} parent=95 // pred_check
          %p891 = pneg %p476
        $region142: #{itransformer_forward.3} parent=95 // pred_check_branch
          %893 = sbr.rel (%p891) target = $region144
        $region143: #{itransformer_forward.3} parent=95 // pred_region
          %894 = dma.done [#allocation23], 16
        $region144: #{itransformer_forward.3} parent=95 // pred_fallthru
          _
        %p895 = scmp.lt.s32.totalorder %s51, 1
        %s896 = scalar_select %p895, %s51, 1
        %s897 = smul.addr %s896, 4
        %s898 = scalar_lea.vmem %s0, %s897
        %p899 = pneg %p80
        %p900 = pneg %p77
        %p901 = scmp.lt.s32.totalorder %s52, 1
        %s902 = scalar_select %p901, %s52, 1
        %s903 = smul.addr %s902, 4
        %s904 = smul.addr %s903, 4
        %s905 = scalar_lea.vmem %s1, %s904
        %p906 = pneg %p106
        %p907 = pneg %p103
        %s908 = sand.u32 %s119, 1
        %s909 = scalar_lea.sflag [#allocation6], %s908
        %s910 = sand.u32 %s119, 1
        %s911 = scalar_lea.vmem [#allocation5], %s910
        %p912 = pneg %p132
        %p913 = pneg %p129
        %p914 = scmp.lt.s32.totalorder %s52, 1
        %s915 = scalar_select %p914, %s52, 1
        %s916 = smul.addr %s915, 4
        %s917 = smul.addr %s916, 4
        %s918 = scalar_lea.vmem %s3, %s917
        %p919 = pneg %p158
        %p920 = pneg %p155
        %s921 = sand.u32 %s47, 1
        %s922 = scalar_lea.sflag [#allocation8], %s921
        %s923 = sand.u32 %s171, 1
        %s924 = scalar_lea.vmem [#allocation7], %s923
        %p925 = pneg %p184
        %p926 = pneg %p181
        %p927 = scmp.lt.s32.totalorder %s52, 1
        %s928 = scalar_select %p927, %s52, 1
        %s929 = smul.addr %s928, 4
        %s930 = smul.addr %s929, 4
        %s931 = scalar_lea.vmem %s5, %s930
        %p932 = pneg %p210
        %p933 = pneg %p207
        %s934 = sand.u32 %s47, 1
        %s935 = scalar_lea.sflag [#allocation8], %s934
        %s936 = sand.u32 %s223, 1
        %s937 = scalar_lea.vmem [#allocation9], %s936
        %p938 = pneg %p236
        %p939 = pneg %p233
        %p940 = scmp.lt.s32.totalorder %s52, 1
        %s941 = scalar_select %p940, %s52, 1
        %s942 = smul.addr %s941, 4
        %s943 = smul.addr %s942, 4
        %s944 = scalar_lea.vmem %s7, %s943
        %p945 = pneg %p262
        %p946 = pneg %p259
        %s947 = sand.u32 %s47, 1
        %s948 = scalar_lea.sflag [#allocation11], %s947
        %s949 = sand.u32 %s275, 1
        %s950 = scalar_lea.vmem [#allocation10], %s949
        %p951 = pneg %p288
        %p952 = pneg %p285
        %s953 = sand.u32 %s47, 1
        %s954 = scalar_lea.sflag [#allocation11], %s953
        %s955 = sand.u32 %s301, 1
        %s956 = scalar_lea.vmem [#allocation12], %s955
        %p957 = pneg %p314
        %p958 = pneg %p311
        %s959 = sand.u32 %s47, 1
        %s960 = scalar_lea.sflag [#allocation14], %s959
        %s961 = sand.u32 %s327, 1
        %s962 = scalar_lea.vmem [#allocation13], %s961
        %p963 = pneg %p340
        %p964 = pneg %p337
        %s965 = sand.u32 %s47, 1
        %s966 = scalar_lea.sflag [#allocation14], %s965
        %s967 = sand.u32 %s353, 1
        %s968 = scalar_lea.vmem [#allocation15], %s967
        %p969 = pneg %p366
        %p970 = pneg %p363
        %s971 = sand.u32 %s47, 1
        %s972 = scalar_lea.sflag [#allocation17], %s971
        %s973 = sand.u32 %s379, 1
        %s974 = scalar_lea.vmem [#allocation16], %s973
        %p975 = pneg %p392
        %p976 = pneg %p389
        %p977 = pneg %p413
        %p978 = pneg %p410
        %p979 = pneg %p434
        %p980 = pneg %p431
        %p981 = pneg %p455
        %p982 = pneg %p452
        %p983 = pneg %p476
        %p984 = pneg %p473
        %p985 = scmp.lt.s32.totalorder %s51, 1
        %s986 = scalar_select %p985, %s51, 1
        %s987 = smul.addr %s986, 4
        %s988 = scalar_lea.vmem %s17, %s987
        %p989 = pneg %p502
        %p990 = pneg %p499
        %p991 = scmp.lt.s32.totalorder %s51, 1
        %s992 = scalar_select %p991, %s51, 1
        %s993 = smul.addr %s992, 4
        %s994 = scalar_lea.vmem %s18, %s993
        %p995 = pneg %p528
        %p996 = pneg %p525
        %p997 = pneg %p554
        %p998 = pneg %p551
        %p999 = scmp.lt.s32.totalorder %s51, 1
        %s1000 = scalar_select %p999, %s51, 1
        %s1001 = smul.addr %s1000, 4
        %s1002 = scalar_lea.vmem %s19, %s1001
        %p1003 = scmp.lt.s32.totalorder %s51, 1
        %s1004 = scalar_select %p1003, %s51, 1
        %s1005 = smul.addr %s1004, 4
        %s1006 = scalar_lea.vmem %s0, %s1005
        %p1007 = scmp.lt.s32.totalorder %s52, 1
        %s1008 = scalar_select %p1007, %s52, 1
        %s1009 = smul.addr %s1008, 4
        %s1010 = smul.addr %s1009, 4
        %s1011 = scalar_lea.vmem %s1, %s1010
        %p1012 = scmp.lt.s32.totalorder %s52, 1
        %s1013 = scalar_select %p1012, %s52, 1
        %s1014 = smul.addr %s1013, 4
        %s1015 = smul.addr %s1014, 4
        %s1016 = scalar_lea.vmem %s3, %s1015
        %p1017 = scmp.lt.s32.totalorder %s52, 1
        %s1018 = scalar_select %p1017, %s52, 1
        %s1019 = smul.addr %s1018, 4
        %s1020 = smul.addr %s1019, 4
        %s1021 = scalar_lea.vmem %s5, %s1020
        %p1022 = scmp.lt.s32.totalorder %s52, 1
        %s1023 = scalar_select %p1022, %s52, 1
        %s1024 = smul.addr %s1023, 4
        %s1025 = smul.addr %s1024, 4
        %s1026 = scalar_lea.vmem %s7, %s1025
        %p1027 = scmp.lt.s32.totalorder %s51, 1
        %s1028 = scalar_select %p1027, %s51, 1
        %s1029 = smul.addr %s1028, 4
        %s1030 = scalar_lea.vmem %s17, %s1029
        %p1031 = scmp.lt.s32.totalorder %s51, 1
        %s1032 = scalar_select %p1031, %s51, 1
        %s1033 = smul.addr %s1032, 4
        %s1034 = scalar_lea.vmem %s18, %s1033
        %p1035 = scmp.lt.s32.totalorder %s51, 1
        %s1036 = scalar_select %p1035, %s51, 1
        %s1037 = smul.addr %s1036, 4
        %s1038 = scalar_lea.vmem %s19, %s1037
        %p1040 = scmp.eq.s32.totalorder %s52, 0
        // Predicated region
        $region145: #{itransformer_forward.3} parent=95 // pred_check
          %p1041 = pneg %p1040
        $region146: #{itransformer_forward.3} parent=95 // pred_check_branch
          %1043 = sbr.rel (%p1041) target = $region148
        $region147: #{itransformer_forward.3} parent=95 // pred_region
          %v1044 = vld [vmem:[%s1006] sm:$0xf]
          %vm1045 = vcmask 257024
          %1046 = vst.msk [vmem:[#allocation2] sm:$0xf] %vm1045, %v1044
        $region148: #{itransformer_forward.3} parent=95 // pred_fallthru
          _
        %v1047 = vld [vmem:[#allocation2] sm:$0xf]
        %v1048 = vpack.c.bf16 %v1047, %v1047
        %v1049 = vld [vmem:[%s1011] sm:$0xf]
        %v1050 = vld [vmem:[%s1011 + $0x4] sm:$0xf]
        %v1051 = vld [vmem:[%s1011 + $0x8] sm:$0xf]
        %v1052 = vld [vmem:[%s1011 + $0xc] sm:$0xf]
        %v1053 = vld [vmem:[%s818] sm:$0x1]
        %v1055 = vlaneseq
        %v1056 = vshrl.u32 %v1055, 7
        %v1057 = vsub.s32 0, %v1056
        %v1058 = vrot.slane %v1053, %v1057
        %v1064 = vunpack.c.l.b16 %v1049
        %v1065 = vunpack.c.l.b16 %v1050
        %v1066 = vunpack.c.l.b16 %v1051
        %v1067 = vunpack.c.l.b16 %v1052
        %v1068 = vpack.c.b16 %v1065, %v1064
        %v1069 = vpack.c.b16 %v1067, %v1066
        %vm1072 = vcmask 261120
        %v1074 = vsel %vm1072, %v1048, 0
        %1076 = vmatprep.subr.bf16.mxu0 0
        %1077 = vmatpush1.bf16.msra.mxu0 0
        %1078 = vmatprep.subr.bf16.mxu0 0
        %1079 = vmatpush1.bf16.msra.mxu0 0
        %1080 = vmatprep.subr.bf16.mxu0 0
        %1081 = vmatpush1.bf16.msra.mxu0 0
        %1082 = vmatprep.subr.bf16.mxu0 0
        %1083 = vmatpush1.bf16.msra.mxu0 0
        %1084 = vmatprep.subr.bf16.mxu0 0
        %1085 = vmatpush1.bf16.msra.mxu0 0
        %1086 = vmatprep.subr.bf16.mxu0 0
        %1087 = vmatpush1.bf16.msra.mxu0 0
        %1088 = vmatprep.subr.bf16.mxu0 0
        %1089 = vmatpush1.bf16.msra.mxu0 %v1069
        %1090 = vmatprep.subr.bf16.mxu0 0
        %1091 = vmatpush1.bf16.msra.mxu0 %v1068
        %1092 = vmatprep.subr.bf16.mxu0 0
        %1093 = vmatpush2.bf16.msra.mxu0 0
        %1094 = vmatprep.subr.bf16.mxu0 0
        %1095 = vmatpush2.bf16.msra.mxu0 0
        %1096 = vmatprep.subr.bf16.mxu0 0
        %1097 = vmatpush2.bf16.msra.mxu0 0
        %1098 = vmatprep.subr.bf16.mxu0 0
        %1099 = vmatpush2.bf16.msra.mxu0 0
        %1100 = vmatprep.subr.bf16.mxu0 0
        %1101 = vmatpush2.bf16.msra.mxu0 0
        %1102 = vmatprep.subr.bf16.mxu0 0
        %1103 = vmatpush2.bf16.msra.mxu0 0
        %1104 = vmatprep.subr.bf16.mxu0 0
        %1105 = vmatpush2.bf16.msra.mxu0 0
        %1106 = vmatprep.subr.bf16.mxu0 0
        %1107 = vmatpush2.bf16.msra.mxu0 0
        %1108 = vmatprep.mubr.bf16.mxu0 0
        %1109 = vmatmul.mubr.bf16.gmra.mxu0 %v1074
        %v1110 = vpop.f32.mrf.mxu0
        %v1111 = vadd.f32 %v1058, %v1110
        %v1112 = vpop.f32.mrf.mxu0
        %v1113 = vpop.f32.mrf.mxu0
        %v1114 = vpop.f32.mrf.mxu0
        %1115 = vdwg.mxu0
        %vm1116 = vcmask 781312
        %1117 = vst.msk [vmem:[#allocation3] sm:$0xf] %vm1116, %v1111
        %v1118 = vld [vmem:[#allocation3] sm:$0xf]
        %v1119 = vpack.c.bf16 %v1118, %v1118
        %1121 = vrot.lane.b32.xlu0 %v1119, 96
        %v1122 = vpop.permute.xlu0 %1121
        %vm1123 = vcmask 64512
        %v1125 = vsel %vm1123, %v1119, 0
        %v1128 = vsel %vm1123, %v1122, 0
        %1130 = vmatprep.subr.bf16.mxu0 0
        %1131 = vmatpush1.bf16.xpose.msra.mxu0 0
        %1132 = vmatprep.subr.bf16.mxu0 0
        %1133 = vmatpush1.bf16.xpose.msra.mxu0 0
        %1134 = vmatprep.subr.bf16.mxu0 0
        %1135 = vmatpush1.bf16.xpose.msra.mxu0 0
        %1136 = vmatprep.subr.bf16.mxu0 0
        %1137 = vmatpush1.bf16.xpose.msra.mxu0 0
        %1138 = vmatprep.subr.bf16.mxu0 0
        %1139 = vmatpush1.bf16.xpose.msra.mxu0 0
        %1140 = vmatprep.subr.bf16.mxu0 0
        %1141 = vmatpush1.bf16.xpose.msra.mxu0 0
        %1142 = vmatprep.subr.bf16.mxu0 0
        %1143 = vmatpush1.bf16.xpose.msra.mxu0 0
        %1144 = vmatprep.subr.bf16.mxu0 0
        %1145 = vmatpush1.bf16.xpose.msra.mxu0 %v1128
        %1146 = vmatprep.subr.bf16.mxu0 0
        %1147 = vmatpush2.bf16.xpose.msra.mxu0 0
        %1148 = vmatprep.subr.bf16.mxu0 0
        %1149 = vmatpush2.bf16.xpose.msra.mxu0 0
        %1150 = vmatprep.subr.bf16.mxu0 0
        %1151 = vmatpush2.bf16.xpose.msra.mxu0 0
        %1152 = vmatprep.subr.bf16.mxu0 0
        %1153 = vmatpush2.bf16.xpose.msra.mxu0 0
        %1154 = vmatprep.subr.bf16.mxu0 0
        %1155 = vmatpush2.bf16.xpose.msra.mxu0 0
        %1156 = vmatprep.subr.bf16.mxu0 0
        %1157 = vmatpush2.bf16.xpose.msra.mxu0 0
        %1158 = vmatprep.subr.bf16.mxu0 0
        %1159 = vmatpush2.bf16.xpose.msra.mxu0 0
        %1160 = vmatprep.subr.bf16.mxu0 0
        %1161 = vmatpush2.bf16.xpose.msra.mxu0 0
        %1162 = vmatprep.mubr.bf16.mxu0 0
        %1163 = vmatmul.mubr.bf16.gmra.mxu0 %v1125
        %v1164 = vpop.f32.mrf.mxu0
        %v1165 = vadd.f32 0.0, %v1164
        %v1166 = vpop.f32.mrf.mxu0
        %v1167 = vpop.f32.mrf.mxu0
        %v1168 = vpop.f32.mrf.mxu0
        %1169 = vdwg.mxu0
        %vm1170 = vcmask 27648
        %v1171 = vsel %vm1170, %v1165, -inf
        %1172 = vmax.xlane.f32.xlu0 %v1171
        %v1173 = vpop.xlane.xlu0 %1172
        %v1174 = vsub.f32 %v1165, %v1173
        %v1175 = vmul.f32 %v1174, 1.442695
        %v1176 = vpow.pop %v1175
        %v1177 = vsel %vm1170, %v1176, 0.0
        %1178 = vadd.xlane.f32.xlu0 %v1177
        %v1179 = vpop.xlane.xlu0 %1178
        %v1180 = vrcp.pop %v1179
        %v1181 = vmul.f32 %v1176, %v1180
        %v1182 = vpack.c.bf16 %v1181, %v1181
        %1183 = vrot.lane.b32.xlu0 %v1119, 64
        %v1184 = vpop.permute.xlu0 %1183
        %vm1185 = vcmask 31744
        %v1187 = vsel %vm1185, %v1182, 0
        %vm1189 = vcmask 1041408
        %v1191 = vsel %vm1189, %v1184, 0
        %1193 = vmatprep.subr.bf16.mxu0 0
        %1194 = vmatpush1.bf16.msra.mxu0 0
        %1195 = vmatprep.subr.bf16.mxu0 0
        %1196 = vmatpush1.bf16.msra.mxu0 0
        %1197 = vmatprep.subr.bf16.mxu0 0
        %1198 = vmatpush1.bf16.msra.mxu0 0
        %1199 = vmatprep.subr.bf16.mxu0 0
        %1200 = vmatpush1.bf16.msra.mxu0 0
        %1201 = vmatprep.subr.bf16.mxu0 0
        %1202 = vmatpush1.bf16.msra.mxu0 0
        %1203 = vmatprep.subr.bf16.mxu0 0
        %1204 = vmatpush1.bf16.msra.mxu0 0
        %1205 = vmatprep.subr.bf16.mxu0 0
        %1206 = vmatpush1.bf16.msra.mxu0 0
        %1207 = vmatprep.subr.bf16.mxu0 0
        %1208 = vmatpush1.bf16.msra.mxu0 %v1191
        %1209 = vmatprep.subr.bf16.mxu0 0
        %1210 = vmatpush2.bf16.msra.mxu0 0
        %1211 = vmatprep.subr.bf16.mxu0 0
        %1212 = vmatpush2.bf16.msra.mxu0 0
        %1213 = vmatprep.subr.bf16.mxu0 0
        %1214 = vmatpush2.bf16.msra.mxu0 0
        %1215 = vmatprep.subr.bf16.mxu0 0
        %1216 = vmatpush2.bf16.msra.mxu0 0
        %1217 = vmatprep.subr.bf16.mxu0 0
        %1218 = vmatpush2.bf16.msra.mxu0 0
        %1219 = vmatprep.subr.bf16.mxu0 0
        %1220 = vmatpush2.bf16.msra.mxu0 0
        %1221 = vmatprep.subr.bf16.mxu0 0
        %1222 = vmatpush2.bf16.msra.mxu0 0
        %1223 = vmatprep.subr.bf16.mxu0 0
        %1224 = vmatpush2.bf16.msra.mxu0 0
        %1225 = vmatprep.mubr.bf16.mxu0 0
        %1226 = vmatmul.mubr.bf16.gmra.mxu0 %v1187
        %v1227 = vpop.f32.mrf.mxu0
        %v1228 = vadd.f32 0.0, %v1227
        %v1229 = vpop.f32.mrf.mxu0
        %v1230 = vpop.f32.mrf.mxu0
        %v1231 = vpop.f32.mrf.mxu0
        %1232 = vdwg.mxu0
        %vm1233 = vcmask 60416
        %1234 = vst.msk [vmem:[#allocation4] sm:$0xf] %vm1233, %v1228
        %v1235 = vld [vmem:[#allocation3] sm:$0xf]
        %v1236 = vpack.c.bf16 %v1235, %v1235
        %1238 = vrot.lane.b32.xlu0 %v1236, 120
        %v1239 = vpop.permute.xlu0 %1238
        %1240 = vrot.lane.b32.xlu0 %v1236, 88
        %v1241 = vpop.permute.xlu0 %1240
        %v1243 = vsel %vm1123, %v1239, 0
        %v1246 = vsel %vm1123, %v1241, 0
        %1248 = vmatprep.subr.bf16.mxu0 0
        %1249 = vmatpush1.bf16.xpose.msra.mxu0 0
        %1250 = vmatprep.subr.bf16.mxu0 0
        %1251 = vmatpush1.bf16.xpose.msra.mxu0 0
        %1252 = vmatprep.subr.bf16.mxu0 0
        %1253 = vmatpush1.bf16.xpose.msra.mxu0 0
        %1254 = vmatprep.subr.bf16.mxu0 0
        %1255 = vmatpush1.bf16.xpose.msra.mxu0 0
        %1256 = vmatprep.subr.bf16.mxu0 0
        %1257 = vmatpush1.bf16.xpose.msra.mxu0 0
        %1258 = vmatprep.subr.bf16.mxu0 0
        %1259 = vmatpush1.bf16.xpose.msra.mxu0 0
        %1260 = vmatprep.subr.bf16.mxu0 0
        %1261 = vmatpush1.bf16.xpose.msra.mxu0 0
        %1262 = vmatprep.subr.bf16.mxu0 0
        %1263 = vmatpush1.bf16.xpose.msra.mxu0 %v1246
        %1264 = vmatprep.subr.bf16.mxu0 0
        %1265 = vmatpush2.bf16.xpose.msra.mxu0 0
        %1266 = vmatprep.subr.bf16.mxu0 0
        %1267 = vmatpush2.bf16.xpose.msra.mxu0 0
        %1268 = vmatprep.subr.bf16.mxu0 0
        %1269 = vmatpush2.bf16.xpose.msra.mxu0 0
        %1270 = vmatprep.subr.bf16.mxu0 0
        %1271 = vmatpush2.bf16.xpose.msra.mxu0 0
        %1272 = vmatprep.subr.bf16.mxu0 0
        %1273 = vmatpush2.bf16.xpose.msra.mxu0 0
        %1274 = vmatprep.subr.bf16.mxu0 0
        %1275 = vmatpush2.bf16.xpose.msra.mxu0 0
        %1276 = vmatprep.subr.bf16.mxu0 0
        %1277 = vmatpush2.bf16.xpose.msra.mxu0 0
        %1278 = vmatprep.subr.bf16.mxu0 0
        %1279 = vmatpush2.bf16.xpose.msra.mxu0 0
        %1280 = vmatprep.mubr.bf16.mxu0 0
        %1281 = vmatmul.mubr.bf16.gmra.mxu0 %v1243
        %v1282 = vpop.f32.mrf.mxu0
        %v1283 = vadd.f32 0.0, %v1282
        %v1284 = vpop.f32.mrf.mxu0
        %v1285 = vpop.f32.mrf.mxu0
        %v1286 = vpop.f32.mrf.mxu0
        %1287 = vdwg.mxu0
        %v1288 = vsel %vm1170, %v1283, -inf
        %1289 = vmax.xlane.f32.xlu0 %v1288
        %v1290 = vpop.xlane.xlu0 %1289
        %v1291 = vsub.f32 %v1283, %v1290
        %v1292 = vmul.f32 %v1291, 1.442695
        %v1293 = vpow.pop %v1292
        %v1294 = vsel %vm1170, %v1293, 0.0
        %1295 = vadd.xlane.f32.xlu0 %v1294
        %v1296 = vpop.xlane.xlu0 %1295
        %v1297 = vrcp.pop %v1296
        %v1298 = vmul.f32 %v1293, %v1297
        %v1299 = vpack.c.bf16 %v1298, %v1298
        %1300 = vrot.lane.b32.xlu0 %v1236, 56
        %v1301 = vpop.permute.xlu0 %1300
        %v1303 = vsel %vm1185, %v1299, 0
        %v1306 = vsel %vm1189, %v1301, 0
        %1308 = vmatprep.subr.bf16.mxu0 0
        %1309 = vmatpush1.bf16.msra.mxu0 0
        %1310 = vmatprep.subr.bf16.mxu0 0
        %1311 = vmatpush1.bf16.msra.mxu0 0
        %1312 = vmatprep.subr.bf16.mxu0 0
        %1313 = vmatpush1.bf16.msra.mxu0 0
        %1314 = vmatprep.subr.bf16.mxu0 0
        %1315 = vmatpush1.bf16.msra.mxu0 0
        %1316 = vmatprep.subr.bf16.mxu0 0
        %1317 = vmatpush1.bf16.msra.mxu0 0
        %1318 = vmatprep.subr.bf16.mxu0 0
        %1319 = vmatpush1.bf16.msra.mxu0 0
        %1320 = vmatprep.subr.bf16.mxu0 0
        %1321 = vmatpush1.bf16.msra.mxu0 0
        %1322 = vmatprep.subr.bf16.mxu0 0
        %1323 = vmatpush1.bf16.msra.mxu0 %v1306
        %1324 = vmatprep.subr.bf16.mxu0 0
        %1325 = vmatpush2.bf16.msra.mxu0 0
        %1326 = vmatprep.subr.bf16.mxu0 0
        %1327 = vmatpush2.bf16.msra.mxu0 0
        %1328 = vmatprep.subr.bf16.mxu0 0
        %1329 = vmatpush2.bf16.msra.mxu0 0
        %1330 = vmatprep.subr.bf16.mxu0 0
        %1331 = vmatpush2.bf16.msra.mxu0 0
        %1332 = vmatprep.subr.bf16.mxu0 0
        %1333 = vmatpush2.bf16.msra.mxu0 0
        %1334 = vmatprep.subr.bf16.mxu0 0
        %1335 = vmatpush2.bf16.msra.mxu0 0
        %1336 = vmatprep.subr.bf16.mxu0 0
        %1337 = vmatpush2.bf16.msra.mxu0 0
        %1338 = vmatprep.subr.bf16.mxu0 0
        %1339 = vmatpush2.bf16.msra.mxu0 0
        %1340 = vmatprep.mubr.bf16.mxu0 0
        %1341 = vmatmul.mubr.bf16.gmra.mxu0 %v1303
        %v1342 = vpop.f32.mrf.mxu0
        %v1343 = vadd.f32 0.0, %v1342
        %v1344 = vpop.f32.mrf.mxu0
        %v1345 = vpop.f32.mrf.mxu0
        %v1346 = vpop.f32.mrf.mxu0
        %1347 = vdwg.mxu0
        %1349 = vrot.lane.b32.xlu0 %v1343, 8
        %v1350 = vpop.permute.xlu0 %1349
        %vm1352 = vcmask 126016
        %1353 = vst.msk [vmem:[#allocation4] sm:$0xf] %vm1352, %v1350
        %v1354 = vld [vmem:[#allocation3] sm:$0xf]
        %v1355 = vpack.c.bf16 %v1354, %v1354
        %1357 = vrot.lane.b32.xlu0 %v1355, 112
        %v1358 = vpop.permute.xlu0 %1357
        %1359 = vrot.lane.b32.xlu0 %v1355, 80
        %v1360 = vpop.permute.xlu0 %1359
        %v1362 = vsel %vm1123, %v1358, 0
        %v1365 = vsel %vm1123, %v1360, 0
        %1367 = vmatprep.subr.bf16.mxu0 0
        %1368 = vmatpush1.bf16.xpose.msra.mxu0 0
        %1369 = vmatprep.subr.bf16.mxu0 0
        %1370 = vmatpush1.bf16.xpose.msra.mxu0 0
        %1371 = vmatprep.subr.bf16.mxu0 0
        %1372 = vmatpush1.bf16.xpose.msra.mxu0 0
        %1373 = vmatprep.subr.bf16.mxu0 0
        %1374 = vmatpush1.bf16.xpose.msra.mxu0 0
        %1375 = vmatprep.subr.bf16.mxu0 0
        %1376 = vmatpush1.bf16.xpose.msra.mxu0 0
        %1377 = vmatprep.subr.bf16.mxu0 0
        %1378 = vmatpush1.bf16.xpose.msra.mxu0 0
        %1379 = vmatprep.subr.bf16.mxu0 0
        %1380 = vmatpush1.bf16.xpose.msra.mxu0 0
        %1381 = vmatprep.subr.bf16.mxu0 0
        %1382 = vmatpush1.bf16.xpose.msra.mxu0 %v1365
        %1383 = vmatprep.subr.bf16.mxu0 0
        %1384 = vmatpush2.bf16.xpose.msra.mxu0 0
        %1385 = vmatprep.subr.bf16.mxu0 0
        %1386 = vmatpush2.bf16.xpose.msra.mxu0 0
        %1387 = vmatprep.subr.bf16.mxu0 0
        %1388 = vmatpush2.bf16.xpose.msra.mxu0 0
        %1389 = vmatprep.subr.bf16.mxu0 0
        %1390 = vmatpush2.bf16.xpose.msra.mxu0 0
        %1391 = vmatprep.subr.bf16.mxu0 0
        %1392 = vmatpush2.bf16.xpose.msra.mxu0 0
        %1393 = vmatprep.subr.bf16.mxu0 0
        %1394 = vmatpush2.bf16.xpose.msra.mxu0 0
        %1395 = vmatprep.subr.bf16.mxu0 0
        %1396 = vmatpush2.bf16.xpose.msra.mxu0 0
        %1397 = vmatprep.subr.bf16.mxu0 0
        %1398 = vmatpush2.bf16.xpose.msra.mxu0 0
        %1399 = vmatprep.mubr.bf16.mxu0 0
        %1400 = vmatmul.mubr.bf16.gmra.mxu0 %v1362
        %v1401 = vpop.f32.mrf.mxu0
        %v1402 = vadd.f32 0.0, %v1401
        %v1403 = vpop.f32.mrf.mxu0
        %v1404 = vpop.f32.mrf.mxu0
        %v1405 = vpop.f32.mrf.mxu0
        %1406 = vdwg.mxu0
        %v1407 = vsel %vm1170, %v1402, -inf
        %1408 = vmax.xlane.f32.xlu0 %v1407
        %v1409 = vpop.xlane.xlu0 %1408
        %v1410 = vsub.f32 %v1402, %v1409
        %v1411 = vmul.f32 %v1410, 1.442695
        %v1412 = vpow.pop %v1411
        %v1413 = vsel %vm1170, %v1412, 0.0
        %1414 = vadd.xlane.f32.xlu0 %v1413
        %v1415 = vpop.xlane.xlu0 %1414
        %v1416 = vrcp.pop %v1415
        %v1417 = vmul.f32 %v1412, %v1416
        %v1418 = vpack.c.bf16 %v1417, %v1417
        %1419 = vrot.lane.b32.xlu0 %v1355, 48
        %v1420 = vpop.permute.xlu0 %1419
        %v1422 = vsel %vm1185, %v1418, 0
        %v1425 = vsel %vm1189, %v1420, 0
        %1427 = vmatprep.subr.bf16.mxu0 0
        %1428 = vmatpush1.bf16.msra.mxu0 0
        %1429 = vmatprep.subr.bf16.mxu0 0
        %1430 = vmatpush1.bf16.msra.mxu0 0
        %1431 = vmatprep.subr.bf16.mxu0 0
        %1432 = vmatpush1.bf16.msra.mxu0 0
        %1433 = vmatprep.subr.bf16.mxu0 0
        %1434 = vmatpush1.bf16.msra.mxu0 0
        %1435 = vmatprep.subr.bf16.mxu0 0
        %1436 = vmatpush1.bf16.msra.mxu0 0
        %1437 = vmatprep.subr.bf16.mxu0 0
        %1438 = vmatpush1.bf16.msra.mxu0 0
        %1439 = vmatprep.subr.bf16.mxu0 0
        %1440 = vmatpush1.bf16.msra.mxu0 0
        %1441 = vmatprep.subr.bf16.mxu0 0
        %1442 = vmatpush1.bf16.msra.mxu0 %v1425
        %1443 = vmatprep.subr.bf16.mxu0 0
        %1444 = vmatpush2.bf16.msra.mxu0 0
        %1445 = vmatprep.subr.bf16.mxu0 0
        %1446 = vmatpush2.bf16.msra.mxu0 0
        %1447 = vmatprep.subr.bf16.mxu0 0
        %1448 = vmatpush2.bf16.msra.mxu0 0
        %1449 = vmatprep.subr.bf16.mxu0 0
        %1450 = vmatpush2.bf16.msra.mxu0 0
        %1451 = vmatprep.subr.bf16.mxu0 0
        %1452 = vmatpush2.bf16.msra.mxu0 0
        %1453 = vmatprep.subr.bf16.mxu0 0
        %1454 = vmatpush2.bf16.msra.mxu0 0
        %1455 = vmatprep.subr.bf16.mxu0 0
        %1456 = vmatpush2.bf16.msra.mxu0 0
        %1457 = vmatprep.subr.bf16.mxu0 0
        %1458 = vmatpush2.bf16.msra.mxu0 0
        %1459 = vmatprep.mubr.bf16.mxu0 0
        %1460 = vmatmul.mubr.bf16.gmra.mxu0 %v1422
        %v1461 = vpop.f32.mrf.mxu0
        %v1462 = vadd.f32 0.0, %v1461
        %v1463 = vpop.f32.mrf.mxu0
        %v1464 = vpop.f32.mrf.mxu0
        %v1465 = vpop.f32.mrf.mxu0
        %1466 = vdwg.mxu0
        %1468 = vrot.lane.b32.xlu0 %v1462, 16
        %v1469 = vpop.permute.xlu0 %1468
        %vm1471 = vcmask 191616
        %1472 = vst.msk [vmem:[#allocation4] sm:$0xf] %vm1471, %v1469
        %v1473 = vld [vmem:[#allocation3] sm:$0xf]
        %v1474 = vpack.c.bf16 %v1473, %v1473
        %1476 = vrot.lane.b32.xlu0 %v1474, 104
        %v1477 = vpop.permute.xlu0 %1476
        %1478 = vrot.lane.b32.xlu0 %v1474, 72
        %v1479 = vpop.permute.xlu0 %1478
        %v1481 = vsel %vm1123, %v1477, 0
        %v1484 = vsel %vm1123, %v1479, 0
        %1486 = vmatprep.subr.bf16.mxu0 0
        %1487 = vmatpush1.bf16.xpose.msra.mxu0 0
        %1488 = vmatprep.subr.bf16.mxu0 0
        %1489 = vmatpush1.bf16.xpose.msra.mxu0 0
        %1490 = vmatprep.subr.bf16.mxu0 0
        %1491 = vmatpush1.bf16.xpose.msra.mxu0 0
        %1492 = vmatprep.subr.bf16.mxu0 0
        %1493 = vmatpush1.bf16.xpose.msra.mxu0 0
        %1494 = vmatprep.subr.bf16.mxu0 0
        %1495 = vmatpush1.bf16.xpose.msra.mxu0 0
        %1496 = vmatprep.subr.bf16.mxu0 0
        %1497 = vmatpush1.bf16.xpose.msra.mxu0 0
        %1498 = vmatprep.subr.bf16.mxu0 0
        %1499 = vmatpush1.bf16.xpose.msra.mxu0 0
        %1500 = vmatprep.subr.bf16.mxu0 0
        %1501 = vmatpush1.bf16.xpose.msra.mxu0 %v1484
        %1502 = vmatprep.subr.bf16.mxu0 0
        %1503 = vmatpush2.bf16.xpose.msra.mxu0 0
        %1504 = vmatprep.subr.bf16.mxu0 0
        %1505 = vmatpush2.bf16.xpose.msra.mxu0 0
        %1506 = vmatprep.subr.bf16.mxu0 0
        %1507 = vmatpush2.bf16.xpose.msra.mxu0 0
        %1508 = vmatprep.subr.bf16.mxu0 0
        %1509 = vmatpush2.bf16.xpose.msra.mxu0 0
        %1510 = vmatprep.subr.bf16.mxu0 0
        %1511 = vmatpush2.bf16.xpose.msra.mxu0 0
        %1512 = vmatprep.subr.bf16.mxu0 0
        %1513 = vmatpush2.bf16.xpose.msra.mxu0 0
        %1514 = vmatprep.subr.bf16.mxu0 0
        %1515 = vmatpush2.bf16.xpose.msra.mxu0 0
        %1516 = vmatprep.subr.bf16.mxu0 0
        %1517 = vmatpush2.bf16.xpose.msra.mxu0 0
        %1518 = vmatprep.mubr.bf16.mxu0 0
        %1519 = vmatmul.mubr.bf16.gmra.mxu0 %v1481
        %v1520 = vpop.f32.mrf.mxu0
        %v1521 = vadd.f32 0.0, %v1520
        %v1522 = vpop.f32.mrf.mxu0
        %v1523 = vpop.f32.mrf.mxu0
        %v1524 = vpop.f32.mrf.mxu0
        %1525 = vdwg.mxu0
        %v1526 = vsel %vm1170, %v1521, -inf
        %1527 = vmax.xlane.f32.xlu0 %v1526
        %v1528 = vpop.xlane.xlu0 %1527
        %v1529 = vsub.f32 %v1521, %v1528
        %v1530 = vmul.f32 %v1529, 1.442695
        %v1531 = vpow.pop %v1530
        %v1532 = vsel %vm1170, %v1531, 0.0
        %1533 = vadd.xlane.f32.xlu0 %v1532
        %v1534 = vpop.xlane.xlu0 %1533
        %v1535 = vrcp.pop %v1534
        %v1536 = vmul.f32 %v1531, %v1535
        %v1537 = vpack.c.bf16 %v1536, %v1536
        %1538 = vrot.lane.b32.xlu0 %v1474, 40
        %v1539 = vpop.permute.xlu0 %1538
        %v1541 = vsel %vm1185, %v1537, 0
        %v1544 = vsel %vm1189, %v1539, 0
        %1546 = vmatprep.subr.bf16.mxu0 0
        %1547 = vmatpush1.bf16.msra.mxu0 0
        %1548 = vmatprep.subr.bf16.mxu0 0
        %1549 = vmatpush1.bf16.msra.mxu0 0
        %1550 = vmatprep.subr.bf16.mxu0 0
        %1551 = vmatpush1.bf16.msra.mxu0 0
        %1552 = vmatprep.subr.bf16.mxu0 0
        %1553 = vmatpush1.bf16.msra.mxu0 0
        %1554 = vmatprep.subr.bf16.mxu0 0
        %1555 = vmatpush1.bf16.msra.mxu0 0
        %1556 = vmatprep.subr.bf16.mxu0 0
        %1557 = vmatpush1.bf16.msra.mxu0 0
        %1558 = vmatprep.subr.bf16.mxu0 0
        %1559 = vmatpush1.bf16.msra.mxu0 0
        %1560 = vmatprep.subr.bf16.mxu0 0
        %1561 = vmatpush1.bf16.msra.mxu0 %v1544
        %1562 = vmatprep.subr.bf16.mxu0 0
        %1563 = vmatpush2.bf16.msra.mxu0 0
        %1564 = vmatprep.subr.bf16.mxu0 0
        %1565 = vmatpush2.bf16.msra.mxu0 0
        %1566 = vmatprep.subr.bf16.mxu0 0
        %1567 = vmatpush2.bf16.msra.mxu0 0
        %1568 = vmatprep.subr.bf16.mxu0 0
        %1569 = vmatpush2.bf16.msra.mxu0 0
        %1570 = vmatprep.subr.bf16.mxu0 0
        %1571 = vmatpush2.bf16.msra.mxu0 0
        %1572 = vmatprep.subr.bf16.mxu0 0
        %1573 = vmatpush2.bf16.msra.mxu0 0
        %1574 = vmatprep.subr.bf16.mxu0 0
        %1575 = vmatpush2.bf16.msra.mxu0 0
        %1576 = vmatprep.subr.bf16.mxu0 0
        %1577 = vmatpush2.bf16.msra.mxu0 0
        %1578 = vmatprep.mubr.bf16.mxu0 0
        %1579 = vmatmul.mubr.bf16.gmra.mxu0 %v1541
        %v1580 = vpop.f32.mrf.mxu0
        %v1581 = vadd.f32 0.0, %v1580
        %v1582 = vpop.f32.mrf.mxu0
        %v1583 = vpop.f32.mrf.mxu0
        %v1584 = vpop.f32.mrf.mxu0
        %1585 = vdwg.mxu0
        %1587 = vrot.lane.b32.xlu0 %v1581, 24
        %v1588 = vpop.permute.xlu0 %1587
        %vm1590 = vcmask 257216
        %1591 = vst.msk [vmem:[#allocation4] sm:$0xf] %vm1590, %v1588
        %v1592 = vld [vmem:[#allocation4] sm:$0xf]
        %v1593 = vpack.c.bf16 %v1592, %v1592
        %v1594 = vld [vmem:[%s1016] sm:$0xf]
        %v1595 = vld [vmem:[%s1016 + $0x4] sm:$0xf]
        %v1596 = vld [vmem:[%s1016 + $0x8] sm:$0xf]
        %v1597 = vld [vmem:[%s1016 + $0xc] sm:$0xf]
        %v1598 = vld [vmem:[%s826] sm:$0x1]
        %v1600 = vlaneseq
        %v1601 = vshrl.u32 %v1600, 7
        %v1602 = vsub.s32 0, %v1601
        %v1603 = vrot.slane %v1598, %v1602
        %v1609 = vunpack.c.l.b16 %v1594
        %v1610 = vunpack.c.l.b16 %v1595
        %v1611 = vunpack.c.l.b16 %v1596
        %v1612 = vunpack.c.l.b16 %v1597
        %v1613 = vpack.c.b16 %v1610, %v1609
        %v1614 = vpack.c.b16 %v1612, %v1611
        %v1618 = vsel %vm1072, %v1593, 0
        %1620 = vmatprep.subr.bf16.mxu0 0
        %1621 = vmatpush1.bf16.msra.mxu0 0
        %1622 = vmatprep.subr.bf16.mxu0 0
        %1623 = vmatpush1.bf16.msra.mxu0 0
        %1624 = vmatprep.subr.bf16.mxu0 0
        %1625 = vmatpush1.bf16.msra.mxu0 0
        %1626 = vmatprep.subr.bf16.mxu0 0
        %1627 = vmatpush1.bf16.msra.mxu0 0
        %1628 = vmatprep.subr.bf16.mxu0 0
        %1629 = vmatpush1.bf16.msra.mxu0 0
        %1630 = vmatprep.subr.bf16.mxu0 0
        %1631 = vmatpush1.bf16.msra.mxu0 0
        %1632 = vmatprep.subr.bf16.mxu0 0
        %1633 = vmatpush1.bf16.msra.mxu0 %v1614
        %1634 = vmatprep.subr.bf16.mxu0 0
        %1635 = vmatpush1.bf16.msra.mxu0 %v1613
        %1636 = vmatprep.subr.bf16.mxu0 0
        %1637 = vmatpush2.bf16.msra.mxu0 0
        %1638 = vmatprep.subr.bf16.mxu0 0
        %1639 = vmatpush2.bf16.msra.mxu0 0
        %1640 = vmatprep.subr.bf16.mxu0 0
        %1641 = vmatpush2.bf16.msra.mxu0 0
        %1642 = vmatprep.subr.bf16.mxu0 0
        %1643 = vmatpush2.bf16.msra.mxu0 0
        %1644 = vmatprep.subr.bf16.mxu0 0
        %1645 = vmatpush2.bf16.msra.mxu0 0
        %1646 = vmatprep.subr.bf16.mxu0 0
        %1647 = vmatpush2.bf16.msra.mxu0 0
        %1648 = vmatprep.subr.bf16.mxu0 0
        %1649 = vmatpush2.bf16.msra.mxu0 0
        %1650 = vmatprep.subr.bf16.mxu0 0
        %1651 = vmatpush2.bf16.msra.mxu0 0
        %1652 = vmatprep.mubr.bf16.mxu0 0
        %1653 = vmatmul.mubr.bf16.gmra.mxu0 %v1618
        %v1654 = vpop.f32.mrf.mxu0
        %v1655 = vadd.f32 %v1603, %v1654
        %v1656 = vpop.f32.mrf.mxu0
        %v1657 = vpop.f32.mrf.mxu0
        %v1658 = vpop.f32.mrf.mxu0
        %1659 = vdwg.mxu0
        %v1660 = vadd.f32 %v1047, %v1655
        %v1661 = vld [vmem:[%s850] sm:$0x1]
        %v1662 = vld [vmem:[%s858] sm:$0x1]
        %vm1663 = vcmask 257024
        %v1664 = vsel %vm1663, %v1660, 0.0
        %1665 = vadd.xlane.f32.xlu0 %v1664
        %v1666 = vpop.xlane.xlu0 %1665
        %v1667 = vrcp.pop 32.0
        %v1668 = vmul.f32 %v1666, %v1667
        %v1669 = vsub.f32 %v1660, %v1668
        %v1670 = vmul.f32 %v1669, %v1669
        %v1671 = vsel %vm1663, %v1670, 0.0
        %1672 = vadd.xlane.f32.xlu0 %v1671
        %v1673 = vpop.xlane.xlu0 %1672
        %v1674 = vmul.f32 %v1673, %v1667
        %v1675 = vadd.f32 %v1674, 1e-05
        %v1676 = vrsqrt.pop %v1675
        %v1677 = vmul.f32 %v1669, %v1676
        %v1679 = vlaneseq
        %v1680 = vshrl.u32 %v1679, 7
        %v1681 = vsub.s32 0, %v1680
        %v1682 = vrot.slane %v1661, %v1681
        %v1684 = vmul.f32 %v1677, %v1682
        %v1686 = vlaneseq
        %v1687 = vshrl.u32 %v1686, 7
        %v1688 = vsub.s32 0, %v1687
        %v1689 = vrot.slane %v1662, %v1688
        %v1691 = vadd.f32 %v1684, %v1689
        %v1692 = vpack.c.bf16 %v1691, %v1691
        %v1693 = vld [vmem:[%s1021] sm:$0xf]
        %v1694 = vld [vmem:[%s1021 + $0x4] sm:$0xf]
        %v1695 = vld [vmem:[%s1021 + $0x8] sm:$0xf]
        %v1696 = vld [vmem:[%s1021 + $0xc] sm:$0xf]
        %v1697 = vld [vmem:[%s834] sm:$0x1]
        %v1699 = vlaneseq
        %v1700 = vshrl.u32 %v1699, 7
        %v1701 = vsub.s32 0, %v1700
        %v1702 = vrot.slane %v1697, %v1701
        %v1708 = vunpack.c.l.b16 %v1693
        %v1709 = vunpack.c.l.b16 %v1694
        %v1710 = vunpack.c.l.b16 %v1695
        %v1711 = vunpack.c.l.b16 %v1696
        %v1712 = vpack.c.b16 %v1709, %v1708
        %v1713 = vpack.c.b16 %v1711, %v1710
        %v1717 = vsel %vm1072, %v1692, 0
        %1719 = vmatprep.subr.bf16.mxu0 0
        %1720 = vmatpush1.bf16.msra.mxu0 0
        %1721 = vmatprep.subr.bf16.mxu0 0
        %1722 = vmatpush1.bf16.msra.mxu0 0
        %1723 = vmatprep.subr.bf16.mxu0 0
        %1724 = vmatpush1.bf16.msra.mxu0 0
        %1725 = vmatprep.subr.bf16.mxu0 0
        %1726 = vmatpush1.bf16.msra.mxu0 0
        %1727 = vmatprep.subr.bf16.mxu0 0
        %1728 = vmatpush1.bf16.msra.mxu0 0
        %1729 = vmatprep.subr.bf16.mxu0 0
        %1730 = vmatpush1.bf16.msra.mxu0 0
        %1731 = vmatprep.subr.bf16.mxu0 0
        %1732 = vmatpush1.bf16.msra.mxu0 %v1713
        %1733 = vmatprep.subr.bf16.mxu0 0
        %1734 = vmatpush1.bf16.msra.mxu0 %v1712
        %1735 = vmatprep.subr.bf16.mxu0 0
        %1736 = vmatpush2.bf16.msra.mxu0 0
        %1737 = vmatprep.subr.bf16.mxu0 0
        %1738 = vmatpush2.bf16.msra.mxu0 0
        %1739 = vmatprep.subr.bf16.mxu0 0
        %1740 = vmatpush2.bf16.msra.mxu0 0
        %1741 = vmatprep.subr.bf16.mxu0 0
        %1742 = vmatpush2.bf16.msra.mxu0 0
        %1743 = vmatprep.subr.bf16.mxu0 0
        %1744 = vmatpush2.bf16.msra.mxu0 0
        %1745 = vmatprep.subr.bf16.mxu0 0
        %1746 = vmatpush2.bf16.msra.mxu0 0
        %1747 = vmatprep.subr.bf16.mxu0 0
        %1748 = vmatpush2.bf16.msra.mxu0 0
        %1749 = vmatprep.subr.bf16.mxu0 0
        %1750 = vmatpush2.bf16.msra.mxu0 0
        %1751 = vmatprep.mubr.bf16.mxu0 0
        %1752 = vmatmul.mubr.bf16.gmra.mxu0 %v1717
        %v1753 = vpop.f32.mrf.mxu0
        %v1754 = vadd.f32 %v1702, %v1753
        %v1755 = vpop.f32.mrf.mxu0
        %v1756 = vpop.f32.mrf.mxu0
        %v1757 = vpop.f32.mrf.mxu0
        %1758 = vdwg.mxu0
        %v1759 = vmul.f32 %v1754, 0.5
        %v1760 = vmul.f32 %v1754, %v1754
        %v1761 = vmul.f32 %v1760, %v1754
        %v1762 = vmul.f32 %v1761, 0.044715
        %v1763 = vadd.f32 %v1754, %v1762
        %v1764 = vmul.f32 %v1763, 0.7978846
        %v1765 = vtanh.pop %v1764
        %v1766 = vadd.f32 %v1765, 1.0
        %v1767 = vmul.f32 %v1759, %v1766
        %v1768 = vpack.c.bf16 %v1767, %v1767
        %v1769 = vld [vmem:[%s1026] sm:$0xf]
        %v1770 = vld [vmem:[%s1026 + $0x4] sm:$0xf]
        %v1771 = vld [vmem:[%s1026 + $0x8] sm:$0xf]
        %v1772 = vld [vmem:[%s1026 + $0xc] sm:$0xf]
        %v1773 = vld [vmem:[%s842] sm:$0x1]
        %v1775 = vlaneseq
        %v1776 = vshrl.u32 %v1775, 7
        %v1777 = vsub.s32 0, %v1776
        %v1778 = vrot.slane %v1773, %v1777
        %v1784 = vunpack.c.l.b16 %v1769
        %v1785 = vunpack.c.l.b16 %v1770
        %v1786 = vunpack.c.l.b16 %v1771
        %v1787 = vunpack.c.l.b16 %v1772
        %v1788 = vpack.c.b16 %v1785, %v1784
        %v1789 = vpack.c.b16 %v1787, %v1786
        %v1793 = vsel %vm1072, %v1768, 0
        %1795 = vmatprep.subr.bf16.mxu0 0
        %1796 = vmatpush1.bf16.msra.mxu0 0
        %1797 = vmatprep.subr.bf16.mxu0 0
        %1798 = vmatpush1.bf16.msra.mxu0 0
        %1799 = vmatprep.subr.bf16.mxu0 0
        %1800 = vmatpush1.bf16.msra.mxu0 0
        %1801 = vmatprep.subr.bf16.mxu0 0
        %1802 = vmatpush1.bf16.msra.mxu0 0
        %1803 = vmatprep.subr.bf16.mxu0 0
        %1804 = vmatpush1.bf16.msra.mxu0 0
        %1805 = vmatprep.subr.bf16.mxu0 0
        %1806 = vmatpush1.bf16.msra.mxu0 0
        %1807 = vmatprep.subr.bf16.mxu0 0
        %1808 = vmatpush1.bf16.msra.mxu0 %v1789
        %1809 = vmatprep.subr.bf16.mxu0 0
        %1810 = vmatpush1.bf16.msra.mxu0 %v1788
        %1811 = vmatprep.subr.bf16.mxu0 0
        %1812 = vmatpush2.bf16.msra.mxu0 0
        %1813 = vmatprep.subr.bf16.mxu0 0
        %1814 = vmatpush2.bf16.msra.mxu0 0
        %1815 = vmatprep.subr.bf16.mxu0 0
        %1816 = vmatpush2.bf16.msra.mxu0 0
        %1817 = vmatprep.subr.bf16.mxu0 0
        %1818 = vmatpush2.bf16.msra.mxu0 0
        %1819 = vmatprep.subr.bf16.mxu0 0
        %1820 = vmatpush2.bf16.msra.mxu0 0
        %1821 = vmatprep.subr.bf16.mxu0 0
        %1822 = vmatpush2.bf16.msra.mxu0 0
        %1823 = vmatprep.subr.bf16.mxu0 0
        %1824 = vmatpush2.bf16.msra.mxu0 0
        %1825 = vmatprep.subr.bf16.mxu0 0
        %1826 = vmatpush2.bf16.msra.mxu0 0
        %1827 = vmatprep.mubr.bf16.mxu0 0
        %1828 = vmatmul.mubr.bf16.gmra.mxu0 %v1793
        %v1829 = vpop.f32.mrf.mxu0
        %v1830 = vadd.f32 %v1778, %v1829
        %v1831 = vpop.f32.mrf.mxu0
        %v1832 = vpop.f32.mrf.mxu0
        %v1833 = vpop.f32.mrf.mxu0
        %1834 = vdwg.mxu0
        %v1835 = vadd.f32 %v1691, %v1830
        %v1836 = vld [vmem:[%s866] sm:$0x1]
        %v1837 = vld [vmem:[%s874] sm:$0x1]
        %v1838 = vsel %vm1663, %v1835, 0.0
        %1839 = vadd.xlane.f32.xlu0 %v1838
        %v1840 = vpop.xlane.xlu0 %1839
        %v1841 = vmul.f32 %v1840, %v1667
        %v1842 = vsub.f32 %v1835, %v1841
        %v1843 = vmul.f32 %v1842, %v1842
        %v1844 = vsel %vm1663, %v1843, 0.0
        %1845 = vadd.xlane.f32.xlu0 %v1844
        %v1846 = vpop.xlane.xlu0 %1845
        %v1847 = vmul.f32 %v1846, %v1667
        %v1848 = vadd.f32 %v1847, 1e-05
        %v1849 = vrsqrt.pop %v1848
        %v1850 = vmul.f32 %v1842, %v1849
        %v1852 = vlaneseq
        %v1853 = vshrl.u32 %v1852, 7
        %v1854 = vsub.s32 0, %v1853
        %v1855 = vrot.slane %v1836, %v1854
        %v1857 = vmul.f32 %v1850, %v1855
        %v1859 = vlaneseq
        %v1860 = vshrl.u32 %v1859, 7
        %v1861 = vsub.s32 0, %v1860
        %v1862 = vrot.slane %v1837, %v1861
        %v1864 = vadd.f32 %v1857, %v1862
        %1865 = vst.msk [vmem:[#allocation2] sm:$0xf] %vm1663, %v1864
        %p1866 = scmp.eq.s32.totalorder %s52, 1
        // Predicated region
        $region149: #{itransformer_forward.3} parent=95 // pred_check
          %p1867 = pneg %p1866
        $region150: #{itransformer_forward.3} parent=95 // pred_check_branch
          %1869 = sbr.rel (%p1867) target = $region152
        $region151: #{itransformer_forward.3} parent=95 // pred_region
          %v1870 = vld [vmem:[#allocation18] sm:$0x1]
          %v1871 = vld [vmem:[#allocation19] sm:$0x1]
          %v1872 = vsel %vm1663, %v1864, 0.0
          %1873 = vadd.xlane.f32.xlu0 %v1872
          %v1874 = vpop.xlane.xlu0 %1873
          %v1875 = vmul.f32 %v1874, %v1667
          %v1876 = vsub.f32 %v1864, %v1875
          %v1877 = vmul.f32 %v1876, %v1876
          %v1878 = vsel %vm1663, %v1877, 0.0
          %1879 = vadd.xlane.f32.xlu0 %v1878
          %v1880 = vpop.xlane.xlu0 %1879
          %v1881 = vmul.f32 %v1880, %v1667
          %v1882 = vadd.f32 %v1881, 1e-05
          %v1883 = vrsqrt.pop %v1882
          %v1884 = vmul.f32 %v1876, %v1883
          %v1886 = vlaneseq
          %v1887 = vshrl.u32 %v1886, 7
          %v1888 = vsub.s32 0, %v1887
          %v1889 = vrot.slane %v1870, %v1888
          %v1891 = vmul.f32 %v1884, %v1889
          %v1893 = vlaneseq
          %v1894 = vshrl.u32 %v1893, 7
          %v1895 = vsub.s32 0, %v1894
          %v1896 = vrot.slane %v1871, %v1895
          %v1898 = vadd.f32 %v1891, %v1896
          %v1899 = vpack.c.bf16 %v1898, %v1898
          %v1900 = vld [vmem:[#allocation21] sm:$0xf]
          %v1901 = vld [vmem:[#allocation21 + $0x4] sm:$0xf]
          %v1902 = vld [vmem:[#allocation21 + $0x8] sm:$0xf]
          %v1903 = vld [vmem:[#allocation21 + $0xc] sm:$0xf]
          %v1904 = vld [vmem:[#allocation22] sm:$0x1]
          %v1906 = vlaneseq
          %v1907 = vshrl.u32 %v1906, 7
          %v1908 = vsub.s32 0, %v1907
          %v1909 = vrot.slane %v1904, %v1908
          %v1915 = vunpack.c.l.b16 %v1900
          %v1916 = vunpack.c.l.b16 %v1901
          %v1917 = vunpack.c.l.b16 %v1902
          %v1918 = vunpack.c.l.b16 %v1903
          %v1919 = vpack.c.b16 %v1916, %v1915
          %v1920 = vpack.c.b16 %v1918, %v1917
          %v1924 = vsel %vm1072, %v1899, 0
          %1926 = vmatprep.subr.bf16.mxu0 0
          %1927 = vmatpush1.bf16.msra.mxu0 0
          %1928 = vmatprep.subr.bf16.mxu0 0
          %1929 = vmatpush1.bf16.msra.mxu0 0
          %1930 = vmatprep.subr.bf16.mxu0 0
          %1931 = vmatpush1.bf16.msra.mxu0 0
          %1932 = vmatprep.subr.bf16.mxu0 0
          %1933 = vmatpush1.bf16.msra.mxu0 0
          %1934 = vmatprep.subr.bf16.mxu0 0
          %1935 = vmatpush1.bf16.msra.mxu0 0
          %1936 = vmatprep.subr.bf16.mxu0 0
          %1937 = vmatpush1.bf16.msra.mxu0 0
          %1938 = vmatprep.subr.bf16.mxu0 0
          %1939 = vmatpush1.bf16.msra.mxu0 %v1920
          %1940 = vmatprep.subr.bf16.mxu0 0
          %1941 = vmatpush1.bf16.msra.mxu0 %v1919
          %1942 = vmatprep.subr.bf16.mxu0 0
          %1943 = vmatpush2.bf16.msra.mxu0 0
          %1944 = vmatprep.subr.bf16.mxu0 0
          %1945 = vmatpush2.bf16.msra.mxu0 0
          %1946 = vmatprep.subr.bf16.mxu0 0
          %1947 = vmatpush2.bf16.msra.mxu0 0
          %1948 = vmatprep.subr.bf16.mxu0 0
          %1949 = vmatpush2.bf16.msra.mxu0 0
          %1950 = vmatprep.subr.bf16.mxu0 0
          %1951 = vmatpush2.bf16.msra.mxu0 0
          %1952 = vmatprep.subr.bf16.mxu0 0
          %1953 = vmatpush2.bf16.msra.mxu0 0
          %1954 = vmatprep.subr.bf16.mxu0 0
          %1955 = vmatpush2.bf16.msra.mxu0 0
          %1956 = vmatprep.subr.bf16.mxu0 0
          %1957 = vmatpush2.bf16.msra.mxu0 0
          %1958 = vmatprep.mubr.bf16.mxu0 0
          %1959 = vmatmul.mubr.bf16.gmra.mxu0 %v1924
          %v1960 = vpop.f32.mrf.mxu0
          %v1961 = vadd.f32 %v1909, %v1960
          %v1962 = vpop.f32.mrf.mxu0
          %v1963 = vpop.f32.mrf.mxu0
          %v1964 = vpop.f32.mrf.mxu0
          %1965 = vdwg.mxu0
          %v1966 = vld [vmem:[%s1034] sm:$0xf]
          %1968 = vset.pattern.permute.xlu0 0
          %1969 = vperm.xlu0 %1968, %v1966
          %v1970 = vpop.permute.xlu0 %1969
          %v1972 = vmul.f32 %v1961, %v1970
          %v1973 = vld [vmem:[%s1030] sm:$0xf]
          %1975 = vset.pattern.permute.xlu0 0
          %1976 = vperm.xlu0 %1975, %v1973
          %v1977 = vpop.permute.xlu0 %1976
          %v1979 = vadd.f32 %v1972, %v1977
          %1980 = vst [vmem:[%s1038] sm:$0xf] %v1979
        $region152: #{itransformer_forward.3} parent=95 // pred_fallthru
          _
        %p1981 = scmp.lt.s32.totalorder %s51, 1
        %s1982 = scalar_select %p1981, %s51, 1
        %s1983 = smul.addr %s1982, 4
        %s1984 = scalar_lea.vmem %s19, %s1983
        // Predicated region
        $region153: #{itransformer_forward.3} parent=95 // pred_check
          %p1985 = pneg %p551
        $region154: #{itransformer_forward.3} parent=95 // pred_check_branch
          %1987 = sbr.rel (%p1985) target = $region156
        $region155: #{itransformer_forward.3} parent=95 // pred_region
          _
        $region156: #{itransformer_forward.3} parent=95 // pred_fallthru
          _
      $region96: #{itransformer_forward.3} parent=5 // pred_fallthru
        _
      %p1988 = scmp.le.s32.totalorder 2, %s42
      // Predicated region
      $region157: #{itransformer_forward.3} parent=5 // pred_check
        %p1989 = pneg %p1988
      $region158: #{itransformer_forward.3} parent=5 // pred_check_branch
        %1991 = sbr.rel (%p1989) target = $region160
      $region159: #{itransformer_forward.3} parent=5 // pred_region
        %s1992 = ssub.s32 %s42, 2
        // Predicated region
        $region161: #{itransformer_forward.3} parent=159 // pred_check
          %p1993 = pneg %p557
        $region162: #{itransformer_forward.3} parent=159 // pred_check_branch
          %1995 = sbr.rel (%p1993) target = $region164
        $region163: #{itransformer_forward.3} parent=159 // pred_region
          %p1996 = scmp.lt.s32.totalorder %s53, 1
          %s1997 = scalar_select %p1996, %s53, 1
          %s1998 = smul.addr %s1997, 4
          %s1999 = scalar_lea.vmem %s19, %s1998
        $region164: #{itransformer_forward.3} parent=159 // pred_fallthru
          _
      $region160: #{itransformer_forward.3} parent=5 // pred_fallthru
        _
    $region6: #{itransformer_forward.3} parent=1 // loop_footer
      %s46 = sadd.s32 1, %s42
    $region7: #{itransformer_forward.3} parent=1 // loop_footer_branch
      %41 = sbr.rel target = $region3
    $region8: #{itransformer_forward.3} parent=1 // loop_exit
      _
    %2000 = vsyncpa [#allocation6], 1
    %s2001 = scalar_lea.sflag [#allocation6], 1
    %2002 = vsyncpa %s2001, 1
    %2003 = vsyncpa [#allocation8], 1
    %s2004 = scalar_lea.sflag [#allocation8], 1
    %2005 = vsyncpa %s2004, 1
    %2006 = vsyncpa [#allocation11], 1
    %s2007 = scalar_lea.sflag [#allocation11], 1
    %2008 = vsyncpa %s2007, 1
    %2009 = vsyncpa [#allocation14], 1
    %s2010 = scalar_lea.sflag [#allocation14], 1
    %2011 = vsyncpa %s2010, 1
    %2012 = vsyncpa [#allocation17], 1
    %s2013 = scalar_lea.sflag [#allocation17], 1
    %2014 = vsyncpa %s2013, 1
    %2015 = vsyncpa [#allocation20], 1
    %2016 = vsyncpa [#allocation23], 1

</llo_original>
